<compile_context>
chip_gen: v7x
topology: tpu7x:2x2x1
jax: 0.10.0
libtpu: 0.0.40
codegen_flags: <defaults>
</compile_context>

<pallas_src>
import functools

import numpy as np
import jax
import jax.numpy as jnp
from jax.experimental import pallas as pl
from jax.experimental.pallas import tpu as pltpu
from scipy.optimize import linear_sum_assignment  # host-side Hungarian solver

_EPS = 1e-6


def _box_corners(cx, cy, w, l, theta):
    """BEV corners of a rotated box, CCW order."""
    c = jnp.cos(theta)
    s = jnp.sin(theta)
    xs, ys = [], []
    for dx, dy in ((0.5, 0.5), (-0.5, 0.5), (-0.5, -0.5), (0.5, -0.5)):
        lx = dx * w
        ly = dy * l
        xs.append(cx + lx * c - ly * s)
        ys.append(cy + lx * s + ly * c)
    return xs, ys


def _clip_contrib(px, py, qx, qy):
    """Green's-theorem boundary contribution of (edges of P) clipped by convex Q.

    px/py/qx/qy: length-4 lists of broadcastable arrays (CCW corners).
    Returns sum over P-edges of cross(entry_point, exit_point) of the clipped
    sub-segment (Liang–Barsky clip against Q's 4 half-planes).
    """
    # Hoist Q-edge quantities out of the P-edge loop:
    #   f_e(a) = ex*(ay - qy[e]) - ey*(ax - qx[e]) = ex*ay - ey*ax - c_e
    ex_l, ey_l, c_l = [], [], []
    for e in range(4):
        ex = qx[(e + 1) % 4] - qx[e]
        ey = qy[(e + 1) % 4] - qy[e]
        ex_l.append(ex)
        ey_l.append(ey)
        c_l.append(ex * qy[e] - ey * qx[e])

    total = 0.0
    for k in range(4):
        a0x, a0y = px[k], py[k]
        a1x, a1y = px[(k + 1) % 4], py[(k + 1) % 4]
        dx = a1x - a0x
        dy = a1y - a0y
        t_lo = 0.0
        t_hi = 1.0
        # TODO(synk): f1(k,e) could be carried as f0(k+1,e) to halve the f
        # evaluations, but that keeps 4 extra (M,N) arrays live (~28 vregs);
        # skipped pending a bundle-dump spill check.
        for e in range(4):
            ex, ey, c = ex_l[e], ey_l[e], c_l[e]
            # inside (left of CCW edge) <=> f >= 0
            f0 = ex * a0y - ey * a0x - c
            f1 = ex * a1y - ey * a1x - c
            den = f1 - f0
            den_safe = jnp.where(jnp.abs(den) < _EPS, 1.0, den)
            # Approx reciprocal lands on the EUP slot (VALU is the bottleneck
            # here); ~2^-12 relative error is irrelevant for a matching cost.
            t_c = -f0 * pl.reciprocal(den_safe, approx=True)
            t_lo = jnp.where(den > _EPS, jnp.maximum(t_lo, t_c), t_lo)
            t_hi = jnp.where(den < -_EPS, jnp.minimum(t_hi, t_c), t_hi)
            # Segment parallel to and fully outside this half-plane: fold the
            # rejection into t_hi instead of carrying a separate boolean mask
            # (t_lo >= 0 always, so t_hi = -1 guarantees t_lo < t_hi is False).
            outside = (jnp.abs(den) <= _EPS) & (f0 < -_EPS)
            t_hi = jnp.where(outside, -1.0, t_hi)
        ok = t_lo < t_hi
        p0x = a0x + t_lo * dx
        p0y = a0y + t_lo * dy
        p1x = a0x + t_hi * dx
        p1y = a0y + t_hi * dy
        total = total + jnp.where(ok, p0x * p1y - p0y * p1x, 0.0)
    return total


def _pairwise_cost_kernel(p_ref, t_ref, out_ref):
    # p_ref: (M_pad, 8)  pred params  [x, y, z, w, l, h, yaw, score]
    # t_ref: (8, N_pad)  target params (same order, along sublanes)
    # out_ref: (2, M_pad, N_pad)  [0] = score_cost, [1] = giou (box) cost
    px = p_ref[:, 0:1]
    py = p_ref[:, 1:2]
    pz = p_ref[:, 2:3]
    pw = p_ref[:, 3:4]
    plen = p_ref[:, 4:5]
    ph = p_ref[:, 5:6]
    pth = p_ref[:, 6:7]
    psc = p_ref[:, 7:8]

    tx = t_ref[0:1, :]
    ty = t_ref[1:2, :]
    tz = t_ref[2:3, :]
    tw = t_ref[3:4, :]
    tlen = t_ref[4:5, :]
    th = t_ref[5:6, :]
    tth = t_ref[6:7, :]
    tsc = t_ref[7:8, :]

    # ---- score cost: max(0, target_score[j] - pred_score[i]) -> (M, N)
    score_cost = jnp.maximum(0.0, tsc - psc)

    # ---- rotated BEV corners (pred: (M,1) arrays, target: (1,N) arrays)
    pcx, pcy = _box_corners(px, py, pw, plen, pth)
    tcx, tcy = _box_corners(tx, ty, tw, tlen, tth)

    # exact rotated-rectangle intersection area (Green's theorem)
    inter_sum = _clip_contrib(pcx, pcy, tcx, tcy) + _clip_contrib(tcx, tcy, pcx, pcy)
    area_p = pw * plen
    area_t = tw * tlen
    inter_bev = jnp.clip(0.5 * inter_sum, 0.0, jnp.minimum(area_p, area_t))

    # ---- z overlap
    pzmax = pz + 0.5 * ph
    pzmin = pz - 0.5 * ph
    tzmax = tz + 0.5 * th
    tzmin = tz - 0.5 * th
    z_ov = jnp.maximum(jnp.minimum(pzmax, tzmax) - jnp.maximum(pzmin, tzmin), 0.0)

    inter3d = inter_bev * z_ov
    v1 = area_p * ph
    v2 = area_t * th
    u3d = v1 + v2 - inter3d
    iou3d = inter3d / jnp.maximum(u3d, _EPS)

    # ---- enclosing box ('aligned': axis-aligned hull of both rotated footprints)
    # TODO(synk): cal_giou_3d's 'smallest' enclosing rectangle (rotating calipers
    # over the convex hull) has no clean vectorised Pallas form; 'aligned' is used.
    pxmin = functools.reduce(jnp.minimum, pcx)
    pxmax = functools.reduce(jnp.maximum, pcx)
    pymin = functools.reduce(jnp.minimum, pcy)
    pymax = functools.reduce(jnp.maximum, pcy)
    txmin = functools.reduce(jnp.minimum, tcx)
    txmax = functools.reduce(jnp.maximum, tcx)
    tymin = functools.reduce(jnp.minimum, tcy)
    tymax = functools.reduce(jnp.maximum, tcy)
    w_enc = jnp.maximum(pxmax, txmax) - jnp.minimum(pxmin, txmin)
    h_enc = jnp.maximum(pymax, tymax) - jnp.minimum(pymin, tymin)
    z_rng = jnp.maximum(pzmax, tzmax) - jnp.minimum(pzmin, tzmin)
    v_c = jnp.maximum(w_enc * h_enc * z_rng, _EPS)

    giou_loss = 1.0 - iou3d + (v_c - u3d) / v_c  # == cal_giou_3d(...)[0]

    out_ref[0] = score_cost
    out_ref[1] = giou_loss


def _round_up(x, k):
    return ((x + k - 1) // k) * k


@jax.jit
def _pairwise_costs_device(p, t):
    """Single jit'd device path: one pallas_call, one stacked output."""
    m_pad = p.shape[0]
    n_pad = t.shape[1]
    return pl.pallas_call(
        _pairwise_cost_kernel,
        out_shape=jax.ShapeDtypeStruct((2, m_pad, n_pad), jnp.float32),
        grid=(1,),
        in_specs=[
            pl.BlockSpec((m_pad, 8), lambda i: (0, 0)),
            pl.BlockSpec((8, n_pad), lambda i: (0, 0)),
        ],
        out_specs=pl.BlockSpec((2, m_pad, n_pad), lambda i: (0, 0, 0)),
        compiler_params=pltpu.CompilerParams(dimension_semantics=("arbitrary",)),
    )(p, t)


def pairwise_costs(pred_box, pred_score, tgt_box, tgt_score):
    """Returns (score_cost[m, n], box_cost[m, n]) computed in a Pallas kernel."""
    m = pred_box.shape[0]
    n = tgt_box.shape[0]
    m_pad = max(8, _round_up(m, 8))
    n_pad = max(128, _round_up(n, 128))

    # Build padded inputs on host with numpy -> single H2D transfer each
    # (avoids the eager jnp.zeros + six .at[].set dispatch chain).
    p_np = np.zeros((m_pad, 8), np.float32)
    p_np[:m, :7] = np.asarray(pred_box, np.float32)
    p_np[:m, 7] = np.asarray(pred_score, np.float32)

    t_np = np.zeros((8, n_pad), np.float32)
    t_np[:7, :n] = np.asarray(tgt_box, np.float32).T
    t_np[7, :n] = np.asarray(tgt_score, np.float32)

    out = np.asarray(_pairwise_costs_device(p_np, t_np))  # one D2H copy (syncs)
    return out[0, :m, :n], out[1, :m, :n]


class HungarianMatcher:
    """JAX/Pallas port of opencood.utils.match.HungarianMatcher (single class)."""

    def __init__(self, cost_class=1, cost_giou=1):
        self.cost_class = cost_class
        self.cost_giou = cost_giou

    def __call__(self, pred_boxes, target_boxes):
        match_cost, mean_score_cost, mean_box_cost = [], [], []

        if pred_boxes["box_tensor"] is None:
            m = 0
        else:
            m = int(pred_boxes["box_tensor"].shape[0])
            if m > 50:
                m = 50
        if target_boxes["box_tensor"] is None:
            n = 0
        else:
            n = int(target_boxes["box_tensor"].shape[0])

        size = max(m, n)
        score_cost = np.zeros((size, size), np.float32)
        box_cost = np.zeros((size, size), np.float32)
        if m < n:
            score_cost[m:, :] = np.asarray(target_boxes["score"], np.float32)[None, :]
            box_cost[m:, :] = 1.0
        # (m > n case: extra columns stay zero, as in the reference)

        if m > 0 and n > 0:
            sc, bc = pairwise_costs(
                pred_boxes["box_tensor"][:m],
                pred_boxes["score"][:m],
                target_boxes["box_tensor"],
                target_boxes["score"],
            )
            score_cost[:m, :n] = sc
            box_cost[:m, :n] = bc

        cost_mat = self.cost_class * score_cost + self.cost_giou * box_cost
        # TODO(synk): combinatorial Hungarian assignment has no Pallas equivalent;
        # run on host with scipy (identical to the reference implementation).
        row_ind, col_ind = linear_sum_assignment(cost_mat)

        # Reference divides by n (tensor / 0 -> nan in torch); guard the
        # ZeroDivisionError that raw Python floats would raise.
        denom = float(n) if n > 0 else float("nan")
        match_cost.append(float(cost_mat[row_ind, col_ind].sum()) / denom)
        mean_score_cost.append(float(score_cost[row_ind, col_ind].sum()) / denom)
        mean_box_cost.append(float(box_cost[row_ind, col_ind].sum()) / denom)
        return match_cost, mean_score_cost, mean_box_cost


if __name__ == "__main__":
    key = jax.random.PRNGKey(0)
    k1, k2, k3, k4, k5, k6, k7, k8 = jax.random.split(key, 8)

    m, n = 6, 8  # small shapes: 6 predicted boxes, 8 target boxes, 7 params each

    def make_boxes(kc, ks, kt, num):
        centers = jax.random.uniform(kc, (num, 3), minval=-10.0, maxval=10.0)
        sizes = jax.random.uniform(ks, (num, 3), minval=1.0, maxval=4.0)
        yaws = jax.random.uniform(kt, (num, 1), minval=-3.1, maxval=3.1)
        return jnp.concatenate([centers, sizes, yaws], axis=1)  # (num, 7)

    pred_box = make_boxes(k1, k2, k3, m)
    tgt_box = make_boxes(k4, k5, k6, n)
    pred_score = jax.random.uniform(k7, (m,), minval=0.1, maxval=1.0)
    tgt_score = jax.random.uniform(k8, (n,), minval=0.1, maxval=1.0)

    # Run the device path once and block on it explicitly.
    m_pad, n_pad = 8, 128
    p_np = np.zeros((m_pad, 8), np.float32)
    p_np[:m, :7] = np.asarray(pred_box, np.float32)
    p_np[:m, 7] = np.asarray(pred_score, np.float32)
    t_np = np.zeros((8, n_pad), np.float32)
    t_np[:7, :n] = np.asarray(tgt_box, np.float32).T
    t_np[7, :n] = np.asarray(tgt_score, np.float32)
    jax.block_until_ready(_pairwise_costs_device(p_np, t_np))

    matcher = HungarianMatcher(cost_class=1, cost_giou=1)
    match_cost, mean_score_cost, mean_box_cost = matcher(
        {"box_tensor": pred_box, "score": pred_score},
        {"box_tensor": tgt_box, "score": tgt_score},
    )

    assert np.isfinite(match_cost[0])
    assert np.isfinite(mean_score_cost[0])
    assert np.isfinite(mean_box_cost[0])
    print("KERNEL_OK")
</pallas_src>

<mosaic_0001>
module attributes {stable_mosaic.version = 11 : i64} {
  func.func @_pairwise_cost_kernel(%arg0: i32, %arg1: memref<8x8xf32, #tpu.memory_space<vmem>>, %arg2: memref<8x128xf32, #tpu.memory_space<vmem>>, %arg3: memref<2x8x128xf32, #tpu.memory_space<vmem>>) attributes {dimension_semantics = [#tpu.dimension_semantics<arbitrary>], iteration_bounds = array<i64: 1>, scalar_prefetch = 0 : i64, scratch_operands = 0 : i64, tpu.core_type = #tpu.core_type<tc>, window_params = [{pipeline_mode = #tpu.pipeline_mode<synchronous>, transform_indices = @transform_0, window_bounds = array<i64: 8, 8>}, {pipeline_mode = #tpu.pipeline_mode<synchronous>, transform_indices = @transform_1, window_bounds = array<i64: 8, 128>}, {pipeline_mode = #tpu.pipeline_mode<synchronous>, transform_indices = @transform_2, window_bounds = array<i64: 2, 8, 128>}]} {
    %c0 = arith.constant 0 : index
    %c0_0 = arith.constant 0 : index
    %0 = vector.load %arg1[%c0, %c0_0] : memref<8x8xf32, #tpu.memory_space<vmem>>, vector<8x1xf32>
    %c0_1 = arith.constant 0 : index
    %c1 = arith.constant 1 : index
    %1 = vector.load %arg1[%c0_1, %c1] : memref<8x8xf32, #tpu.memory_space<vmem>>, vector<8x1xf32>
    %c0_2 = arith.constant 0 : index
    %c2 = arith.constant 2 : index
    %2 = vector.load %arg1[%c0_2, %c2] : memref<8x8xf32, #tpu.memory_space<vmem>>, vector<8x1xf32>
    %c0_3 = arith.constant 0 : index
    %c3 = arith.constant 3 : index
    %3 = vector.load %arg1[%c0_3, %c3] : memref<8x8xf32, #tpu.memory_space<vmem>>, vector<8x1xf32>
    %c0_4 = arith.constant 0 : index
    %c4 = arith.constant 4 : index
    %4 = vector.load %arg1[%c0_4, %c4] : memref<8x8xf32, #tpu.memory_space<vmem>>, vector<8x1xf32>
    %c0_5 = arith.constant 0 : index
    %c5 = arith.constant 5 : index
    %5 = vector.load %arg1[%c0_5, %c5] : memref<8x8xf32, #tpu.memory_space<vmem>>, vector<8x1xf32>
    %c0_6 = arith.constant 0 : index
    %c6 = arith.constant 6 : index
    %6 = vector.load %arg1[%c0_6, %c6] : memref<8x8xf32, #tpu.memory_space<vmem>>, vector<8x1xf32>
    %c0_7 = arith.constant 0 : index
    %c7 = arith.constant 7 : index
    %7 = vector.load %arg1[%c0_7, %c7] : memref<8x8xf32, #tpu.memory_space<vmem>>, vector<8x1xf32>
    %c0_8 = arith.constant 0 : index
    %c0_9 = arith.constant 0 : index
    %8 = vector.load %arg2[%c0_8, %c0_9] : memref<8x128xf32, #tpu.memory_space<vmem>>, vector<1x128xf32>
    %c1_10 = arith.constant 1 : index
    %c0_11 = arith.constant 0 : index
    %9 = vector.load %arg2[%c1_10, %c0_11] : memref<8x128xf32, #tpu.memory_space<vmem>>, vector<1x128xf32>
    %c2_12 = arith.constant 2 : index
    %c0_13 = arith.constant 0 : index
    %10 = vector.load %arg2[%c2_12, %c0_13] : memref<8x128xf32, #tpu.memory_space<vmem>>, vector<1x128xf32>
    %c3_14 = arith.constant 3 : index
    %c0_15 = arith.constant 0 : index
    %11 = vector.load %arg2[%c3_14, %c0_15] : memref<8x128xf32, #tpu.memory_space<vmem>>, vector<1x128xf32>
    %c4_16 = arith.constant 4 : index
    %c0_17 = arith.constant 0 : index
    %12 = vector.load %arg2[%c4_16, %c0_17] : memref<8x128xf32, #tpu.memory_space<vmem>>, vector<1x128xf32>
    %c5_18 = arith.constant 5 : index
    %c0_19 = arith.constant 0 : index
    %13 = vector.load %arg2[%c5_18, %c0_19] : memref<8x128xf32, #tpu.memory_space<vmem>>, vector<1x128xf32>
    %c6_20 = arith.constant 6 : index
    %c0_21 = arith.constant 0 : index
    %14 = vector.load %arg2[%c6_20, %c0_21] : memref<8x128xf32, #tpu.memory_space<vmem>>, vector<1x128xf32>
    %c7_22 = arith.constant 7 : index
    %c0_23 = arith.constant 0 : index
    %15 = vector.load %arg2[%c7_22, %c0_23] : memref<8x128xf32, #tpu.memory_space<vmem>>, vector<1x128xf32>
    %16 = vector.broadcast %15 : vector<1x128xf32> to vector<8x128xf32>
    %17 = vector.broadcast %7 : vector<8x1xf32> to vector<8x128xf32>
    %18 = arith.subf %16, %17 : vector<8x128xf32>
    %cst = arith.constant 0.000000e+00 : f32
    %19 = vector.broadcast %cst : f32 to vector<8x128xf32>
    %20 = arith.maximumf %19, %18 : vector<8x128xf32>
    %21 = math.cos %6 : vector<8x1xf32>
    %22 = math.sin %6 : vector<8x1xf32>
    %cst_24 = arith.constant 5.000000e-01 : f32
    %23 = vector.broadcast %cst_24 : f32 to vector<8x1xf32>
    %24 = arith.mulf %23, %3 : vector<8x1xf32>
    %cst_25 = arith.constant 5.000000e-01 : f32
    %25 = vector.broadcast %cst_25 : f32 to vector<8x1xf32>
    %26 = arith.mulf %25, %4 : vector<8x1xf32>
    %27 = arith.mulf %24, %21 : vector<8x1xf32>
    %28 = arith.addf %0, %27 : vector<8x1xf32>
    %29 = arith.mulf %26, %22 : vector<8x1xf32>
    %30 = arith.subf %28, %29 : vector<8x1xf32>
    %31 = arith.mulf %24, %22 : vector<8x1xf32>
    %32 = arith.addf %1, %31 : vector<8x1xf32>
    %33 = arith.mulf %26, %21 : vector<8x1xf32>
    %34 = arith.addf %32, %33 : vector<8x1xf32>
    %cst_26 = arith.constant -5.000000e-01 : f32
    %35 = vector.broadcast %cst_26 : f32 to vector<8x1xf32>
    %36 = arith.mulf %35, %3 : vector<8x1xf32>
    %cst_27 = arith.constant 5.000000e-01 : f32
    %37 = vector.broadcast %cst_27 : f32 to vector<8x1xf32>
    %38 = arith.mulf %37, %4 : vector<8x1xf32>
    %39 = arith.mulf %36, %21 : vector<8x1xf32>
    %40 = arith.addf %0, %39 : vector<8x1xf32>
    %41 = arith.mulf %38, %22 : vector<8x1xf32>
    %42 = arith.subf %40, %41 : vector<8x1xf32>
    %43 = arith.mulf %36, %22 : vector<8x1xf32>
    %44 = arith.addf %1, %43 : vector<8x1xf32>
    %45 = arith.mulf %38, %21 : vector<8x1xf32>
    %46 = arith.addf %44, %45 : vector<8x1xf32>
    %cst_28 = arith.constant -5.000000e-01 : f32
    %47 = vector.broadcast %cst_28 : f32 to vector<8x1xf32>
    %48 = arith.mulf %47, %3 : vector<8x1xf32>
    %cst_29 = arith.constant -5.000000e-01 : f32
    %49 = vector.broadcast %cst_29 : f32 to vector<8x1xf32>
    %50 = arith.mulf %49, %4 : vector<8x1xf32>
    %51 = arith.mulf %48, %21 : vector<8x1xf32>
    %52 = arith.addf %0, %51 : vector<8x1xf32>
    %53 = arith.mulf %50, %22 : vector<8x1xf32>
    %54 = arith.subf %52, %53 : vector<8x1xf32>
    %55 = arith.mulf %48, %22 : vector<8x1xf32>
    %56 = arith.addf %1, %55 : vector<8x1xf32>
    %57 = arith.mulf %50, %21 : vector<8x1xf32>
    %58 = arith.addf %56, %57 : vector<8x1xf32>
    %cst_30 = arith.constant 5.000000e-01 : f32
    %59 = vector.broadcast %cst_30 : f32 to vector<8x1xf32>
    %60 = arith.mulf %59, %3 : vector<8x1xf32>
    %cst_31 = arith.constant -5.000000e-01 : f32
    %61 = vector.broadcast %cst_31 : f32 to vector<8x1xf32>
    %62 = arith.mulf %61, %4 : vector<8x1xf32>
    %63 = arith.mulf %60, %21 : vector<8x1xf32>
    %64 = arith.addf %0, %63 : vector<8x1xf32>
    %65 = arith.mulf %62, %22 : vector<8x1xf32>
    %66 = arith.subf %64, %65 : vector<8x1xf32>
    %67 = arith.mulf %60, %22 : vector<8x1xf32>
    %68 = arith.addf %1, %67 : vector<8x1xf32>
    %69 = arith.mulf %62, %21 : vector<8x1xf32>
    %70 = arith.addf %68, %69 : vector<8x1xf32>
    %71 = math.cos %14 : vector<1x128xf32>
    %72 = math.sin %14 : vector<1x128xf32>
    %cst_32 = arith.constant 5.000000e-01 : f32
    %73 = vector.broadcast %cst_32 : f32 to vector<1x128xf32>
    %74 = arith.mulf %73, %11 : vector<1x128xf32>
    %cst_33 = arith.constant 5.000000e-01 : f32
    %75 = vector.broadcast %cst_33 : f32 to vector<1x128xf32>
    %76 = arith.mulf %75, %12 : vector<1x128xf32>
    %77 = arith.mulf %74, %71 : vector<1x128xf32>
    %78 = arith.addf %8, %77 : vector<1x128xf32>
    %79 = arith.mulf %76, %72 : vector<1x128xf32>
    %80 = arith.subf %78, %79 : vector<1x128xf32>
    %81 = arith.mulf %74, %72 : vector<1x128xf32>
    %82 = arith.addf %9, %81 : vector<1x128xf32>
    %83 = arith.mulf %76, %71 : vector<1x128xf32>
    %84 = arith.addf %82, %83 : vector<1x128xf32>
    %cst_34 = arith.constant -5.000000e-01 : f32
    %85 = vector.broadcast %cst_34 : f32 to vector<1x128xf32>
    %86 = arith.mulf %85, %11 : vector<1x128xf32>
    %cst_35 = arith.constant 5.000000e-01 : f32
    %87 = vector.broadcast %cst_35 : f32 to vector<1x128xf32>
    %88 = arith.mulf %87, %12 : vector<1x128xf32>
    %89 = arith.mulf %86, %71 : vector<1x128xf32>
    %90 = arith.addf %8, %89 : vector<1x128xf32>
    %91 = arith.mulf %88, %72 : vector<1x128xf32>
    %92 = arith.subf %90, %91 : vector<1x128xf32>
    %93 = arith.mulf %86, %72 : vector<1x128xf32>
    %94 = arith.addf %9, %93 : vector<1x128xf32>
    %95 = arith.mulf %88, %71 : vector<1x128xf32>
    %96 = arith.addf %94, %95 : vector<1x128xf32>
    %cst_36 = arith.constant -5.000000e-01 : f32
    %97 = vector.broadcast %cst_36 : f32 to vector<1x128xf32>
    %98 = arith.mulf %97, %11 : vector<1x128xf32>
    %cst_37 = arith.constant -5.000000e-01 : f32
    %99 = vector.broadcast %cst_37 : f32 to vector<1x128xf32>
    %100 = arith.mulf %99, %12 : vector<1x128xf32>
    %101 = arith.mulf %98, %71 : vector<1x128xf32>
    %102 = arith.addf %8, %101 : vector<1x128xf32>
    %103 = arith.mulf %100, %72 : vector<1x128xf32>
    %104 = arith.subf %102, %103 : vector<1x128xf32>
    %105 = arith.mulf %98, %72 : vector<1x128xf32>
    %106 = arith.addf %9, %105 : vector<1x128xf32>
    %107 = arith.mulf %100, %71 : vector<1x128xf32>
    %108 = arith.addf %106, %107 : vector<1x128xf32>
    %cst_38 = arith.constant 5.000000e-01 : f32
    %109 = vector.broadcast %cst_38 : f32 to vector<1x128xf32>
    %110 = arith.mulf %109, %11 : vector<1x128xf32>
    %cst_39 = arith.constant -5.000000e-01 : f32
    %111 = vector.broadcast %cst_39 : f32 to vector<1x128xf32>
    %112 = arith.mulf %111, %12 : vector<1x128xf32>
    %113 = arith.mulf %110, %71 : vector<1x128xf32>
    %114 = arith.addf %8, %113 : vector<1x128xf32>
    %115 = arith.mulf %112, %72 : vector<1x128xf32>
    %116 = arith.subf %114, %115 : vector<1x128xf32>
    %117 = arith.mulf %110, %72 : vector<1x128xf32>
    %118 = arith.addf %9, %117 : vector<1x128xf32>
    %119 = arith.mulf %112, %71 : vector<1x128xf32>
    %120 = arith.addf %118, %119 : vector<1x128xf32>
    %121 = arith.subf %92, %80 : vector<1x128xf32>
    %122 = arith.subf %96, %84 : vector<1x128xf32>
    %123 = arith.mulf %121, %84 : vector<1x128xf32>
    %124 = arith.mulf %122, %80 : vector<1x128xf32>
    %125 = arith.subf %123, %124 : vector<1x128xf32>
    %126 = arith.subf %104, %92 : vector<1x128xf32>
    %127 = arith.subf %108, %96 : vector<1x128xf32>
    %128 = arith.mulf %126, %96 : vector<1x128xf32>
    %129 = arith.mulf %127, %92 : vector<1x128xf32>
    %130 = arith.subf %128, %129 : vector<1x128xf32>
    %131 = arith.subf %116, %104 : vector<1x128xf32>
    %132 = arith.subf %120, %108 : vector<1x128xf32>
    %133 = arith.mulf %131, %108 : vector<1x128xf32>
    %134 = arith.mulf %132, %104 : vector<1x128xf32>
    %135 = arith.subf %133, %134 : vector<1x128xf32>
    %136 = arith.subf %80, %116 : vector<1x128xf32>
    %137 = arith.subf %84, %120 : vector<1x128xf32>
    %138 = arith.mulf %136, %120 : vector<1x128xf32>
    %139 = arith.mulf %137, %116 : vector<1x128xf32>
    %140 = arith.subf %138, %139 : vector<1x128xf32>
    %141 = arith.subf %42, %30 : vector<8x1xf32>
    %142 = arith.subf %46, %34 : vector<8x1xf32>
    %143 = vector.broadcast %121 : vector<1x128xf32> to vector<8x128xf32>
    %144 = vector.broadcast %34 : vector<8x1xf32> to vector<8x128xf32>
    %145 = arith.mulf %143, %144 : vector<8x128xf32>
    %146 = vector.broadcast %122 : vector<1x128xf32> to vector<8x128xf32>
    %147 = vector.broadcast %30 : vector<8x1xf32> to vector<8x128xf32>
    %148 = arith.mulf %146, %147 : vector<8x128xf32>
    %149 = arith.subf %145, %148 : vector<8x128xf32>
    %150 = vector.broadcast %125 : vector<1x128xf32> to vector<8x128xf32>
    %151 = arith.subf %149, %150 : vector<8x128xf32>
    %152 = vector.broadcast %121 : vector<1x128xf32> to vector<8x128xf32>
    %153 = vector.broadcast %46 : vector<8x1xf32> to vector<8x128xf32>
    %154 = arith.mulf %152, %153 : vector<8x128xf32>
    %155 = vector.broadcast %122 : vector<1x128xf32> to vector<8x128xf32>
    %156 = vector.broadcast %42 : vector<8x1xf32> to vector<8x128xf32>
    %157 = arith.mulf %155, %156 : vector<8x128xf32>
    %158 = arith.subf %154, %157 : vector<8x128xf32>
    %159 = vector.broadcast %125 : vector<1x128xf32> to vector<8x128xf32>
    %160 = arith.subf %158, %159 : vector<8x128xf32>
    %161 = arith.subf %160, %151 : vector<8x128xf32>
    %162 = math.absf %161 : vector<8x128xf32>
    %cst_40 = arith.constant 9.99999997E-7 : f32
    %163 = vector.broadcast %cst_40 : f32 to vector<8x128xf32>
    %164 = arith.cmpf olt, %162, %163 : vector<8x128xf32>
    %cst_41 = arith.constant 1.000000e+00 : f32
    %165 = vector.broadcast %cst_41 : f32 to vector<8x128xf32>
    %166 = arith.select %164, %165, %161 : vector<8x128xi1>, vector<8x128xf32>
    %cst_42 = arith.constant 0.000000e+00 : f32
    %167 = vector.broadcast %cst_42 : f32 to vector<8x128xf32>
    %168 = arith.subf %167, %151 : vector<8x128xf32>
    %169 = tpu.reciprocal %166 {approx = true} : vector<8x128xf32> -> vector<8x128xf32>
    %170 = arith.mulf %168, %169 : vector<8x128xf32>
    %cst_43 = arith.constant 9.99999997E-7 : f32
    %171 = vector.broadcast %cst_43 : f32 to vector<8x128xf32>
    %172 = arith.cmpf ogt, %161, %171 : vector<8x128xf32>
    %cst_44 = arith.constant 0.000000e+00 : f32
    %173 = vector.broadcast %cst_44 : f32 to vector<8x128xf32>
    %174 = arith.maximumf %173, %170 : vector<8x128xf32>
    %cst_45 = arith.constant 0.000000e+00 : f32
    %175 = vector.broadcast %cst_45 : f32 to vector<8x128xf32>
    %176 = arith.select %172, %174, %175 : vector<8x128xi1>, vector<8x128xf32>
    %cst_46 = arith.constant -9.99999997E-7 : f32
    %177 = vector.broadcast %cst_46 : f32 to vector<8x128xf32>
    %178 = arith.cmpf olt, %161, %177 : vector<8x128xf32>
    %cst_47 = arith.constant 1.000000e+00 : f32
    %179 = vector.broadcast %cst_47 : f32 to vector<8x128xf32>
    %180 = arith.minimumf %179, %170 : vector<8x128xf32>
    %cst_48 = arith.constant 1.000000e+00 : f32
    %181 = vector.broadcast %cst_48 : f32 to vector<8x128xf32>
    %182 = arith.select %178, %180, %181 : vector<8x128xi1>, vector<8x128xf32>
    %183 = math.absf %161 : vector<8x128xf32>
    %cst_49 = arith.constant 9.99999997E-7 : f32
    %184 = vector.broadcast %cst_49 : f32 to vector<8x128xf32>
    %185 = arith.cmpf ole, %183, %184 : vector<8x128xf32>
    %cst_50 = arith.constant -9.99999997E-7 : f32
    %186 = vector.broadcast %cst_50 : f32 to vector<8x128xf32>
    %187 = arith.cmpf olt, %151, %186 : vector<8x128xf32>
    %188 = arith.andi %185, %187 : vector<8x128xi1>
    %cst_51 = arith.constant -1.000000e+00 : f32
    %189 = vector.broadcast %cst_51 : f32 to vector<8x128xf32>
    %190 = arith.select %188, %189, %182 : vector<8x128xi1>, vector<8x128xf32>
    %191 = vector.broadcast %126 : vector<1x128xf32> to vector<8x128xf32>
    %192 = vector.broadcast %34 : vector<8x1xf32> to vector<8x128xf32>
    %193 = arith.mulf %191, %192 : vector<8x128xf32>
    %194 = vector.broadcast %127 : vector<1x128xf32> to vector<8x128xf32>
    %195 = vector.broadcast %30 : vector<8x1xf32> to vector<8x128xf32>
    %196 = arith.mulf %194, %195 : vector<8x128xf32>
    %197 = arith.subf %193, %196 : vector<8x128xf32>
    %198 = vector.broadcast %130 : vector<1x128xf32> to vector<8x128xf32>
    %199 = arith.subf %197, %198 : vector<8x128xf32>
    %200 = vector.broadcast %126 : vector<1x128xf32> to vector<8x128xf32>
    %201 = vector.broadcast %46 : vector<8x1xf32> to vector<8x128xf32>
    %202 = arith.mulf %200, %201 : vector<8x128xf32>
    %203 = vector.broadcast %127 : vector<1x128xf32> to vector<8x128xf32>
    %204 = vector.broadcast %42 : vector<8x1xf32> to vector<8x128xf32>
    %205 = arith.mulf %203, %204 : vector<8x128xf32>
    %206 = arith.subf %202, %205 : vector<8x128xf32>
    %207 = vector.broadcast %130 : vector<1x128xf32> to vector<8x128xf32>
    %208 = arith.subf %206, %207 : vector<8x128xf32>
    %209 = arith.subf %208, %199 : vector<8x128xf32>
    %210 = math.absf %209 : vector<8x128xf32>
    %cst_52 = arith.constant 9.99999997E-7 : f32
    %211 = vector.broadcast %cst_52 : f32 to vector<8x128xf32>
    %212 = arith.cmpf olt, %210, %211 : vector<8x128xf32>
    %cst_53 = arith.constant 1.000000e+00 : f32
    %213 = vector.broadcast %cst_53 : f32 to vector<8x128xf32>
    %214 = arith.select %212, %213, %209 : vector<8x128xi1>, vector<8x128xf32>
    %cst_54 = arith.constant 0.000000e+00 : f32
    %215 = vector.broadcast %cst_54 : f32 to vector<8x128xf32>
    %216 = arith.subf %215, %199 : vector<8x128xf32>
    %217 = tpu.reciprocal %214 {approx = true} : vector<8x128xf32> -> vector<8x128xf32>
    %218 = arith.mulf %216, %217 : vector<8x128xf32>
    %cst_55 = arith.constant 9.99999997E-7 : f32
    %219 = vector.broadcast %cst_55 : f32 to vector<8x128xf32>
    %220 = arith.cmpf ogt, %209, %219 : vector<8x128xf32>
    %221 = arith.maximumf %176, %218 : vector<8x128xf32>
    %222 = arith.select %220, %221, %176 : vector<8x128xi1>, vector<8x128xf32>
    %cst_56 = arith.constant -9.99999997E-7 : f32
    %223 = vector.broadcast %cst_56 : f32 to vector<8x128xf32>
    %224 = arith.cmpf olt, %209, %223 : vector<8x128xf32>
    %225 = arith.minimumf %190, %218 : vector<8x128xf32>
    %226 = arith.select %224, %225, %190 : vector<8x128xi1>, vector<8x128xf32>
    %227 = math.absf %209 : vector<8x128xf32>
    %cst_57 = arith.constant 9.99999997E-7 : f32
    %228 = vector.broadcast %cst_57 : f32 to vector<8x128xf32>
    %229 = arith.cmpf ole, %227, %228 : vector<8x128xf32>
    %cst_58 = arith.constant -9.99999997E-7 : f32
    %230 = vector.broadcast %cst_58 : f32 to vector<8x128xf32>
    %231 = arith.cmpf olt, %199, %230 : vector<8x128xf32>
    %232 = arith.andi %229, %231 : vector<8x128xi1>
    %cst_59 = arith.constant -1.000000e+00 : f32
    %233 = vector.broadcast %cst_59 : f32 to vector<8x128xf32>
    %234 = arith.select %232, %233, %226 : vector<8x128xi1>, vector<8x128xf32>
    %235 = vector.broadcast %131 : vector<1x128xf32> to vector<8x128xf32>
    %236 = vector.broadcast %34 : vector<8x1xf32> to vector<8x128xf32>
    %237 = arith.mulf %235, %236 : vector<8x128xf32>
    %238 = vector.broadcast %132 : vector<1x128xf32> to vector<8x128xf32>
    %239 = vector.broadcast %30 : vector<8x1xf32> to vector<8x128xf32>
    %240 = arith.mulf %238, %239 : vector<8x128xf32>
    %241 = arith.subf %237, %240 : vector<8x128xf32>
    %242 = vector.broadcast %135 : vector<1x128xf32> to vector<8x128xf32>
    %243 = arith.subf %241, %242 : vector<8x128xf32>
    %244 = vector.broadcast %131 : vector<1x128xf32> to vector<8x128xf32>
    %245 = vector.broadcast %46 : vector<8x1xf32> to vector<8x128xf32>
    %246 = arith.mulf %244, %245 : vector<8x128xf32>
    %247 = vector.broadcast %132 : vector<1x128xf32> to vector<8x128xf32>
    %248 = vector.broadcast %42 : vector<8x1xf32> to vector<8x128xf32>
    %249 = arith.mulf %247, %248 : vector<8x128xf32>
    %250 = arith.subf %246, %249 : vector<8x128xf32>
    %251 = vector.broadcast %135 : vector<1x128xf32> to vector<8x128xf32>
    %252 = arith.subf %250, %251 : vector<8x128xf32>
    %253 = arith.subf %252, %243 : vector<8x128xf32>
    %254 = math.absf %253 : vector<8x128xf32>
    %cst_60 = arith.constant 9.99999997E-7 : f32
    %255 = vector.broadcast %cst_60 : f32 to vector<8x128xf32>
    %256 = arith.cmpf olt, %254, %255 : vector<8x128xf32>
    %cst_61 = arith.constant 1.000000e+00 : f32
    %257 = vector.broadcast %cst_61 : f32 to vector<8x128xf32>
    %258 = arith.select %256, %257, %253 : vector<8x128xi1>, vector<8x128xf32>
    %cst_62 = arith.constant 0.000000e+00 : f32
    %259 = vector.broadcast %cst_62 : f32 to vector<8x128xf32>
    %260 = arith.subf %259, %243 : vector<8x128xf32>
    %261 = tpu.reciprocal %258 {approx = true} : vector<8x128xf32> -> vector<8x128xf32>
    %262 = arith.mulf %260, %261 : vector<8x128xf32>
    %cst_63 = arith.constant 9.99999997E-7 : f32
    %263 = vector.broadcast %cst_63 : f32 to vector<8x128xf32>
    %264 = arith.cmpf ogt, %253, %263 : vector<8x128xf32>
    %265 = arith.maximumf %222, %262 : vector<8x128xf32>
    %266 = arith.select %264, %265, %222 : vector<8x128xi1>, vector<8x128xf32>
    %cst_64 = arith.constant -9.99999997E-7 : f32
    %267 = vector.broadcast %cst_64 : f32 to vector<8x128xf32>
    %268 = arith.cmpf olt, %253, %267 : vector<8x128xf32>
    %269 = arith.minimumf %234, %262 : vector<8x128xf32>
    %270 = arith.select %268, %269, %234 : vector<8x128xi1>, vector<8x128xf32>
    %271 = math.absf %253 : vector<8x128xf32>
    %cst_65 = arith.constant 9.99999997E-7 : f32
    %272 = vector.broadcast %cst_65 : f32 to vector<8x128xf32>
    %273 = arith.cmpf ole, %271, %272 : vector<8x128xf32>
    %cst_66 = arith.constant -9.99999997E-7 : f32
    %274 = vector.broadcast %cst_66 : f32 to vector<8x128xf32>
    %275 = arith.cmpf olt, %243, %274 : vector<8x128xf32>
    %276 = arith.andi %273, %275 : vector<8x128xi1>
    %cst_67 = arith.constant -1.000000e+00 : f32
    %277 = vector.broadcast %cst_67 : f32 to vector<8x128xf32>
    %278 = arith.select %276, %277, %270 : vector<8x128xi1>, vector<8x128xf32>
    %279 = vector.broadcast %136 : vector<1x128xf32> to vector<8x128xf32>
    %280 = vector.broadcast %34 : vector<8x1xf32> to vector<8x128xf32>
    %281 = arith.mulf %279, %280 : vector<8x128xf32>
    %282 = vector.broadcast %137 : vector<1x128xf32> to vector<8x128xf32>
    %283 = vector.broadcast %30 : vector<8x1xf32> to vector<8x128xf32>
    %284 = arith.mulf %282, %283 : vector<8x128xf32>
    %285 = arith.subf %281, %284 : vector<8x128xf32>
    %286 = vector.broadcast %140 : vector<1x128xf32> to vector<8x128xf32>
    %287 = arith.subf %285, %286 : vector<8x128xf32>
    %288 = vector.broadcast %136 : vector<1x128xf32> to vector<8x128xf32>
    %289 = vector.broadcast %46 : vector<8x1xf32> to vector<8x128xf32>
    %290 = arith.mulf %288, %289 : vector<8x128xf32>
    %291 = vector.broadcast %137 : vector<1x128xf32> to vector<8x128xf32>
    %292 = vector.broadcast %42 : vector<8x1xf32> to vector<8x128xf32>
    %293 = arith.mulf %291, %292 : vector<8x128xf32>
    %294 = arith.subf %290, %293 : vector<8x128xf32>
    %295 = vector.broadcast %140 : vector<1x128xf32> to vector<8x128xf32>
    %296 = arith.subf %294, %295 : vector<8x128xf32>
    %297 = arith.subf %296, %287 : vector<8x128xf32>
    %298 = math.absf %297 : vector<8x128xf32>
    %cst_68 = arith.constant 9.99999997E-7 : f32
    %299 = vector.broadcast %cst_68 : f32 to vector<8x128xf32>
    %300 = arith.cmpf olt, %298, %299 : vector<8x128xf32>
    %cst_69 = arith.constant 1.000000e+00 : f32
    %301 = vector.broadcast %cst_69 : f32 to vector<8x128xf32>
    %302 = arith.select %300, %301, %297 : vector<8x128xi1>, vector<8x128xf32>
    %cst_70 = arith.constant 0.000000e+00 : f32
    %303 = vector.broadcast %cst_70 : f32 to vector<8x128xf32>
    %304 = arith.subf %303, %287 : vector<8x128xf32>
    %305 = tpu.reciprocal %302 {approx = true} : vector<8x128xf32> -> vector<8x128xf32>
    %306 = arith.mulf %304, %305 : vector<8x128xf32>
    %cst_71 = arith.constant 9.99999997E-7 : f32
    %307 = vector.broadcast %cst_71 : f32 to vector<8x128xf32>
    %308 = arith.cmpf ogt, %297, %307 : vector<8x128xf32>
    %309 = arith.maximumf %266, %306 : vector<8x128xf32>
    %310 = arith.select %308, %309, %266 : vector<8x128xi1>, vector<8x128xf32>
    %cst_72 = arith.constant -9.99999997E-7 : f32
    %311 = vector.broadcast %cst_72 : f32 to vector<8x128xf32>
    %312 = arith.cmpf olt, %297, %311 : vector<8x128xf32>
    %313 = arith.minimumf %278, %306 : vector<8x128xf32>
    %314 = arith.select %312, %313, %278 : vector<8x128xi1>, vector<8x128xf32>
    %315 = math.absf %297 : vector<8x128xf32>
    %cst_73 = arith.constant 9.99999997E-7 : f32
    %316 = vector.broadcast %cst_73 : f32 to vector<8x128xf32>
    %317 = arith.cmpf ole, %315, %316 : vector<8x128xf32>
    %cst_74 = arith.constant -9.99999997E-7 : f32
    %318 = vector.broadcast %cst_74 : f32 to vector<8x128xf32>
    %319 = arith.cmpf olt, %287, %318 : vector<8x128xf32>
    %320 = arith.andi %317, %319 : vector<8x128xi1>
    %cst_75 = arith.constant -1.000000e+00 : f32
    %321 = vector.broadcast %cst_75 : f32 to vector<8x128xf32>
    %322 = arith.select %320, %321, %314 : vector<8x128xi1>, vector<8x128xf32>
    %323 = arith.cmpf olt, %310, %322 : vector<8x128xf32>
    %324 = vector.broadcast %141 : vector<8x1xf32> to vector<8x128xf32>
    %325 = arith.mulf %310, %324 : vector<8x128xf32>
    %326 = vector.broadcast %30 : vector<8x1xf32> to vector<8x128xf32>
    %327 = arith.addf %326, %325 : vector<8x128xf32>
    %328 = vector.broadcast %142 : vector<8x1xf32> to vector<8x128xf32>
    %329 = arith.mulf %310, %328 : vector<8x128xf32>
    %330 = vector.broadcast %34 : vector<8x1xf32> to vector<8x128xf32>
    %331 = arith.addf %330, %329 : vector<8x128xf32>
    %332 = vector.broadcast %141 : vector<8x1xf32> to vector<8x128xf32>
    %333 = arith.mulf %322, %332 : vector<8x128xf32>
    %334 = vector.broadcast %30 : vector<8x1xf32> to vector<8x128xf32>
    %335 = arith.addf %334, %333 : vector<8x128xf32>
    %336 = vector.broadcast %142 : vector<8x1xf32> to vector<8x128xf32>
    %337 = arith.mulf %322, %336 : vector<8x128xf32>
    %338 = vector.broadcast %34 : vector<8x1xf32> to vector<8x128xf32>
    %339 = arith.addf %338, %337 : vector<8x128xf32>
    %340 = arith.mulf %327, %339 : vector<8x128xf32>
    %341 = arith.mulf %331, %335 : vector<8x128xf32>
    %342 = arith.subf %340, %341 : vector<8x128xf32>
    %cst_76 = arith.constant 0.000000e+00 : f32
    %343 = vector.broadcast %cst_76 : f32 to vector<8x128xf32>
    %344 = arith.select %323, %342, %343 : vector<8x128xi1>, vector<8x128xf32>
    %cst_77 = arith.constant 0.000000e+00 : f32
    %345 = vector.broadcast %cst_77 : f32 to vector<8x128xf32>
    %346 = arith.addf %345, %344 : vector<8x128xf32>
    %347 = arith.subf %54, %42 : vector<8x1xf32>
    %348 = arith.subf %58, %46 : vector<8x1xf32>
    %349 = vector.broadcast %121 : vector<1x128xf32> to vector<8x128xf32>
    %350 = vector.broadcast %46 : vector<8x1xf32> to vector<8x128xf32>
    %351 = arith.mulf %349, %350 : vector<8x128xf32>
    %352 = vector.broadcast %122 : vector<1x128xf32> to vector<8x128xf32>
    %353 = vector.broadcast %42 : vector<8x1xf32> to vector<8x128xf32>
    %354 = arith.mulf %352, %353 : vector<8x128xf32>
    %355 = arith.subf %351, %354 : vector<8x128xf32>
    %356 = vector.broadcast %125 : vector<1x128xf32> to vector<8x128xf32>
    %357 = arith.subf %355, %356 : vector<8x128xf32>
    %358 = vector.broadcast %121 : vector<1x128xf32> to vector<8x128xf32>
    %359 = vector.broadcast %58 : vector<8x1xf32> to vector<8x128xf32>
    %360 = arith.mulf %358, %359 : vector<8x128xf32>
    %361 = vector.broadcast %122 : vector<1x128xf32> to vector<8x128xf32>
    %362 = vector.broadcast %54 : vector<8x1xf32> to vector<8x128xf32>
    %363 = arith.mulf %361, %362 : vector<8x128xf32>
    %364 = arith.subf %360, %363 : vector<8x128xf32>
    %365 = vector.broadcast %125 : vector<1x128xf32> to vector<8x128xf32>
    %366 = arith.subf %364, %365 : vector<8x128xf32>
    %367 = arith.subf %366, %357 : vector<8x128xf32>
    %368 = math.absf %367 : vector<8x128xf32>
    %cst_78 = arith.constant 9.99999997E-7 : f32
    %369 = vector.broadcast %cst_78 : f32 to vector<8x128xf32>
    %370 = arith.cmpf olt, %368, %369 : vector<8x128xf32>
    %cst_79 = arith.constant 1.000000e+00 : f32
    %371 = vector.broadcast %cst_79 : f32 to vector<8x128xf32>
    %372 = arith.select %370, %371, %367 : vector<8x128xi1>, vector<8x128xf32>
    %cst_80 = arith.constant 0.000000e+00 : f32
    %373 = vector.broadcast %cst_80 : f32 to vector<8x128xf32>
    %374 = arith.subf %373, %357 : vector<8x128xf32>
    %375 = tpu.reciprocal %372 {approx = true} : vector<8x128xf32> -> vector<8x128xf32>
    %376 = arith.mulf %374, %375 : vector<8x128xf32>
    %cst_81 = arith.constant 9.99999997E-7 : f32
    %377 = vector.broadcast %cst_81 : f32 to vector<8x128xf32>
    %378 = arith.cmpf ogt, %367, %377 : vector<8x128xf32>
    %cst_82 = arith.constant 0.000000e+00 : f32
    %379 = vector.broadcast %cst_82 : f32 to vector<8x128xf32>
    %380 = arith.maximumf %379, %376 : vector<8x128xf32>
    %cst_83 = arith.constant 0.000000e+00 : f32
    %381 = vector.broadcast %cst_83 : f32 to vector<8x128xf32>
    %382 = arith.select %378, %380, %381 : vector<8x128xi1>, vector<8x128xf32>
    %cst_84 = arith.constant -9.99999997E-7 : f32
    %383 = vector.broadcast %cst_84 : f32 to vector<8x128xf32>
    %384 = arith.cmpf olt, %367, %383 : vector<8x128xf32>
    %cst_85 = arith.constant 1.000000e+00 : f32
    %385 = vector.broadcast %cst_85 : f32 to vector<8x128xf32>
    %386 = arith.minimumf %385, %376 : vector<8x128xf32>
    %cst_86 = arith.constant 1.000000e+00 : f32
    %387 = vector.broadcast %cst_86 : f32 to vector<8x128xf32>
    %388 = arith.select %384, %386, %387 : vector<8x128xi1>, vector<8x128xf32>
    %389 = math.absf %367 : vector<8x128xf32>
    %cst_87 = arith.constant 9.99999997E-7 : f32
    %390 = vector.broadcast %cst_87 : f32 to vector<8x128xf32>
    %391 = arith.cmpf ole, %389, %390 : vector<8x128xf32>
    %cst_88 = arith.constant -9.99999997E-7 : f32
    %392 = vector.broadcast %cst_88 : f32 to vector<8x128xf32>
    %393 = arith.cmpf olt, %357, %392 : vector<8x128xf32>
    %394 = arith.andi %391, %393 : vector<8x128xi1>
    %cst_89 = arith.constant -1.000000e+00 : f32
    %395 = vector.broadcast %cst_89 : f32 to vector<8x128xf32>
    %396 = arith.select %394, %395, %388 : vector<8x128xi1>, vector<8x128xf32>
    %397 = vector.broadcast %126 : vector<1x128xf32> to vector<8x128xf32>
    %398 = vector.broadcast %46 : vector<8x1xf32> to vector<8x128xf32>
    %399 = arith.mulf %397, %398 : vector<8x128xf32>
    %400 = vector.broadcast %127 : vector<1x128xf32> to vector<8x128xf32>
    %401 = vector.broadcast %42 : vector<8x1xf32> to vector<8x128xf32>
    %402 = arith.mulf %400, %401 : vector<8x128xf32>
    %403 = arith.subf %399, %402 : vector<8x128xf32>
    %404 = vector.broadcast %130 : vector<1x128xf32> to vector<8x128xf32>
    %405 = arith.subf %403, %404 : vector<8x128xf32>
    %406 = vector.broadcast %126 : vector<1x128xf32> to vector<8x128xf32>
    %407 = vector.broadcast %58 : vector<8x1xf32> to vector<8x128xf32>
    %408 = arith.mulf %406, %407 : vector<8x128xf32>
    %409 = vector.broadcast %127 : vector<1x128xf32> to vector<8x128xf32>
    %410 = vector.broadcast %54 : vector<8x1xf32> to vector<8x128xf32>
    %411 = arith.mulf %409, %410 : vector<8x128xf32>
    %412 = arith.subf %408, %411 : vector<8x128xf32>
    %413 = vector.broadcast %130 : vector<1x128xf32> to vector<8x128xf32>
    %414 = arith.subf %412, %413 : vector<8x128xf32>
    %415 = arith.subf %414, %405 : vector<8x128xf32>
    %416 = math.absf %415 : vector<8x128xf32>
    %cst_90 = arith.constant 9.99999997E-7 : f32
    %417 = vector.broadcast %cst_90 : f32 to vector<8x128xf32>
    %418 = arith.cmpf olt, %416, %417 : vector<8x128xf32>
    %cst_91 = arith.constant 1.000000e+00 : f32
    %419 = vector.broadcast %cst_91 : f32 to vector<8x128xf32>
    %420 = arith.select %418, %419, %415 : vector<8x128xi1>, vector<8x128xf32>
    %cst_92 = arith.constant 0.000000e+00 : f32
    %421 = vector.broadcast %cst_92 : f32 to vector<8x128xf32>
    %422 = arith.subf %421, %405 : vector<8x128xf32>
    %423 = tpu.reciprocal %420 {approx = true} : vector<8x128xf32> -> vector<8x128xf32>
    %424 = arith.mulf %422, %423 : vector<8x128xf32>
    %cst_93 = arith.constant 9.99999997E-7 : f32
    %425 = vector.broadcast %cst_93 : f32 to vector<8x128xf32>
    %426 = arith.cmpf ogt, %415, %425 : vector<8x128xf32>
    %427 = arith.maximumf %382, %424 : vector<8x128xf32>
    %428 = arith.select %426, %427, %382 : vector<8x128xi1>, vector<8x128xf32>
    %cst_94 = arith.constant -9.99999997E-7 : f32
    %429 = vector.broadcast %cst_94 : f32 to vector<8x128xf32>
    %430 = arith.cmpf olt, %415, %429 : vector<8x128xf32>
    %431 = arith.minimumf %396, %424 : vector<8x128xf32>
    %432 = arith.select %430, %431, %396 : vector<8x128xi1>, vector<8x128xf32>
    %433 = math.absf %415 : vector<8x128xf32>
    %cst_95 = arith.constant 9.99999997E-7 : f32
    %434 = vector.broadcast %cst_95 : f32 to vector<8x128xf32>
    %435 = arith.cmpf ole, %433, %434 : vector<8x128xf32>
    %cst_96 = arith.constant -9.99999997E-7 : f32
    %436 = vector.broadcast %cst_96 : f32 to vector<8x128xf32>
    %437 = arith.cmpf olt, %405, %436 : vector<8x128xf32>
    %438 = arith.andi %435, %437 : vector<8x128xi1>
    %cst_97 = arith.constant -1.000000e+00 : f32
    %439 = vector.broadcast %cst_97 : f32 to vector<8x128xf32>
    %440 = arith.select %438, %439, %432 : vector<8x128xi1>, vector<8x128xf32>
    %441 = vector.broadcast %131 : vector<1x128xf32> to vector<8x128xf32>
    %442 = vector.broadcast %46 : vector<8x1xf32> to vector<8x128xf32>
    %443 = arith.mulf %441, %442 : vector<8x128xf32>
    %444 = vector.broadcast %132 : vector<1x128xf32> to vector<8x128xf32>
    %445 = vector.broadcast %42 : vector<8x1xf32> to vector<8x128xf32>
    %446 = arith.mulf %444, %445 : vector<8x128xf32>
    %447 = arith.subf %443, %446 : vector<8x128xf32>
    %448 = vector.broadcast %135 : vector<1x128xf32> to vector<8x128xf32>
    %449 = arith.subf %447, %448 : vector<8x128xf32>
    %450 = vector.broadcast %131 : vector<1x128xf32> to vector<8x128xf32>
    %451 = vector.broadcast %58 : vector<8x1xf32> to vector<8x128xf32>
    %452 = arith.mulf %450, %451 : vector<8x128xf32>
    %453 = vector.broadcast %132 : vector<1x128xf32> to vector<8x128xf32>
    %454 = vector.broadcast %54 : vector<8x1xf32> to vector<8x128xf32>
    %455 = arith.mulf %453, %454 : vector<8x128xf32>
    %456 = arith.subf %452, %455 : vector<8x128xf32>
    %457 = vector.broadcast %135 : vector<1x128xf32> to vector<8x128xf32>
    %458 = arith.subf %456, %457 : vector<8x128xf32>
    %459 = arith.subf %458, %449 : vector<8x128xf32>
    %460 = math.absf %459 : vector<8x128xf32>
    %cst_98 = arith.constant 9.99999997E-7 : f32
    %461 = vector.broadcast %cst_98 : f32 to vector<8x128xf32>
    %462 = arith.cmpf olt, %460, %461 : vector<8x128xf32>
    %cst_99 = arith.constant 1.000000e+00 : f32
    %463 = vector.broadcast %cst_99 : f32 to vector<8x128xf32>
    %464 = arith.select %462, %463, %459 : vector<8x128xi1>, vector<8x128xf32>
    %cst_100 = arith.constant 0.000000e+00 : f32
    %465 = vector.broadcast %cst_100 : f32 to vector<8x128xf32>
    %466 = arith.subf %465, %449 : vector<8x128xf32>
    %467 = tpu.reciprocal %464 {approx = true} : vector<8x128xf32> -> vector<8x128xf32>
    %468 = arith.mulf %466, %467 : vector<8x128xf32>
    %cst_101 = arith.constant 9.99999997E-7 : f32
    %469 = vector.broadcast %cst_101 : f32 to vector<8x128xf32>
    %470 = arith.cmpf ogt, %459, %469 : vector<8x128xf32>
    %471 = arith.maximumf %428, %468 : vector<8x128xf32>
    %472 = arith.select %470, %471, %428 : vector<8x128xi1>, vector<8x128xf32>
    %cst_102 = arith.constant -9.99999997E-7 : f32
    %473 = vector.broadcast %cst_102 : f32 to vector<8x128xf32>
    %474 = arith.cmpf olt, %459, %473 : vector<8x128xf32>
    %475 = arith.minimumf %440, %468 : vector<8x128xf32>
    %476 = arith.select %474, %475, %440 : vector<8x128xi1>, vector<8x128xf32>
    %477 = math.absf %459 : vector<8x128xf32>
    %cst_103 = arith.constant 9.99999997E-7 : f32
    %478 = vector.broadcast %cst_103 : f32 to vector<8x128xf32>
    %479 = arith.cmpf ole, %477, %478 : vector<8x128xf32>
    %cst_104 = arith.constant -9.99999997E-7 : f32
    %480 = vector.broadcast %cst_104 : f32 to vector<8x128xf32>
    %481 = arith.cmpf olt, %449, %480 : vector<8x128xf32>
    %482 = arith.andi %479, %481 : vector<8x128xi1>
    %cst_105 = arith.constant -1.000000e+00 : f32
    %483 = vector.broadcast %cst_105 : f32 to vector<8x128xf32>
    %484 = arith.select %482, %483, %476 : vector<8x128xi1>, vector<8x128xf32>
    %485 = vector.broadcast %136 : vector<1x128xf32> to vector<8x128xf32>
    %486 = vector.broadcast %46 : vector<8x1xf32> to vector<8x128xf32>
    %487 = arith.mulf %485, %486 : vector<8x128xf32>
    %488 = vector.broadcast %137 : vector<1x128xf32> to vector<8x128xf32>
    %489 = vector.broadcast %42 : vector<8x1xf32> to vector<8x128xf32>
    %490 = arith.mulf %488, %489 : vector<8x128xf32>
    %491 = arith.subf %487, %490 : vector<8x128xf32>
    %492 = vector.broadcast %140 : vector<1x128xf32> to vector<8x128xf32>
    %493 = arith.subf %491, %492 : vector<8x128xf32>
    %494 = vector.broadcast %136 : vector<1x128xf32> to vector<8x128xf32>
    %495 = vector.broadcast %58 : vector<8x1xf32> to vector<8x128xf32>
    %496 = arith.mulf %494, %495 : vector<8x128xf32>
    %497 = vector.broadcast %137 : vector<1x128xf32> to vector<8x128xf32>
    %498 = vector.broadcast %54 : vector<8x1xf32> to vector<8x128xf32>
    %499 = arith.mulf %497, %498 : vector<8x128xf32>
    %500 = arith.subf %496, %499 : vector<8x128xf32>
    %501 = vector.broadcast %140 : vector<1x128xf32> to vector<8x128xf32>
    %502 = arith.subf %500, %501 : vector<8x128xf32>
    %503 = arith.subf %502, %493 : vector<8x128xf32>
    %504 = math.absf %503 : vector<8x128xf32>
    %cst_106 = arith.constant 9.99999997E-7 : f32
    %505 = vector.broadcast %cst_106 : f32 to vector<8x128xf32>
    %506 = arith.cmpf olt, %504, %505 : vector<8x128xf32>
    %cst_107 = arith.constant 1.000000e+00 : f32
    %507 = vector.broadcast %cst_107 : f32 to vector<8x128xf32>
    %508 = arith.select %506, %507, %503 : vector<8x128xi1>, vector<8x128xf32>
    %cst_108 = arith.constant 0.000000e+00 : f32
    %509 = vector.broadcast %cst_108 : f32 to vector<8x128xf32>
    %510 = arith.subf %509, %493 : vector<8x128xf32>
    %511 = tpu.reciprocal %508 {approx = true} : vector<8x128xf32> -> vector<8x128xf32>
    %512 = arith.mulf %510, %511 : vector<8x128xf32>
    %cst_109 = arith.constant 9.99999997E-7 : f32
    %513 = vector.broadcast %cst_109 : f32 to vector<8x128xf32>
    %514 = arith.cmpf ogt, %503, %513 : vector<8x128xf32>
    %515 = arith.maximumf %472, %512 : vector<8x128xf32>
    %516 = arith.select %514, %515, %472 : vector<8x128xi1>, vector<8x128xf32>
    %cst_110 = arith.constant -9.99999997E-7 : f32
    %517 = vector.broadcast %cst_110 : f32 to vector<8x128xf32>
    %518 = arith.cmpf olt, %503, %517 : vector<8x128xf32>
    %519 = arith.minimumf %484, %512 : vector<8x128xf32>
    %520 = arith.select %518, %519, %484 : vector<8x128xi1>, vector<8x128xf32>
    %521 = math.absf %503 : vector<8x128xf32>
    %cst_111 = arith.constant 9.99999997E-7 : f32
    %522 = vector.broadcast %cst_111 : f32 to vector<8x128xf32>
    %523 = arith.cmpf ole, %521, %522 : vector<8x128xf32>
    %cst_112 = arith.constant -9.99999997E-7 : f32
    %524 = vector.broadcast %cst_112 : f32 to vector<8x128xf32>
    %525 = arith.cmpf olt, %493, %524 : vector<8x128xf32>
    %526 = arith.andi %523, %525 : vector<8x128xi1>
    %cst_113 = arith.constant -1.000000e+00 : f32
    %527 = vector.broadcast %cst_113 : f32 to vector<8x128xf32>
    %528 = arith.select %526, %527, %520 : vector<8x128xi1>, vector<8x128xf32>
    %529 = arith.cmpf olt, %516, %528 : vector<8x128xf32>
    %530 = vector.broadcast %347 : vector<8x1xf32> to vector<8x128xf32>
    %531 = arith.mulf %516, %530 : vector<8x128xf32>
    %532 = vector.broadcast %42 : vector<8x1xf32> to vector<8x128xf32>
    %533 = arith.addf %532, %531 : vector<8x128xf32>
    %534 = vector.broadcast %348 : vector<8x1xf32> to vector<8x128xf32>
    %535 = arith.mulf %516, %534 : vector<8x128xf32>
    %536 = vector.broadcast %46 : vector<8x1xf32> to vector<8x128xf32>
    %537 = arith.addf %536, %535 : vector<8x128xf32>
    %538 = vector.broadcast %347 : vector<8x1xf32> to vector<8x128xf32>
    %539 = arith.mulf %528, %538 : vector<8x128xf32>
    %540 = vector.broadcast %42 : vector<8x1xf32> to vector<8x128xf32>
    %541 = arith.addf %540, %539 : vector<8x128xf32>
    %542 = vector.broadcast %348 : vector<8x1xf32> to vector<8x128xf32>
    %543 = arith.mulf %528, %542 : vector<8x128xf32>
    %544 = vector.broadcast %46 : vector<8x1xf32> to vector<8x128xf32>
    %545 = arith.addf %544, %543 : vector<8x128xf32>
    %546 = arith.mulf %533, %545 : vector<8x128xf32>
    %547 = arith.mulf %537, %541 : vector<8x128xf32>
    %548 = arith.subf %546, %547 : vector<8x128xf32>
    %cst_114 = arith.constant 0.000000e+00 : f32
    %549 = vector.broadcast %cst_114 : f32 to vector<8x128xf32>
    %550 = arith.select %529, %548, %549 : vector<8x128xi1>, vector<8x128xf32>
    %551 = arith.addf %346, %550 : vector<8x128xf32>
    %552 = arith.subf %66, %54 : vector<8x1xf32>
    %553 = arith.subf %70, %58 : vector<8x1xf32>
    %554 = vector.broadcast %121 : vector<1x128xf32> to vector<8x128xf32>
    %555 = vector.broadcast %58 : vector<8x1xf32> to vector<8x128xf32>
    %556 = arith.mulf %554, %555 : vector<8x128xf32>
    %557 = vector.broadcast %122 : vector<1x128xf32> to vector<8x128xf32>
    %558 = vector.broadcast %54 : vector<8x1xf32> to vector<8x128xf32>
    %559 = arith.mulf %557, %558 : vector<8x128xf32>
    %560 = arith.subf %556, %559 : vector<8x128xf32>
    %561 = vector.broadcast %125 : vector<1x128xf32> to vector<8x128xf32>
    %562 = arith.subf %560, %561 : vector<8x128xf32>
    %563 = vector.broadcast %121 : vector<1x128xf32> to vector<8x128xf32>
    %564 = vector.broadcast %70 : vector<8x1xf32> to vector<8x128xf32>
    %565 = arith.mulf %563, %564 : vector<8x128xf32>
    %566 = vector.broadcast %122 : vector<1x128xf32> to vector<8x128xf32>
    %567 = vector.broadcast %66 : vector<8x1xf32> to vector<8x128xf32>
    %568 = arith.mulf %566, %567 : vector<8x128xf32>
    %569 = arith.subf %565, %568 : vector<8x128xf32>
    %570 = vector.broadcast %125 : vector<1x128xf32> to vector<8x128xf32>
    %571 = arith.subf %569, %570 : vector<8x128xf32>
    %572 = arith.subf %571, %562 : vector<8x128xf32>
    %573 = math.absf %572 : vector<8x128xf32>
    %cst_115 = arith.constant 9.99999997E-7 : f32
    %574 = vector.broadcast %cst_115 : f32 to vector<8x128xf32>
    %575 = arith.cmpf olt, %573, %574 : vector<8x128xf32>
    %cst_116 = arith.constant 1.000000e+00 : f32
    %576 = vector.broadcast %cst_116 : f32 to vector<8x128xf32>
    %577 = arith.select %575, %576, %572 : vector<8x128xi1>, vector<8x128xf32>
    %cst_117 = arith.constant 0.000000e+00 : f32
    %578 = vector.broadcast %cst_117 : f32 to vector<8x128xf32>
    %579 = arith.subf %578, %562 : vector<8x128xf32>
    %580 = tpu.reciprocal %577 {approx = true} : vector<8x128xf32> -> vector<8x128xf32>
    %581 = arith.mulf %579, %580 : vector<8x128xf32>
    %cst_118 = arith.constant 9.99999997E-7 : f32
    %582 = vector.broadcast %cst_118 : f32 to vector<8x128xf32>
    %583 = arith.cmpf ogt, %572, %582 : vector<8x128xf32>
    %cst_119 = arith.constant 0.000000e+00 : f32
    %584 = vector.broadcast %cst_119 : f32 to vector<8x128xf32>
    %585 = arith.maximumf %584, %581 : vector<8x128xf32>
    %cst_120 = arith.constant 0.000000e+00 : f32
    %586 = vector.broadcast %cst_120 : f32 to vector<8x128xf32>
    %587 = arith.select %583, %585, %586 : vector<8x128xi1>, vector<8x128xf32>
    %cst_121 = arith.constant -9.99999997E-7 : f32
    %588 = vector.broadcast %cst_121 : f32 to vector<8x128xf32>
    %589 = arith.cmpf olt, %572, %588 : vector<8x128xf32>
    %cst_122 = arith.constant 1.000000e+00 : f32
    %590 = vector.broadcast %cst_122 : f32 to vector<8x128xf32>
    %591 = arith.minimumf %590, %581 : vector<8x128xf32>
    %cst_123 = arith.constant 1.000000e+00 : f32
    %592 = vector.broadcast %cst_123 : f32 to vector<8x128xf32>
    %593 = arith.select %589, %591, %592 : vector<8x128xi1>, vector<8x128xf32>
    %594 = math.absf %572 : vector<8x128xf32>
    %cst_124 = arith.constant 9.99999997E-7 : f32
    %595 = vector.broadcast %cst_124 : f32 to vector<8x128xf32>
    %596 = arith.cmpf ole, %594, %595 : vector<8x128xf32>
    %cst_125 = arith.constant -9.99999997E-7 : f32
    %597 = vector.broadcast %cst_125 : f32 to vector<8x128xf32>
    %598 = arith.cmpf olt, %562, %597 : vector<8x128xf32>
    %599 = arith.andi %596, %598 : vector<8x128xi1>
    %cst_126 = arith.constant -1.000000e+00 : f32
    %600 = vector.broadcast %cst_126 : f32 to vector<8x128xf32>
    %601 = arith.select %599, %600, %593 : vector<8x128xi1>, vector<8x128xf32>
    %602 = vector.broadcast %126 : vector<1x128xf32> to vector<8x128xf32>
    %603 = vector.broadcast %58 : vector<8x1xf32> to vector<8x128xf32>
    %604 = arith.mulf %602, %603 : vector<8x128xf32>
    %605 = vector.broadcast %127 : vector<1x128xf32> to vector<8x128xf32>
    %606 = vector.broadcast %54 : vector<8x1xf32> to vector<8x128xf32>
    %607 = arith.mulf %605, %606 : vector<8x128xf32>
    %608 = arith.subf %604, %607 : vector<8x128xf32>
    %609 = vector.broadcast %130 : vector<1x128xf32> to vector<8x128xf32>
    %610 = arith.subf %608, %609 : vector<8x128xf32>
    %611 = vector.broadcast %126 : vector<1x128xf32> to vector<8x128xf32>
    %612 = vector.broadcast %70 : vector<8x1xf32> to vector<8x128xf32>
    %613 = arith.mulf %611, %612 : vector<8x128xf32>
    %614 = vector.broadcast %127 : vector<1x128xf32> to vector<8x128xf32>
    %615 = vector.broadcast %66 : vector<8x1xf32> to vector<8x128xf32>
    %616 = arith.mulf %614, %615 : vector<8x128xf32>
    %617 = arith.subf %613, %616 : vector<8x128xf32>
    %618 = vector.broadcast %130 : vector<1x128xf32> to vector<8x128xf32>
    %619 = arith.subf %617, %618 : vector<8x128xf32>
    %620 = arith.subf %619, %610 : vector<8x128xf32>
    %621 = math.absf %620 : vector<8x128xf32>
    %cst_127 = arith.constant 9.99999997E-7 : f32
    %622 = vector.broadcast %cst_127 : f32 to vector<8x128xf32>
    %623 = arith.cmpf olt, %621, %622 : vector<8x128xf32>
    %cst_128 = arith.constant 1.000000e+00 : f32
    %624 = vector.broadcast %cst_128 : f32 to vector<8x128xf32>
    %625 = arith.select %623, %624, %620 : vector<8x128xi1>, vector<8x128xf32>
    %cst_129 = arith.constant 0.000000e+00 : f32
    %626 = vector.broadcast %cst_129 : f32 to vector<8x128xf32>
    %627 = arith.subf %626, %610 : vector<8x128xf32>
    %628 = tpu.reciprocal %625 {approx = true} : vector<8x128xf32> -> vector<8x128xf32>
    %629 = arith.mulf %627, %628 : vector<8x128xf32>
    %cst_130 = arith.constant 9.99999997E-7 : f32
    %630 = vector.broadcast %cst_130 : f32 to vector<8x128xf32>
    %631 = arith.cmpf ogt, %620, %630 : vector<8x128xf32>
    %632 = arith.maximumf %587, %629 : vector<8x128xf32>
    %633 = arith.select %631, %632, %587 : vector<8x128xi1>, vector<8x128xf32>
    %cst_131 = arith.constant -9.99999997E-7 : f32
    %634 = vector.broadcast %cst_131 : f32 to vector<8x128xf32>
    %635 = arith.cmpf olt, %620, %634 : vector<8x128xf32>
    %636 = arith.minimumf %601, %629 : vector<8x128xf32>
    %637 = arith.select %635, %636, %601 : vector<8x128xi1>, vector<8x128xf32>
    %638 = math.absf %620 : vector<8x128xf32>
    %cst_132 = arith.constant 9.99999997E-7 : f32
    %639 = vector.broadcast %cst_132 : f32 to vector<8x128xf32>
    %640 = arith.cmpf ole, %638, %639 : vector<8x128xf32>
    %cst_133 = arith.constant -9.99999997E-7 : f32
    %641 = vector.broadcast %cst_133 : f32 to vector<8x128xf32>
    %642 = arith.cmpf olt, %610, %641 : vector<8x128xf32>
    %643 = arith.andi %640, %642 : vector<8x128xi1>
    %cst_134 = arith.constant -1.000000e+00 : f32
    %644 = vector.broadcast %cst_134 : f32 to vector<8x128xf32>
    %645 = arith.select %643, %644, %637 : vector<8x128xi1>, vector<8x128xf32>
    %646 = vector.broadcast %131 : vector<1x128xf32> to vector<8x128xf32>
    %647 = vector.broadcast %58 : vector<8x1xf32> to vector<8x128xf32>
    %648 = arith.mulf %646, %647 : vector<8x128xf32>
    %649 = vector.broadcast %132 : vector<1x128xf32> to vector<8x128xf32>
    %650 = vector.broadcast %54 : vector<8x1xf32> to vector<8x128xf32>
    %651 = arith.mulf %649, %650 : vector<8x128xf32>
    %652 = arith.subf %648, %651 : vector<8x128xf32>
    %653 = vector.broadcast %135 : vector<1x128xf32> to vector<8x128xf32>
    %654 = arith.subf %652, %653 : vector<8x128xf32>
    %655 = vector.broadcast %131 : vector<1x128xf32> to vector<8x128xf32>
    %656 = vector.broadcast %70 : vector<8x1xf32> to vector<8x128xf32>
    %657 = arith.mulf %655, %656 : vector<8x128xf32>
    %658 = vector.broadcast %132 : vector<1x128xf32> to vector<8x128xf32>
    %659 = vector.broadcast %66 : vector<8x1xf32> to vector<8x128xf32>
    %660 = arith.mulf %658, %659 : vector<8x128xf32>
    %661 = arith.subf %657, %660 : vector<8x128xf32>
    %662 = vector.broadcast %135 : vector<1x128xf32> to vector<8x128xf32>
    %663 = arith.subf %661, %662 : vector<8x128xf32>
    %664 = arith.subf %663, %654 : vector<8x128xf32>
    %665 = math.absf %664 : vector<8x128xf32>
    %cst_135 = arith.constant 9.99999997E-7 : f32
    %666 = vector.broadcast %cst_135 : f32 to vector<8x128xf32>
    %667 = arith.cmpf olt, %665, %666 : vector<8x128xf32>
    %cst_136 = arith.constant 1.000000e+00 : f32
    %668 = vector.broadcast %cst_136 : f32 to vector<8x128xf32>
    %669 = arith.select %667, %668, %664 : vector<8x128xi1>, vector<8x128xf32>
    %cst_137 = arith.constant 0.000000e+00 : f32
    %670 = vector.broadcast %cst_137 : f32 to vector<8x128xf32>
    %671 = arith.subf %670, %654 : vector<8x128xf32>
    %672 = tpu.reciprocal %669 {approx = true} : vector<8x128xf32> -> vector<8x128xf32>
    %673 = arith.mulf %671, %672 : vector<8x128xf32>
    %cst_138 = arith.constant 9.99999997E-7 : f32
    %674 = vector.broadcast %cst_138 : f32 to vector<8x128xf32>
    %675 = arith.cmpf ogt, %664, %674 : vector<8x128xf32>
    %676 = arith.maximumf %633, %673 : vector<8x128xf32>
    %677 = arith.select %675, %676, %633 : vector<8x128xi1>, vector<8x128xf32>
    %cst_139 = arith.constant -9.99999997E-7 : f32
    %678 = vector.broadcast %cst_139 : f32 to vector<8x128xf32>
    %679 = arith.cmpf olt, %664, %678 : vector<8x128xf32>
    %680 = arith.minimumf %645, %673 : vector<8x128xf32>
    %681 = arith.select %679, %680, %645 : vector<8x128xi1>, vector<8x128xf32>
    %682 = math.absf %664 : vector<8x128xf32>
    %cst_140 = arith.constant 9.99999997E-7 : f32
    %683 = vector.broadcast %cst_140 : f32 to vector<8x128xf32>
    %684 = arith.cmpf ole, %682, %683 : vector<8x128xf32>
    %cst_141 = arith.constant -9.99999997E-7 : f32
    %685 = vector.broadcast %cst_141 : f32 to vector<8x128xf32>
    %686 = arith.cmpf olt, %654, %685 : vector<8x128xf32>
    %687 = arith.andi %684, %686 : vector<8x128xi1>
    %cst_142 = arith.constant -1.000000e+00 : f32
    %688 = vector.broadcast %cst_142 : f32 to vector<8x128xf32>
    %689 = arith.select %687, %688, %681 : vector<8x128xi1>, vector<8x128xf32>
    %690 = vector.broadcast %136 : vector<1x128xf32> to vector<8x128xf32>
    %691 = vector.broadcast %58 : vector<8x1xf32> to vector<8x128xf32>
    %692 = arith.mulf %690, %691 : vector<8x128xf32>
    %693 = vector.broadcast %137 : vector<1x128xf32> to vector<8x128xf32>
    %694 = vector.broadcast %54 : vector<8x1xf32> to vector<8x128xf32>
    %695 = arith.mulf %693, %694 : vector<8x128xf32>
    %696 = arith.subf %692, %695 : vector<8x128xf32>
    %697 = vector.broadcast %140 : vector<1x128xf32> to vector<8x128xf32>
    %698 = arith.subf %696, %697 : vector<8x128xf32>
    %699 = vector.broadcast %136 : vector<1x128xf32> to vector<8x128xf32>
    %700 = vector.broadcast %70 : vector<8x1xf32> to vector<8x128xf32>
    %701 = arith.mulf %699, %700 : vector<8x128xf32>
    %702 = vector.broadcast %137 : vector<1x128xf32> to vector<8x128xf32>
    %703 = vector.broadcast %66 : vector<8x1xf32> to vector<8x128xf32>
    %704 = arith.mulf %702, %703 : vector<8x128xf32>
    %705 = arith.subf %701, %704 : vector<8x128xf32>
    %706 = vector.broadcast %140 : vector<1x128xf32> to vector<8x128xf32>
    %707 = arith.subf %705, %706 : vector<8x128xf32>
    %708 = arith.subf %707, %698 : vector<8x128xf32>
    %709 = math.absf %708 : vector<8x128xf32>
    %cst_143 = arith.constant 9.99999997E-7 : f32
    %710 = vector.broadcast %cst_143 : f32 to vector<8x128xf32>
    %711 = arith.cmpf olt, %709, %710 : vector<8x128xf32>
    %cst_144 = arith.constant 1.000000e+00 : f32
    %712 = vector.broadcast %cst_144 : f32 to vector<8x128xf32>
    %713 = arith.select %711, %712, %708 : vector<8x128xi1>, vector<8x128xf32>
    %cst_145 = arith.constant 0.000000e+00 : f32
    %714 = vector.broadcast %cst_145 : f32 to vector<8x128xf32>
    %715 = arith.subf %714, %698 : vector<8x128xf32>
    %716 = tpu.reciprocal %713 {approx = true} : vector<8x128xf32> -> vector<8x128xf32>
    %717 = arith.mulf %715, %716 : vector<8x128xf32>
    %cst_146 = arith.constant 9.99999997E-7 : f32
    %718 = vector.broadcast %cst_146 : f32 to vector<8x128xf32>
    %719 = arith.cmpf ogt, %708, %718 : vector<8x128xf32>
    %720 = arith.maximumf %677, %717 : vector<8x128xf32>
    %721 = arith.select %719, %720, %677 : vector<8x128xi1>, vector<8x128xf32>
    %cst_147 = arith.constant -9.99999997E-7 : f32
    %722 = vector.broadcast %cst_147 : f32 to vector<8x128xf32>
    %723 = arith.cmpf olt, %708, %722 : vector<8x128xf32>
    %724 = arith.minimumf %689, %717 : vector<8x128xf32>
    %725 = arith.select %723, %724, %689 : vector<8x128xi1>, vector<8x128xf32>
    %726 = math.absf %708 : vector<8x128xf32>
    %cst_148 = arith.constant 9.99999997E-7 : f32
    %727 = vector.broadcast %cst_148 : f32 to vector<8x128xf32>
    %728 = arith.cmpf ole, %726, %727 : vector<8x128xf32>
    %cst_149 = arith.constant -9.99999997E-7 : f32
    %729 = vector.broadcast %cst_149 : f32 to vector<8x128xf32>
    %730 = arith.cmpf olt, %698, %729 : vector<8x128xf32>
    %731 = arith.andi %728, %730 : vector<8x128xi1>
    %cst_150 = arith.constant -1.000000e+00 : f32
    %732 = vector.broadcast %cst_150 : f32 to vector<8x128xf32>
    %733 = arith.select %731, %732, %725 : vector<8x128xi1>, vector<8x128xf32>
    %734 = arith.cmpf olt, %721, %733 : vector<8x128xf32>
    %735 = vector.broadcast %552 : vector<8x1xf32> to vector<8x128xf32>
    %736 = arith.mulf %721, %735 : vector<8x128xf32>
    %737 = vector.broadcast %54 : vector<8x1xf32> to vector<8x128xf32>
    %738 = arith.addf %737, %736 : vector<8x128xf32>
    %739 = vector.broadcast %553 : vector<8x1xf32> to vector<8x128xf32>
    %740 = arith.mulf %721, %739 : vector<8x128xf32>
    %741 = vector.broadcast %58 : vector<8x1xf32> to vector<8x128xf32>
    %742 = arith.addf %741, %740 : vector<8x128xf32>
    %743 = vector.broadcast %552 : vector<8x1xf32> to vector<8x128xf32>
    %744 = arith.mulf %733, %743 : vector<8x128xf32>
    %745 = vector.broadcast %54 : vector<8x1xf32> to vector<8x128xf32>
    %746 = arith.addf %745, %744 : vector<8x128xf32>
    %747 = vector.broadcast %553 : vector<8x1xf32> to vector<8x128xf32>
    %748 = arith.mulf %733, %747 : vector<8x128xf32>
    %749 = vector.broadcast %58 : vector<8x1xf32> to vector<8x128xf32>
    %750 = arith.addf %749, %748 : vector<8x128xf32>
    %751 = arith.mulf %738, %750 : vector<8x128xf32>
    %752 = arith.mulf %742, %746 : vector<8x128xf32>
    %753 = arith.subf %751, %752 : vector<8x128xf32>
    %cst_151 = arith.constant 0.000000e+00 : f32
    %754 = vector.broadcast %cst_151 : f32 to vector<8x128xf32>
    %755 = arith.select %734, %753, %754 : vector<8x128xi1>, vector<8x128xf32>
    %756 = arith.addf %551, %755 : vector<8x128xf32>
    %757 = arith.subf %30, %66 : vector<8x1xf32>
    %758 = arith.subf %34, %70 : vector<8x1xf32>
    %759 = vector.broadcast %121 : vector<1x128xf32> to vector<8x128xf32>
    %760 = vector.broadcast %70 : vector<8x1xf32> to vector<8x128xf32>
    %761 = arith.mulf %759, %760 : vector<8x128xf32>
    %762 = vector.broadcast %122 : vector<1x128xf32> to vector<8x128xf32>
    %763 = vector.broadcast %66 : vector<8x1xf32> to vector<8x128xf32>
    %764 = arith.mulf %762, %763 : vector<8x128xf32>
    %765 = arith.subf %761, %764 : vector<8x128xf32>
    %766 = vector.broadcast %125 : vector<1x128xf32> to vector<8x128xf32>
    %767 = arith.subf %765, %766 : vector<8x128xf32>
    %768 = vector.broadcast %121 : vector<1x128xf32> to vector<8x128xf32>
    %769 = vector.broadcast %34 : vector<8x1xf32> to vector<8x128xf32>
    %770 = arith.mulf %768, %769 : vector<8x128xf32>
    %771 = vector.broadcast %122 : vector<1x128xf32> to vector<8x128xf32>
    %772 = vector.broadcast %30 : vector<8x1xf32> to vector<8x128xf32>
    %773 = arith.mulf %771, %772 : vector<8x128xf32>
    %774 = arith.subf %770, %773 : vector<8x128xf32>
    %775 = vector.broadcast %125 : vector<1x128xf32> to vector<8x128xf32>
    %776 = arith.subf %774, %775 : vector<8x128xf32>
    %777 = arith.subf %776, %767 : vector<8x128xf32>
    %778 = math.absf %777 : vector<8x128xf32>
    %cst_152 = arith.constant 9.99999997E-7 : f32
    %779 = vector.broadcast %cst_152 : f32 to vector<8x128xf32>
    %780 = arith.cmpf olt, %778, %779 : vector<8x128xf32>
    %cst_153 = arith.constant 1.000000e+00 : f32
    %781 = vector.broadcast %cst_153 : f32 to vector<8x128xf32>
    %782 = arith.select %780, %781, %777 : vector<8x128xi1>, vector<8x128xf32>
    %cst_154 = arith.constant 0.000000e+00 : f32
    %783 = vector.broadcast %cst_154 : f32 to vector<8x128xf32>
    %784 = arith.subf %783, %767 : vector<8x128xf32>
    %785 = tpu.reciprocal %782 {approx = true} : vector<8x128xf32> -> vector<8x128xf32>
    %786 = arith.mulf %784, %785 : vector<8x128xf32>
    %cst_155 = arith.constant 9.99999997E-7 : f32
    %787 = vector.broadcast %cst_155 : f32 to vector<8x128xf32>
    %788 = arith.cmpf ogt, %777, %787 : vector<8x128xf32>
    %cst_156 = arith.constant 0.000000e+00 : f32
    %789 = vector.broadcast %cst_156 : f32 to vector<8x128xf32>
    %790 = arith.maximumf %789, %786 : vector<8x128xf32>
    %cst_157 = arith.constant 0.000000e+00 : f32
    %791 = vector.broadcast %cst_157 : f32 to vector<8x128xf32>
    %792 = arith.select %788, %790, %791 : vector<8x128xi1>, vector<8x128xf32>
    %cst_158 = arith.constant -9.99999997E-7 : f32
    %793 = vector.broadcast %cst_158 : f32 to vector<8x128xf32>
    %794 = arith.cmpf olt, %777, %793 : vector<8x128xf32>
    %cst_159 = arith.constant 1.000000e+00 : f32
    %795 = vector.broadcast %cst_159 : f32 to vector<8x128xf32>
    %796 = arith.minimumf %795, %786 : vector<8x128xf32>
    %cst_160 = arith.constant 1.000000e+00 : f32
    %797 = vector.broadcast %cst_160 : f32 to vector<8x128xf32>
    %798 = arith.select %794, %796, %797 : vector<8x128xi1>, vector<8x128xf32>
    %799 = math.absf %777 : vector<8x128xf32>
    %cst_161 = arith.constant 9.99999997E-7 : f32
    %800 = vector.broadcast %cst_161 : f32 to vector<8x128xf32>
    %801 = arith.cmpf ole, %799, %800 : vector<8x128xf32>
    %cst_162 = arith.constant -9.99999997E-7 : f32
    %802 = vector.broadcast %cst_162 : f32 to vector<8x128xf32>
    %803 = arith.cmpf olt, %767, %802 : vector<8x128xf32>
    %804 = arith.andi %801, %803 : vector<8x128xi1>
    %cst_163 = arith.constant -1.000000e+00 : f32
    %805 = vector.broadcast %cst_163 : f32 to vector<8x128xf32>
    %806 = arith.select %804, %805, %798 : vector<8x128xi1>, vector<8x128xf32>
    %807 = vector.broadcast %126 : vector<1x128xf32> to vector<8x128xf32>
    %808 = vector.broadcast %70 : vector<8x1xf32> to vector<8x128xf32>
    %809 = arith.mulf %807, %808 : vector<8x128xf32>
    %810 = vector.broadcast %127 : vector<1x128xf32> to vector<8x128xf32>
    %811 = vector.broadcast %66 : vector<8x1xf32> to vector<8x128xf32>
    %812 = arith.mulf %810, %811 : vector<8x128xf32>
    %813 = arith.subf %809, %812 : vector<8x128xf32>
    %814 = vector.broadcast %130 : vector<1x128xf32> to vector<8x128xf32>
    %815 = arith.subf %813, %814 : vector<8x128xf32>
    %816 = vector.broadcast %126 : vector<1x128xf32> to vector<8x128xf32>
    %817 = vector.broadcast %34 : vector<8x1xf32> to vector<8x128xf32>
    %818 = arith.mulf %816, %817 : vector<8x128xf32>
    %819 = vector.broadcast %127 : vector<1x128xf32> to vector<8x128xf32>
    %820 = vector.broadcast %30 : vector<8x1xf32> to vector<8x128xf32>
    %821 = arith.mulf %819, %820 : vector<8x128xf32>
    %822 = arith.subf %818, %821 : vector<8x128xf32>
    %823 = vector.broadcast %130 : vector<1x128xf32> to vector<8x128xf32>
    %824 = arith.subf %822, %823 : vector<8x128xf32>
    %825 = arith.subf %824, %815 : vector<8x128xf32>
    %826 = math.absf %825 : vector<8x128xf32>
    %cst_164 = arith.constant 9.99999997E-7 : f32
    %827 = vector.broadcast %cst_164 : f32 to vector<8x128xf32>
    %828 = arith.cmpf olt, %826, %827 : vector<8x128xf32>
    %cst_165 = arith.constant 1.000000e+00 : f32
    %829 = vector.broadcast %cst_165 : f32 to vector<8x128xf32>
    %830 = arith.select %828, %829, %825 : vector<8x128xi1>, vector<8x128xf32>
    %cst_166 = arith.constant 0.000000e+00 : f32
    %831 = vector.broadcast %cst_166 : f32 to vector<8x128xf32>
    %832 = arith.subf %831, %815 : vector<8x128xf32>
    %833 = tpu.reciprocal %830 {approx = true} : vector<8x128xf32> -> vector<8x128xf32>
    %834 = arith.mulf %832, %833 : vector<8x128xf32>
    %cst_167 = arith.constant 9.99999997E-7 : f32
    %835 = vector.broadcast %cst_167 : f32 to vector<8x128xf32>
    %836 = arith.cmpf ogt, %825, %835 : vector<8x128xf32>
    %837 = arith.maximumf %792, %834 : vector<8x128xf32>
    %838 = arith.select %836, %837, %792 : vector<8x128xi1>, vector<8x128xf32>
    %cst_168 = arith.constant -9.99999997E-7 : f32
    %839 = vector.broadcast %cst_168 : f32 to vector<8x128xf32>
    %840 = arith.cmpf olt, %825, %839 : vector<8x128xf32>
    %841 = arith.minimumf %806, %834 : vector<8x128xf32>
    %842 = arith.select %840, %841, %806 : vector<8x128xi1>, vector<8x128xf32>
    %843 = math.absf %825 : vector<8x128xf32>
    %cst_169 = arith.constant 9.99999997E-7 : f32
    %844 = vector.broadcast %cst_169 : f32 to vector<8x128xf32>
    %845 = arith.cmpf ole, %843, %844 : vector<8x128xf32>
    %cst_170 = arith.constant -9.99999997E-7 : f32
    %846 = vector.broadcast %cst_170 : f32 to vector<8x128xf32>
    %847 = arith.cmpf olt, %815, %846 : vector<8x128xf32>
    %848 = arith.andi %845, %847 : vector<8x128xi1>
    %cst_171 = arith.constant -1.000000e+00 : f32
    %849 = vector.broadcast %cst_171 : f32 to vector<8x128xf32>
    %850 = arith.select %848, %849, %842 : vector<8x128xi1>, vector<8x128xf32>
    %851 = vector.broadcast %131 : vector<1x128xf32> to vector<8x128xf32>
    %852 = vector.broadcast %70 : vector<8x1xf32> to vector<8x128xf32>
    %853 = arith.mulf %851, %852 : vector<8x128xf32>
    %854 = vector.broadcast %132 : vector<1x128xf32> to vector<8x128xf32>
    %855 = vector.broadcast %66 : vector<8x1xf32> to vector<8x128xf32>
    %856 = arith.mulf %854, %855 : vector<8x128xf32>
    %857 = arith.subf %853, %856 : vector<8x128xf32>
    %858 = vector.broadcast %135 : vector<1x128xf32> to vector<8x128xf32>
    %859 = arith.subf %857, %858 : vector<8x128xf32>
    %860 = vector.broadcast %131 : vector<1x128xf32> to vector<8x128xf32>
    %861 = vector.broadcast %34 : vector<8x1xf32> to vector<8x128xf32>
    %862 = arith.mulf %860, %861 : vector<8x128xf32>
    %863 = vector.broadcast %132 : vector<1x128xf32> to vector<8x128xf32>
    %864 = vector.broadcast %30 : vector<8x1xf32> to vector<8x128xf32>
    %865 = arith.mulf %863, %864 : vector<8x128xf32>
    %866 = arith.subf %862, %865 : vector<8x128xf32>
    %867 = vector.broadcast %135 : vector<1x128xf32> to vector<8x128xf32>
    %868 = arith.subf %866, %867 : vector<8x128xf32>
    %869 = arith.subf %868, %859 : vector<8x128xf32>
    %870 = math.absf %869 : vector<8x128xf32>
    %cst_172 = arith.constant 9.99999997E-7 : f32
    %871 = vector.broadcast %cst_172 : f32 to vector<8x128xf32>
    %872 = arith.cmpf olt, %870, %871 : vector<8x128xf32>
    %cst_173 = arith.constant 1.000000e+00 : f32
    %873 = vector.broadcast %cst_173 : f32 to vector<8x128xf32>
    %874 = arith.select %872, %873, %869 : vector<8x128xi1>, vector<8x128xf32>
    %cst_174 = arith.constant 0.000000e+00 : f32
    %875 = vector.broadcast %cst_174 : f32 to vector<8x128xf32>
    %876 = arith.subf %875, %859 : vector<8x128xf32>
    %877 = tpu.reciprocal %874 {approx = true} : vector<8x128xf32> -> vector<8x128xf32>
    %878 = arith.mulf %876, %877 : vector<8x128xf32>
    %cst_175 = arith.constant 9.99999997E-7 : f32
    %879 = vector.broadcast %cst_175 : f32 to vector<8x128xf32>
    %880 = arith.cmpf ogt, %869, %879 : vector<8x128xf32>
    %881 = arith.maximumf %838, %878 : vector<8x128xf32>
    %882 = arith.select %880, %881, %838 : vector<8x128xi1>, vector<8x128xf32>
    %cst_176 = arith.constant -9.99999997E-7 : f32
    %883 = vector.broadcast %cst_176 : f32 to vector<8x128xf32>
    %884 = arith.cmpf olt, %869, %883 : vector<8x128xf32>
    %885 = arith.minimumf %850, %878 : vector<8x128xf32>
    %886 = arith.select %884, %885, %850 : vector<8x128xi1>, vector<8x128xf32>
    %887 = math.absf %869 : vector<8x128xf32>
    %cst_177 = arith.constant 9.99999997E-7 : f32
    %888 = vector.broadcast %cst_177 : f32 to vector<8x128xf32>
    %889 = arith.cmpf ole, %887, %888 : vector<8x128xf32>
    %cst_178 = arith.constant -9.99999997E-7 : f32
    %890 = vector.broadcast %cst_178 : f32 to vector<8x128xf32>
    %891 = arith.cmpf olt, %859, %890 : vector<8x128xf32>
    %892 = arith.andi %889, %891 : vector<8x128xi1>
    %cst_179 = arith.constant -1.000000e+00 : f32
    %893 = vector.broadcast %cst_179 : f32 to vector<8x128xf32>
    %894 = arith.select %892, %893, %886 : vector<8x128xi1>, vector<8x128xf32>
    %895 = vector.broadcast %136 : vector<1x128xf32> to vector<8x128xf32>
    %896 = vector.broadcast %70 : vector<8x1xf32> to vector<8x128xf32>
    %897 = arith.mulf %895, %896 : vector<8x128xf32>
    %898 = vector.broadcast %137 : vector<1x128xf32> to vector<8x128xf32>
    %899 = vector.broadcast %66 : vector<8x1xf32> to vector<8x128xf32>
    %900 = arith.mulf %898, %899 : vector<8x128xf32>
    %901 = arith.subf %897, %900 : vector<8x128xf32>
    %902 = vector.broadcast %140 : vector<1x128xf32> to vector<8x128xf32>
    %903 = arith.subf %901, %902 : vector<8x128xf32>
    %904 = vector.broadcast %136 : vector<1x128xf32> to vector<8x128xf32>
    %905 = vector.broadcast %34 : vector<8x1xf32> to vector<8x128xf32>
    %906 = arith.mulf %904, %905 : vector<8x128xf32>
    %907 = vector.broadcast %137 : vector<1x128xf32> to vector<8x128xf32>
    %908 = vector.broadcast %30 : vector<8x1xf32> to vector<8x128xf32>
    %909 = arith.mulf %907, %908 : vector<8x128xf32>
    %910 = arith.subf %906, %909 : vector<8x128xf32>
    %911 = vector.broadcast %140 : vector<1x128xf32> to vector<8x128xf32>
    %912 = arith.subf %910, %911 : vector<8x128xf32>
    %913 = arith.subf %912, %903 : vector<8x128xf32>
    %914 = math.absf %913 : vector<8x128xf32>
    %cst_180 = arith.constant 9.99999997E-7 : f32
    %915 = vector.broadcast %cst_180 : f32 to vector<8x128xf32>
    %916 = arith.cmpf olt, %914, %915 : vector<8x128xf32>
    %cst_181 = arith.constant 1.000000e+00 : f32
    %917 = vector.broadcast %cst_181 : f32 to vector<8x128xf32>
    %918 = arith.select %916, %917, %913 : vector<8x128xi1>, vector<8x128xf32>
    %cst_182 = arith.constant 0.000000e+00 : f32
    %919 = vector.broadcast %cst_182 : f32 to vector<8x128xf32>
    %920 = arith.subf %919, %903 : vector<8x128xf32>
    %921 = tpu.reciprocal %918 {approx = true} : vector<8x128xf32> -> vector<8x128xf32>
    %922 = arith.mulf %920, %921 : vector<8x128xf32>
    %cst_183 = arith.constant 9.99999997E-7 : f32
    %923 = vector.broadcast %cst_183 : f32 to vector<8x128xf32>
    %924 = arith.cmpf ogt, %913, %923 : vector<8x128xf32>
    %925 = arith.maximumf %882, %922 : vector<8x128xf32>
    %926 = arith.select %924, %925, %882 : vector<8x128xi1>, vector<8x128xf32>
    %cst_184 = arith.constant -9.99999997E-7 : f32
    %927 = vector.broadcast %cst_184 : f32 to vector<8x128xf32>
    %928 = arith.cmpf olt, %913, %927 : vector<8x128xf32>
    %929 = arith.minimumf %894, %922 : vector<8x128xf32>
    %930 = arith.select %928, %929, %894 : vector<8x128xi1>, vector<8x128xf32>
    %931 = math.absf %913 : vector<8x128xf32>
    %cst_185 = arith.constant 9.99999997E-7 : f32
    %932 = vector.broadcast %cst_185 : f32 to vector<8x128xf32>
    %933 = arith.cmpf ole, %931, %932 : vector<8x128xf32>
    %cst_186 = arith.constant -9.99999997E-7 : f32
    %934 = vector.broadcast %cst_186 : f32 to vector<8x128xf32>
    %935 = arith.cmpf olt, %903, %934 : vector<8x128xf32>
    %936 = arith.andi %933, %935 : vector<8x128xi1>
    %cst_187 = arith.constant -1.000000e+00 : f32
    %937 = vector.broadcast %cst_187 : f32 to vector<8x128xf32>
    %938 = arith.select %936, %937, %930 : vector<8x128xi1>, vector<8x128xf32>
    %939 = arith.cmpf olt, %926, %938 : vector<8x128xf32>
    %940 = vector.broadcast %757 : vector<8x1xf32> to vector<8x128xf32>
    %941 = arith.mulf %926, %940 : vector<8x128xf32>
    %942 = vector.broadcast %66 : vector<8x1xf32> to vector<8x128xf32>
    %943 = arith.addf %942, %941 : vector<8x128xf32>
    %944 = vector.broadcast %758 : vector<8x1xf32> to vector<8x128xf32>
    %945 = arith.mulf %926, %944 : vector<8x128xf32>
    %946 = vector.broadcast %70 : vector<8x1xf32> to vector<8x128xf32>
    %947 = arith.addf %946, %945 : vector<8x128xf32>
    %948 = vector.broadcast %757 : vector<8x1xf32> to vector<8x128xf32>
    %949 = arith.mulf %938, %948 : vector<8x128xf32>
    %950 = vector.broadcast %66 : vector<8x1xf32> to vector<8x128xf32>
    %951 = arith.addf %950, %949 : vector<8x128xf32>
    %952 = vector.broadcast %758 : vector<8x1xf32> to vector<8x128xf32>
    %953 = arith.mulf %938, %952 : vector<8x128xf32>
    %954 = vector.broadcast %70 : vector<8x1xf32> to vector<8x128xf32>
    %955 = arith.addf %954, %953 : vector<8x128xf32>
    %956 = arith.mulf %943, %955 : vector<8x128xf32>
    %957 = arith.mulf %947, %951 : vector<8x128xf32>
    %958 = arith.subf %956, %957 : vector<8x128xf32>
    %cst_188 = arith.constant 0.000000e+00 : f32
    %959 = vector.broadcast %cst_188 : f32 to vector<8x128xf32>
    %960 = arith.select %939, %958, %959 : vector<8x128xi1>, vector<8x128xf32>
    %961 = arith.addf %756, %960 : vector<8x128xf32>
    %962 = arith.subf %42, %30 : vector<8x1xf32>
    %963 = arith.subf %46, %34 : vector<8x1xf32>
    %964 = arith.mulf %962, %34 : vector<8x1xf32>
    %965 = arith.mulf %963, %30 : vector<8x1xf32>
    %966 = arith.subf %964, %965 : vector<8x1xf32>
    %967 = arith.subf %54, %42 : vector<8x1xf32>
    %968 = arith.subf %58, %46 : vector<8x1xf32>
    %969 = arith.mulf %967, %46 : vector<8x1xf32>
    %970 = arith.mulf %968, %42 : vector<8x1xf32>
    %971 = arith.subf %969, %970 : vector<8x1xf32>
    %972 = arith.subf %66, %54 : vector<8x1xf32>
    %973 = arith.subf %70, %58 : vector<8x1xf32>
    %974 = arith.mulf %972, %58 : vector<8x1xf32>
    %975 = arith.mulf %973, %54 : vector<8x1xf32>
    %976 = arith.subf %974, %975 : vector<8x1xf32>
    %977 = arith.subf %30, %66 : vector<8x1xf32>
    %978 = arith.subf %34, %70 : vector<8x1xf32>
    %979 = arith.mulf %977, %70 : vector<8x1xf32>
    %980 = arith.mulf %978, %66 : vector<8x1xf32>
    %981 = arith.subf %979, %980 : vector<8x1xf32>
    %982 = arith.subf %92, %80 : vector<1x128xf32>
    %983 = arith.subf %96, %84 : vector<1x128xf32>
    %984 = vector.broadcast %962 : vector<8x1xf32> to vector<8x128xf32>
    %985 = vector.broadcast %84 : vector<1x128xf32> to vector<8x128xf32>
    %986 = arith.mulf %984, %985 : vector<8x128xf32>
    %987 = vector.broadcast %963 : vector<8x1xf32> to vector<8x128xf32>
    %988 = vector.broadcast %80 : vector<1x128xf32> to vector<8x128xf32>
    %989 = arith.mulf %987, %988 : vector<8x128xf32>
    %990 = arith.subf %986, %989 : vector<8x128xf32>
    %991 = vector.broadcast %966 : vector<8x1xf32> to vector<8x128xf32>
    %992 = arith.subf %990, %991 : vector<8x128xf32>
    %993 = vector.broadcast %962 : vector<8x1xf32> to vector<8x128xf32>
    %994 = vector.broadcast %96 : vector<1x128xf32> to vector<8x128xf32>
    %995 = arith.mulf %993, %994 : vector<8x128xf32>
    %996 = vector.broadcast %963 : vector<8x1xf32> to vector<8x128xf32>
    %997 = vector.broadcast %92 : vector<1x128xf32> to vector<8x128xf32>
    %998 = arith.mulf %996, %997 : vector<8x128xf32>
    %999 = arith.subf %995, %998 : vector<8x128xf32>
    %1000 = vector.broadcast %966 : vector<8x1xf32> to vector<8x128xf32>
    %1001 = arith.subf %999, %1000 : vector<8x128xf32>
    %1002 = arith.subf %1001, %992 : vector<8x128xf32>
    %1003 = math.absf %1002 : vector<8x128xf32>
    %cst_189 = arith.constant 9.99999997E-7 : f32
    %1004 = vector.broadcast %cst_189 : f32 to vector<8x128xf32>
    %1005 = arith.cmpf olt, %1003, %1004 : vector<8x128xf32>
    %cst_190 = arith.constant 1.000000e+00 : f32
    %1006 = vector.broadcast %cst_190 : f32 to vector<8x128xf32>
    %1007 = arith.select %1005, %1006, %1002 : vector<8x128xi1>, vector<8x128xf32>
    %cst_191 = arith.constant 0.000000e+00 : f32
    %1008 = vector.broadcast %cst_191 : f32 to vector<8x128xf32>
    %1009 = arith.subf %1008, %992 : vector<8x128xf32>
    %1010 = tpu.reciprocal %1007 {approx = true} : vector<8x128xf32> -> vector<8x128xf32>
    %1011 = arith.mulf %1009, %1010 : vector<8x128xf32>
    %cst_192 = arith.constant 9.99999997E-7 : f32
    %1012 = vector.broadcast %cst_192 : f32 to vector<8x128xf32>
    %1013 = arith.cmpf ogt, %1002, %1012 : vector<8x128xf32>
    %cst_193 = arith.constant 0.000000e+00 : f32
    %1014 = vector.broadcast %cst_193 : f32 to vector<8x128xf32>
    %1015 = arith.maximumf %1014, %1011 : vector<8x128xf32>
    %cst_194 = arith.constant 0.000000e+00 : f32
    %1016 = vector.broadcast %cst_194 : f32 to vector<8x128xf32>
    %1017 = arith.select %1013, %1015, %1016 : vector<8x128xi1>, vector<8x128xf32>
    %cst_195 = arith.constant -9.99999997E-7 : f32
    %1018 = vector.broadcast %cst_195 : f32 to vector<8x128xf32>
    %1019 = arith.cmpf olt, %1002, %1018 : vector<8x128xf32>
    %cst_196 = arith.constant 1.000000e+00 : f32
    %1020 = vector.broadcast %cst_196 : f32 to vector<8x128xf32>
    %1021 = arith.minimumf %1020, %1011 : vector<8x128xf32>
    %cst_197 = arith.constant 1.000000e+00 : f32
    %1022 = vector.broadcast %cst_197 : f32 to vector<8x128xf32>
    %1023 = arith.select %1019, %1021, %1022 : vector<8x128xi1>, vector<8x128xf32>
    %1024 = math.absf %1002 : vector<8x128xf32>
    %cst_198 = arith.constant 9.99999997E-7 : f32
    %1025 = vector.broadcast %cst_198 : f32 to vector<8x128xf32>
    %1026 = arith.cmpf ole, %1024, %1025 : vector<8x128xf32>
    %cst_199 = arith.constant -9.99999997E-7 : f32
    %1027 = vector.broadcast %cst_199 : f32 to vector<8x128xf32>
    %1028 = arith.cmpf olt, %992, %1027 : vector<8x128xf32>
    %1029 = arith.andi %1026, %1028 : vector<8x128xi1>
    %cst_200 = arith.constant -1.000000e+00 : f32
    %1030 = vector.broadcast %cst_200 : f32 to vector<8x128xf32>
    %1031 = arith.select %1029, %1030, %1023 : vector<8x128xi1>, vector<8x128xf32>
    %1032 = vector.broadcast %967 : vector<8x1xf32> to vector<8x128xf32>
    %1033 = vector.broadcast %84 : vector<1x128xf32> to vector<8x128xf32>
    %1034 = arith.mulf %1032, %1033 : vector<8x128xf32>
    %1035 = vector.broadcast %968 : vector<8x1xf32> to vector<8x128xf32>
    %1036 = vector.broadcast %80 : vector<1x128xf32> to vector<8x128xf32>
    %1037 = arith.mulf %1035, %1036 : vector<8x128xf32>
    %1038 = arith.subf %1034, %1037 : vector<8x128xf32>
    %1039 = vector.broadcast %971 : vector<8x1xf32> to vector<8x128xf32>
    %1040 = arith.subf %1038, %1039 : vector<8x128xf32>
    %1041 = vector.broadcast %967 : vector<8x1xf32> to vector<8x128xf32>
    %1042 = vector.broadcast %96 : vector<1x128xf32> to vector<8x128xf32>
    %1043 = arith.mulf %1041, %1042 : vector<8x128xf32>
    %1044 = vector.broadcast %968 : vector<8x1xf32> to vector<8x128xf32>
    %1045 = vector.broadcast %92 : vector<1x128xf32> to vector<8x128xf32>
    %1046 = arith.mulf %1044, %1045 : vector<8x128xf32>
    %1047 = arith.subf %1043, %1046 : vector<8x128xf32>
    %1048 = vector.broadcast %971 : vector<8x1xf32> to vector<8x128xf32>
    %1049 = arith.subf %1047, %1048 : vector<8x128xf32>
    %1050 = arith.subf %1049, %1040 : vector<8x128xf32>
    %1051 = math.absf %1050 : vector<8x128xf32>
    %cst_201 = arith.constant 9.99999997E-7 : f32
    %1052 = vector.broadcast %cst_201 : f32 to vector<8x128xf32>
    %1053 = arith.cmpf olt, %1051, %1052 : vector<8x128xf32>
    %cst_202 = arith.constant 1.000000e+00 : f32
    %1054 = vector.broadcast %cst_202 : f32 to vector<8x128xf32>
    %1055 = arith.select %1053, %1054, %1050 : vector<8x128xi1>, vector<8x128xf32>
    %cst_203 = arith.constant 0.000000e+00 : f32
    %1056 = vector.broadcast %cst_203 : f32 to vector<8x128xf32>
    %1057 = arith.subf %1056, %1040 : vector<8x128xf32>
    %1058 = tpu.reciprocal %1055 {approx = true} : vector<8x128xf32> -> vector<8x128xf32>
    %1059 = arith.mulf %1057, %1058 : vector<8x128xf32>
    %cst_204 = arith.constant 9.99999997E-7 : f32
    %1060 = vector.broadcast %cst_204 : f32 to vector<8x128xf32>
    %1061 = arith.cmpf ogt, %1050, %1060 : vector<8x128xf32>
    %1062 = arith.maximumf %1017, %1059 : vector<8x128xf32>
    %1063 = arith.select %1061, %1062, %1017 : vector<8x128xi1>, vector<8x128xf32>
    %cst_205 = arith.constant -9.99999997E-7 : f32
    %1064 = vector.broadcast %cst_205 : f32 to vector<8x128xf32>
    %1065 = arith.cmpf olt, %1050, %1064 : vector<8x128xf32>
    %1066 = arith.minimumf %1031, %1059 : vector<8x128xf32>
    %1067 = arith.select %1065, %1066, %1031 : vector<8x128xi1>, vector<8x128xf32>
    %1068 = math.absf %1050 : vector<8x128xf32>
    %cst_206 = arith.constant 9.99999997E-7 : f32
    %1069 = vector.broadcast %cst_206 : f32 to vector<8x128xf32>
    %1070 = arith.cmpf ole, %1068, %1069 : vector<8x128xf32>
    %cst_207 = arith.constant -9.99999997E-7 : f32
    %1071 = vector.broadcast %cst_207 : f32 to vector<8x128xf32>
    %1072 = arith.cmpf olt, %1040, %1071 : vector<8x128xf32>
    %1073 = arith.andi %1070, %1072 : vector<8x128xi1>
    %cst_208 = arith.constant -1.000000e+00 : f32
    %1074 = vector.broadcast %cst_208 : f32 to vector<8x128xf32>
    %1075 = arith.select %1073, %1074, %1067 : vector<8x128xi1>, vector<8x128xf32>
    %1076 = vector.broadcast %972 : vector<8x1xf32> to vector<8x128xf32>
    %1077 = vector.broadcast %84 : vector<1x128xf32> to vector<8x128xf32>
    %1078 = arith.mulf %1076, %1077 : vector<8x128xf32>
    %1079 = vector.broadcast %973 : vector<8x1xf32> to vector<8x128xf32>
    %1080 = vector.broadcast %80 : vector<1x128xf32> to vector<8x128xf32>
    %1081 = arith.mulf %1079, %1080 : vector<8x128xf32>
    %1082 = arith.subf %1078, %1081 : vector<8x128xf32>
    %1083 = vector.broadcast %976 : vector<8x1xf32> to vector<8x128xf32>
    %1084 = arith.subf %1082, %1083 : vector<8x128xf32>
    %1085 = vector.broadcast %972 : vector<8x1xf32> to vector<8x128xf32>
    %1086 = vector.broadcast %96 : vector<1x128xf32> to vector<8x128xf32>
    %1087 = arith.mulf %1085, %1086 : vector<8x128xf32>
    %1088 = vector.broadcast %973 : vector<8x1xf32> to vector<8x128xf32>
    %1089 = vector.broadcast %92 : vector<1x128xf32> to vector<8x128xf32>
    %1090 = arith.mulf %1088, %1089 : vector<8x128xf32>
    %1091 = arith.subf %1087, %1090 : vector<8x128xf32>
    %1092 = vector.broadcast %976 : vector<8x1xf32> to vector<8x128xf32>
    %1093 = arith.subf %1091, %1092 : vector<8x128xf32>
    %1094 = arith.subf %1093, %1084 : vector<8x128xf32>
    %1095 = math.absf %1094 : vector<8x128xf32>
    %cst_209 = arith.constant 9.99999997E-7 : f32
    %1096 = vector.broadcast %cst_209 : f32 to vector<8x128xf32>
    %1097 = arith.cmpf olt, %1095, %1096 : vector<8x128xf32>
    %cst_210 = arith.constant 1.000000e+00 : f32
    %1098 = vector.broadcast %cst_210 : f32 to vector<8x128xf32>
    %1099 = arith.select %1097, %1098, %1094 : vector<8x128xi1>, vector<8x128xf32>
    %cst_211 = arith.constant 0.000000e+00 : f32
    %1100 = vector.broadcast %cst_211 : f32 to vector<8x128xf32>
    %1101 = arith.subf %1100, %1084 : vector<8x128xf32>
    %1102 = tpu.reciprocal %1099 {approx = true} : vector<8x128xf32> -> vector<8x128xf32>
    %1103 = arith.mulf %1101, %1102 : vector<8x128xf32>
    %cst_212 = arith.constant 9.99999997E-7 : f32
    %1104 = vector.broadcast %cst_212 : f32 to vector<8x128xf32>
    %1105 = arith.cmpf ogt, %1094, %1104 : vector<8x128xf32>
    %1106 = arith.maximumf %1063, %1103 : vector<8x128xf32>
    %1107 = arith.select %1105, %1106, %1063 : vector<8x128xi1>, vector<8x128xf32>
    %cst_213 = arith.constant -9.99999997E-7 : f32
    %1108 = vector.broadcast %cst_213 : f32 to vector<8x128xf32>
    %1109 = arith.cmpf olt, %1094, %1108 : vector<8x128xf32>
    %1110 = arith.minimumf %1075, %1103 : vector<8x128xf32>
    %1111 = arith.select %1109, %1110, %1075 : vector<8x128xi1>, vector<8x128xf32>
    %1112 = math.absf %1094 : vector<8x128xf32>
    %cst_214 = arith.constant 9.99999997E-7 : f32
    %1113 = vector.broadcast %cst_214 : f32 to vector<8x128xf32>
    %1114 = arith.cmpf ole, %1112, %1113 : vector<8x128xf32>
    %cst_215 = arith.constant -9.99999997E-7 : f32
    %1115 = vector.broadcast %cst_215 : f32 to vector<8x128xf32>
    %1116 = arith.cmpf olt, %1084, %1115 : vector<8x128xf32>
    %1117 = arith.andi %1114, %1116 : vector<8x128xi1>
    %cst_216 = arith.constant -1.000000e+00 : f32
    %1118 = vector.broadcast %cst_216 : f32 to vector<8x128xf32>
    %1119 = arith.select %1117, %1118, %1111 : vector<8x128xi1>, vector<8x128xf32>
    %1120 = vector.broadcast %977 : vector<8x1xf32> to vector<8x128xf32>
    %1121 = vector.broadcast %84 : vector<1x128xf32> to vector<8x128xf32>
    %1122 = arith.mulf %1120, %1121 : vector<8x128xf32>
    %1123 = vector.broadcast %978 : vector<8x1xf32> to vector<8x128xf32>
    %1124 = vector.broadcast %80 : vector<1x128xf32> to vector<8x128xf32>
    %1125 = arith.mulf %1123, %1124 : vector<8x128xf32>
    %1126 = arith.subf %1122, %1125 : vector<8x128xf32>
    %1127 = vector.broadcast %981 : vector<8x1xf32> to vector<8x128xf32>
    %1128 = arith.subf %1126, %1127 : vector<8x128xf32>
    %1129 = vector.broadcast %977 : vector<8x1xf32> to vector<8x128xf32>
    %1130 = vector.broadcast %96 : vector<1x128xf32> to vector<8x128xf32>
    %1131 = arith.mulf %1129, %1130 : vector<8x128xf32>
    %1132 = vector.broadcast %978 : vector<8x1xf32> to vector<8x128xf32>
    %1133 = vector.broadcast %92 : vector<1x128xf32> to vector<8x128xf32>
    %1134 = arith.mulf %1132, %1133 : vector<8x128xf32>
    %1135 = arith.subf %1131, %1134 : vector<8x128xf32>
    %1136 = vector.broadcast %981 : vector<8x1xf32> to vector<8x128xf32>
    %1137 = arith.subf %1135, %1136 : vector<8x128xf32>
    %1138 = arith.subf %1137, %1128 : vector<8x128xf32>
    %1139 = math.absf %1138 : vector<8x128xf32>
    %cst_217 = arith.constant 9.99999997E-7 : f32
    %1140 = vector.broadcast %cst_217 : f32 to vector<8x128xf32>
    %1141 = arith.cmpf olt, %1139, %1140 : vector<8x128xf32>
    %cst_218 = arith.constant 1.000000e+00 : f32
    %1142 = vector.broadcast %cst_218 : f32 to vector<8x128xf32>
    %1143 = arith.select %1141, %1142, %1138 : vector<8x128xi1>, vector<8x128xf32>
    %cst_219 = arith.constant 0.000000e+00 : f32
    %1144 = vector.broadcast %cst_219 : f32 to vector<8x128xf32>
    %1145 = arith.subf %1144, %1128 : vector<8x128xf32>
    %1146 = tpu.reciprocal %1143 {approx = true} : vector<8x128xf32> -> vector<8x128xf32>
    %1147 = arith.mulf %1145, %1146 : vector<8x128xf32>
    %cst_220 = arith.constant 9.99999997E-7 : f32
    %1148 = vector.broadcast %cst_220 : f32 to vector<8x128xf32>
    %1149 = arith.cmpf ogt, %1138, %1148 : vector<8x128xf32>
    %1150 = arith.maximumf %1107, %1147 : vector<8x128xf32>
    %1151 = arith.select %1149, %1150, %1107 : vector<8x128xi1>, vector<8x128xf32>
    %cst_221 = arith.constant -9.99999997E-7 : f32
    %1152 = vector.broadcast %cst_221 : f32 to vector<8x128xf32>
    %1153 = arith.cmpf olt, %1138, %1152 : vector<8x128xf32>
    %1154 = arith.minimumf %1119, %1147 : vector<8x128xf32>
    %1155 = arith.select %1153, %1154, %1119 : vector<8x128xi1>, vector<8x128xf32>
    %1156 = math.absf %1138 : vector<8x128xf32>
    %cst_222 = arith.constant 9.99999997E-7 : f32
    %1157 = vector.broadcast %cst_222 : f32 to vector<8x128xf32>
    %1158 = arith.cmpf ole, %1156, %1157 : vector<8x128xf32>
    %cst_223 = arith.constant -9.99999997E-7 : f32
    %1159 = vector.broadcast %cst_223 : f32 to vector<8x128xf32>
    %1160 = arith.cmpf olt, %1128, %1159 : vector<8x128xf32>
    %1161 = arith.andi %1158, %1160 : vector<8x128xi1>
    %cst_224 = arith.constant -1.000000e+00 : f32
    %1162 = vector.broadcast %cst_224 : f32 to vector<8x128xf32>
    %1163 = arith.select %1161, %1162, %1155 : vector<8x128xi1>, vector<8x128xf32>
    %1164 = arith.cmpf olt, %1151, %1163 : vector<8x128xf32>
    %1165 = vector.broadcast %982 : vector<1x128xf32> to vector<8x128xf32>
    %1166 = arith.mulf %1151, %1165 : vector<8x128xf32>
    %1167 = vector.broadcast %80 : vector<1x128xf32> to vector<8x128xf32>
    %1168 = arith.addf %1167, %1166 : vector<8x128xf32>
    %1169 = vector.broadcast %983 : vector<1x128xf32> to vector<8x128xf32>
    %1170 = arith.mulf %1151, %1169 : vector<8x128xf32>
    %1171 = vector.broadcast %84 : vector<1x128xf32> to vector<8x128xf32>
    %1172 = arith.addf %1171, %1170 : vector<8x128xf32>
    %1173 = vector.broadcast %982 : vector<1x128xf32> to vector<8x128xf32>
    %1174 = arith.mulf %1163, %1173 : vector<8x128xf32>
    %1175 = vector.broadcast %80 : vector<1x128xf32> to vector<8x128xf32>
    %1176 = arith.addf %1175, %1174 : vector<8x128xf32>
    %1177 = vector.broadcast %983 : vector<1x128xf32> to vector<8x128xf32>
    %1178 = arith.mulf %1163, %1177 : vector<8x128xf32>
    %1179 = vector.broadcast %84 : vector<1x128xf32> to vector<8x128xf32>
    %1180 = arith.addf %1179, %1178 : vector<8x128xf32>
    %1181 = arith.mulf %1168, %1180 : vector<8x128xf32>
    %1182 = arith.mulf %1172, %1176 : vector<8x128xf32>
    %1183 = arith.subf %1181, %1182 : vector<8x128xf32>
    %cst_225 = arith.constant 0.000000e+00 : f32
    %1184 = vector.broadcast %cst_225 : f32 to vector<8x128xf32>
    %1185 = arith.select %1164, %1183, %1184 : vector<8x128xi1>, vector<8x128xf32>
    %cst_226 = arith.constant 0.000000e+00 : f32
    %1186 = vector.broadcast %cst_226 : f32 to vector<8x128xf32>
    %1187 = arith.addf %1186, %1185 : vector<8x128xf32>
    %1188 = arith.subf %104, %92 : vector<1x128xf32>
    %1189 = arith.subf %108, %96 : vector<1x128xf32>
    %1190 = vector.broadcast %962 : vector<8x1xf32> to vector<8x128xf32>
    %1191 = vector.broadcast %96 : vector<1x128xf32> to vector<8x128xf32>
    %1192 = arith.mulf %1190, %1191 : vector<8x128xf32>
    %1193 = vector.broadcast %963 : vector<8x1xf32> to vector<8x128xf32>
    %1194 = vector.broadcast %92 : vector<1x128xf32> to vector<8x128xf32>
    %1195 = arith.mulf %1193, %1194 : vector<8x128xf32>
    %1196 = arith.subf %1192, %1195 : vector<8x128xf32>
    %1197 = vector.broadcast %966 : vector<8x1xf32> to vector<8x128xf32>
    %1198 = arith.subf %1196, %1197 : vector<8x128xf32>
    %1199 = vector.broadcast %962 : vector<8x1xf32> to vector<8x128xf32>
    %1200 = vector.broadcast %108 : vector<1x128xf32> to vector<8x128xf32>
    %1201 = arith.mulf %1199, %1200 : vector<8x128xf32>
    %1202 = vector.broadcast %963 : vector<8x1xf32> to vector<8x128xf32>
    %1203 = vector.broadcast %104 : vector<1x128xf32> to vector<8x128xf32>
    %1204 = arith.mulf %1202, %1203 : vector<8x128xf32>
    %1205 = arith.subf %1201, %1204 : vector<8x128xf32>
    %1206 = vector.broadcast %966 : vector<8x1xf32> to vector<8x128xf32>
    %1207 = arith.subf %1205, %1206 : vector<8x128xf32>
    %1208 = arith.subf %1207, %1198 : vector<8x128xf32>
    %1209 = math.absf %1208 : vector<8x128xf32>
    %cst_227 = arith.constant 9.99999997E-7 : f32
    %1210 = vector.broadcast %cst_227 : f32 to vector<8x128xf32>
    %1211 = arith.cmpf olt, %1209, %1210 : vector<8x128xf32>
    %cst_228 = arith.constant 1.000000e+00 : f32
    %1212 = vector.broadcast %cst_228 : f32 to vector<8x128xf32>
    %1213 = arith.select %1211, %1212, %1208 : vector<8x128xi1>, vector<8x128xf32>
    %cst_229 = arith.constant 0.000000e+00 : f32
    %1214 = vector.broadcast %cst_229 : f32 to vector<8x128xf32>
    %1215 = arith.subf %1214, %1198 : vector<8x128xf32>
    %1216 = tpu.reciprocal %1213 {approx = true} : vector<8x128xf32> -> vector<8x128xf32>
    %1217 = arith.mulf %1215, %1216 : vector<8x128xf32>
    %cst_230 = arith.constant 9.99999997E-7 : f32
    %1218 = vector.broadcast %cst_230 : f32 to vector<8x128xf32>
    %1219 = arith.cmpf ogt, %1208, %1218 : vector<8x128xf32>
    %cst_231 = arith.constant 0.000000e+00 : f32
    %1220 = vector.broadcast %cst_231 : f32 to vector<8x128xf32>
    %1221 = arith.maximumf %1220, %1217 : vector<8x128xf32>
    %cst_232 = arith.constant 0.000000e+00 : f32
    %1222 = vector.broadcast %cst_232 : f32 to vector<8x128xf32>
    %1223 = arith.select %1219, %1221, %1222 : vector<8x128xi1>, vector<8x128xf32>
    %cst_233 = arith.constant -9.99999997E-7 : f32
    %1224 = vector.broadcast %cst_233 : f32 to vector<8x128xf32>
    %1225 = arith.cmpf olt, %1208, %1224 : vector<8x128xf32>
    %cst_234 = arith.constant 1.000000e+00 : f32
    %1226 = vector.broadcast %cst_234 : f32 to vector<8x128xf32>
    %1227 = arith.minimumf %1226, %1217 : vector<8x128xf32>
    %cst_235 = arith.constant 1.000000e+00 : f32
    %1228 = vector.broadcast %cst_235 : f32 to vector<8x128xf32>
    %1229 = arith.select %1225, %1227, %1228 : vector<8x128xi1>, vector<8x128xf32>
    %1230 = math.absf %1208 : vector<8x128xf32>
    %cst_236 = arith.constant 9.99999997E-7 : f32
    %1231 = vector.broadcast %cst_236 : f32 to vector<8x128xf32>
    %1232 = arith.cmpf ole, %1230, %1231 : vector<8x128xf32>
    %cst_237 = arith.constant -9.99999997E-7 : f32
    %1233 = vector.broadcast %cst_237 : f32 to vector<8x128xf32>
    %1234 = arith.cmpf olt, %1198, %1233 : vector<8x128xf32>
    %1235 = arith.andi %1232, %1234 : vector<8x128xi1>
    %cst_238 = arith.constant -1.000000e+00 : f32
    %1236 = vector.broadcast %cst_238 : f32 to vector<8x128xf32>
    %1237 = arith.select %1235, %1236, %1229 : vector<8x128xi1>, vector<8x128xf32>
    %1238 = vector.broadcast %967 : vector<8x1xf32> to vector<8x128xf32>
    %1239 = vector.broadcast %96 : vector<1x128xf32> to vector<8x128xf32>
    %1240 = arith.mulf %1238, %1239 : vector<8x128xf32>
    %1241 = vector.broadcast %968 : vector<8x1xf32> to vector<8x128xf32>
    %1242 = vector.broadcast %92 : vector<1x128xf32> to vector<8x128xf32>
    %1243 = arith.mulf %1241, %1242 : vector<8x128xf32>
    %1244 = arith.subf %1240, %1243 : vector<8x128xf32>
    %1245 = vector.broadcast %971 : vector<8x1xf32> to vector<8x128xf32>
    %1246 = arith.subf %1244, %1245 : vector<8x128xf32>
    %1247 = vector.broadcast %967 : vector<8x1xf32> to vector<8x128xf32>
    %1248 = vector.broadcast %108 : vector<1x128xf32> to vector<8x128xf32>
    %1249 = arith.mulf %1247, %1248 : vector<8x128xf32>
    %1250 = vector.broadcast %968 : vector<8x1xf32> to vector<8x128xf32>
    %1251 = vector.broadcast %104 : vector<1x128xf32> to vector<8x128xf32>
    %1252 = arith.mulf %1250, %1251 : vector<8x128xf32>
    %1253 = arith.subf %1249, %1252 : vector<8x128xf32>
    %1254 = vector.broadcast %971 : vector<8x1xf32> to vector<8x128xf32>
    %1255 = arith.subf %1253, %1254 : vector<8x128xf32>
    %1256 = arith.subf %1255, %1246 : vector<8x128xf32>
    %1257 = math.absf %1256 : vector<8x128xf32>
    %cst_239 = arith.constant 9.99999997E-7 : f32
    %1258 = vector.broadcast %cst_239 : f32 to vector<8x128xf32>
    %1259 = arith.cmpf olt, %1257, %1258 : vector<8x128xf32>
    %cst_240 = arith.constant 1.000000e+00 : f32
    %1260 = vector.broadcast %cst_240 : f32 to vector<8x128xf32>
    %1261 = arith.select %1259, %1260, %1256 : vector<8x128xi1>, vector<8x128xf32>
    %cst_241 = arith.constant 0.000000e+00 : f32
    %1262 = vector.broadcast %cst_241 : f32 to vector<8x128xf32>
    %1263 = arith.subf %1262, %1246 : vector<8x128xf32>
    %1264 = tpu.reciprocal %1261 {approx = true} : vector<8x128xf32> -> vector<8x128xf32>
    %1265 = arith.mulf %1263, %1264 : vector<8x128xf32>
    %cst_242 = arith.constant 9.99999997E-7 : f32
    %1266 = vector.broadcast %cst_242 : f32 to vector<8x128xf32>
    %1267 = arith.cmpf ogt, %1256, %1266 : vector<8x128xf32>
    %1268 = arith.maximumf %1223, %1265 : vector<8x128xf32>
    %1269 = arith.select %1267, %1268, %1223 : vector<8x128xi1>, vector<8x128xf32>
    %cst_243 = arith.constant -9.99999997E-7 : f32
    %1270 = vector.broadcast %cst_243 : f32 to vector<8x128xf32>
    %1271 = arith.cmpf olt, %1256, %1270 : vector<8x128xf32>
    %1272 = arith.minimumf %1237, %1265 : vector<8x128xf32>
    %1273 = arith.select %1271, %1272, %1237 : vector<8x128xi1>, vector<8x128xf32>
    %1274 = math.absf %1256 : vector<8x128xf32>
    %cst_244 = arith.constant 9.99999997E-7 : f32
    %1275 = vector.broadcast %cst_244 : f32 to vector<8x128xf32>
    %1276 = arith.cmpf ole, %1274, %1275 : vector<8x128xf32>
    %cst_245 = arith.constant -9.99999997E-7 : f32
    %1277 = vector.broadcast %cst_245 : f32 to vector<8x128xf32>
    %1278 = arith.cmpf olt, %1246, %1277 : vector<8x128xf32>
    %1279 = arith.andi %1276, %1278 : vector<8x128xi1>
    %cst_246 = arith.constant -1.000000e+00 : f32
    %1280 = vector.broadcast %cst_246 : f32 to vector<8x128xf32>
    %1281 = arith.select %1279, %1280, %1273 : vector<8x128xi1>, vector<8x128xf32>
    %1282 = vector.broadcast %972 : vector<8x1xf32> to vector<8x128xf32>
    %1283 = vector.broadcast %96 : vector<1x128xf32> to vector<8x128xf32>
    %1284 = arith.mulf %1282, %1283 : vector<8x128xf32>
    %1285 = vector.broadcast %973 : vector<8x1xf32> to vector<8x128xf32>
    %1286 = vector.broadcast %92 : vector<1x128xf32> to vector<8x128xf32>
    %1287 = arith.mulf %1285, %1286 : vector<8x128xf32>
    %1288 = arith.subf %1284, %1287 : vector<8x128xf32>
    %1289 = vector.broadcast %976 : vector<8x1xf32> to vector<8x128xf32>
    %1290 = arith.subf %1288, %1289 : vector<8x128xf32>
    %1291 = vector.broadcast %972 : vector<8x1xf32> to vector<8x128xf32>
    %1292 = vector.broadcast %108 : vector<1x128xf32> to vector<8x128xf32>
    %1293 = arith.mulf %1291, %1292 : vector<8x128xf32>
    %1294 = vector.broadcast %973 : vector<8x1xf32> to vector<8x128xf32>
    %1295 = vector.broadcast %104 : vector<1x128xf32> to vector<8x128xf32>
    %1296 = arith.mulf %1294, %1295 : vector<8x128xf32>
    %1297 = arith.subf %1293, %1296 : vector<8x128xf32>
    %1298 = vector.broadcast %976 : vector<8x1xf32> to vector<8x128xf32>
    %1299 = arith.subf %1297, %1298 : vector<8x128xf32>
    %1300 = arith.subf %1299, %1290 : vector<8x128xf32>
    %1301 = math.absf %1300 : vector<8x128xf32>
    %cst_247 = arith.constant 9.99999997E-7 : f32
    %1302 = vector.broadcast %cst_247 : f32 to vector<8x128xf32>
    %1303 = arith.cmpf olt, %1301, %1302 : vector<8x128xf32>
    %cst_248 = arith.constant 1.000000e+00 : f32
    %1304 = vector.broadcast %cst_248 : f32 to vector<8x128xf32>
    %1305 = arith.select %1303, %1304, %1300 : vector<8x128xi1>, vector<8x128xf32>
    %cst_249 = arith.constant 0.000000e+00 : f32
    %1306 = vector.broadcast %cst_249 : f32 to vector<8x128xf32>
    %1307 = arith.subf %1306, %1290 : vector<8x128xf32>
    %1308 = tpu.reciprocal %1305 {approx = true} : vector<8x128xf32> -> vector<8x128xf32>
    %1309 = arith.mulf %1307, %1308 : vector<8x128xf32>
    %cst_250 = arith.constant 9.99999997E-7 : f32
    %1310 = vector.broadcast %cst_250 : f32 to vector<8x128xf32>
    %1311 = arith.cmpf ogt, %1300, %1310 : vector<8x128xf32>
    %1312 = arith.maximumf %1269, %1309 : vector<8x128xf32>
    %1313 = arith.select %1311, %1312, %1269 : vector<8x128xi1>, vector<8x128xf32>
    %cst_251 = arith.constant -9.99999997E-7 : f32
    %1314 = vector.broadcast %cst_251 : f32 to vector<8x128xf32>
    %1315 = arith.cmpf olt, %1300, %1314 : vector<8x128xf32>
    %1316 = arith.minimumf %1281, %1309 : vector<8x128xf32>
    %1317 = arith.select %1315, %1316, %1281 : vector<8x128xi1>, vector<8x128xf32>
    %1318 = math.absf %1300 : vector<8x128xf32>
    %cst_252 = arith.constant 9.99999997E-7 : f32
    %1319 = vector.broadcast %cst_252 : f32 to vector<8x128xf32>
    %1320 = arith.cmpf ole, %1318, %1319 : vector<8x128xf32>
    %cst_253 = arith.constant -9.99999997E-7 : f32
    %1321 = vector.broadcast %cst_253 : f32 to vector<8x128xf32>
    %1322 = arith.cmpf olt, %1290, %1321 : vector<8x128xf32>
    %1323 = arith.andi %1320, %1322 : vector<8x128xi1>
    %cst_254 = arith.constant -1.000000e+00 : f32
    %1324 = vector.broadcast %cst_254 : f32 to vector<8x128xf32>
    %1325 = arith.select %1323, %1324, %1317 : vector<8x128xi1>, vector<8x128xf32>
    %1326 = vector.broadcast %977 : vector<8x1xf32> to vector<8x128xf32>
    %1327 = vector.broadcast %96 : vector<1x128xf32> to vector<8x128xf32>
    %1328 = arith.mulf %1326, %1327 : vector<8x128xf32>
    %1329 = vector.broadcast %978 : vector<8x1xf32> to vector<8x128xf32>
    %1330 = vector.broadcast %92 : vector<1x128xf32> to vector<8x128xf32>
    %1331 = arith.mulf %1329, %1330 : vector<8x128xf32>
    %1332 = arith.subf %1328, %1331 : vector<8x128xf32>
    %1333 = vector.broadcast %981 : vector<8x1xf32> to vector<8x128xf32>
    %1334 = arith.subf %1332, %1333 : vector<8x128xf32>
    %1335 = vector.broadcast %977 : vector<8x1xf32> to vector<8x128xf32>
    %1336 = vector.broadcast %108 : vector<1x128xf32> to vector<8x128xf32>
    %1337 = arith.mulf %1335, %1336 : vector<8x128xf32>
    %1338 = vector.broadcast %978 : vector<8x1xf32> to vector<8x128xf32>
    %1339 = vector.broadcast %104 : vector<1x128xf32> to vector<8x128xf32>
    %1340 = arith.mulf %1338, %1339 : vector<8x128xf32>
    %1341 = arith.subf %1337, %1340 : vector<8x128xf32>
    %1342 = vector.broadcast %981 : vector<8x1xf32> to vector<8x128xf32>
    %1343 = arith.subf %1341, %1342 : vector<8x128xf32>
    %1344 = arith.subf %1343, %1334 : vector<8x128xf32>
    %1345 = math.absf %1344 : vector<8x128xf32>
    %cst_255 = arith.constant 9.99999997E-7 : f32
    %1346 = vector.broadcast %cst_255 : f32 to vector<8x128xf32>
    %1347 = arith.cmpf olt, %1345, %1346 : vector<8x128xf32>
    %cst_256 = arith.constant 1.000000e+00 : f32
    %1348 = vector.broadcast %cst_256 : f32 to vector<8x128xf32>
    %1349 = arith.select %1347, %1348, %1344 : vector<8x128xi1>, vector<8x128xf32>
    %cst_257 = arith.constant 0.000000e+00 : f32
    %1350 = vector.broadcast %cst_257 : f32 to vector<8x128xf32>
    %1351 = arith.subf %1350, %1334 : vector<8x128xf32>
    %1352 = tpu.reciprocal %1349 {approx = true} : vector<8x128xf32> -> vector<8x128xf32>
    %1353 = arith.mulf %1351, %1352 : vector<8x128xf32>
    %cst_258 = arith.constant 9.99999997E-7 : f32
    %1354 = vector.broadcast %cst_258 : f32 to vector<8x128xf32>
    %1355 = arith.cmpf ogt, %1344, %1354 : vector<8x128xf32>
    %1356 = arith.maximumf %1313, %1353 : vector<8x128xf32>
    %1357 = arith.select %1355, %1356, %1313 : vector<8x128xi1>, vector<8x128xf32>
    %cst_259 = arith.constant -9.99999997E-7 : f32
    %1358 = vector.broadcast %cst_259 : f32 to vector<8x128xf32>
    %1359 = arith.cmpf olt, %1344, %1358 : vector<8x128xf32>
    %1360 = arith.minimumf %1325, %1353 : vector<8x128xf32>
    %1361 = arith.select %1359, %1360, %1325 : vector<8x128xi1>, vector<8x128xf32>
    %1362 = math.absf %1344 : vector<8x128xf32>
    %cst_260 = arith.constant 9.99999997E-7 : f32
    %1363 = vector.broadcast %cst_260 : f32 to vector<8x128xf32>
    %1364 = arith.cmpf ole, %1362, %1363 : vector<8x128xf32>
    %cst_261 = arith.constant -9.99999997E-7 : f32
    %1365 = vector.broadcast %cst_261 : f32 to vector<8x128xf32>
    %1366 = arith.cmpf olt, %1334, %1365 : vector<8x128xf32>
    %1367 = arith.andi %1364, %1366 : vector<8x128xi1>
    %cst_262 = arith.constant -1.000000e+00 : f32
    %1368 = vector.broadcast %cst_262 : f32 to vector<8x128xf32>
    %1369 = arith.select %1367, %1368, %1361 : vector<8x128xi1>, vector<8x128xf32>
    %1370 = arith.cmpf olt, %1357, %1369 : vector<8x128xf32>
    %1371 = vector.broadcast %1188 : vector<1x128xf32> to vector<8x128xf32>
    %1372 = arith.mulf %1357, %1371 : vector<8x128xf32>
    %1373 = vector.broadcast %92 : vector<1x128xf32> to vector<8x128xf32>
    %1374 = arith.addf %1373, %1372 : vector<8x128xf32>
    %1375 = vector.broadcast %1189 : vector<1x128xf32> to vector<8x128xf32>
    %1376 = arith.mulf %1357, %1375 : vector<8x128xf32>
    %1377 = vector.broadcast %96 : vector<1x128xf32> to vector<8x128xf32>
    %1378 = arith.addf %1377, %1376 : vector<8x128xf32>
    %1379 = vector.broadcast %1188 : vector<1x128xf32> to vector<8x128xf32>
    %1380 = arith.mulf %1369, %1379 : vector<8x128xf32>
    %1381 = vector.broadcast %92 : vector<1x128xf32> to vector<8x128xf32>
    %1382 = arith.addf %1381, %1380 : vector<8x128xf32>
    %1383 = vector.broadcast %1189 : vector<1x128xf32> to vector<8x128xf32>
    %1384 = arith.mulf %1369, %1383 : vector<8x128xf32>
    %1385 = vector.broadcast %96 : vector<1x128xf32> to vector<8x128xf32>
    %1386 = arith.addf %1385, %1384 : vector<8x128xf32>
    %1387 = arith.mulf %1374, %1386 : vector<8x128xf32>
    %1388 = arith.mulf %1378, %1382 : vector<8x128xf32>
    %1389 = arith.subf %1387, %1388 : vector<8x128xf32>
    %cst_263 = arith.constant 0.000000e+00 : f32
    %1390 = vector.broadcast %cst_263 : f32 to vector<8x128xf32>
    %1391 = arith.select %1370, %1389, %1390 : vector<8x128xi1>, vector<8x128xf32>
    %1392 = arith.addf %1187, %1391 : vector<8x128xf32>
    %1393 = arith.subf %116, %104 : vector<1x128xf32>
    %1394 = arith.subf %120, %108 : vector<1x128xf32>
    %1395 = vector.broadcast %962 : vector<8x1xf32> to vector<8x128xf32>
    %1396 = vector.broadcast %108 : vector<1x128xf32> to vector<8x128xf32>
    %1397 = arith.mulf %1395, %1396 : vector<8x128xf32>
    %1398 = vector.broadcast %963 : vector<8x1xf32> to vector<8x128xf32>
    %1399 = vector.broadcast %104 : vector<1x128xf32> to vector<8x128xf32>
    %1400 = arith.mulf %1398, %1399 : vector<8x128xf32>
    %1401 = arith.subf %1397, %1400 : vector<8x128xf32>
    %1402 = vector.broadcast %966 : vector<8x1xf32> to vector<8x128xf32>
    %1403 = arith.subf %1401, %1402 : vector<8x128xf32>
    %1404 = vector.broadcast %962 : vector<8x1xf32> to vector<8x128xf32>
    %1405 = vector.broadcast %120 : vector<1x128xf32> to vector<8x128xf32>
    %1406 = arith.mulf %1404, %1405 : vector<8x128xf32>
    %1407 = vector.broadcast %963 : vector<8x1xf32> to vector<8x128xf32>
    %1408 = vector.broadcast %116 : vector<1x128xf32> to vector<8x128xf32>
    %1409 = arith.mulf %1407, %1408 : vector<8x128xf32>
    %1410 = arith.subf %1406, %1409 : vector<8x128xf32>
    %1411 = vector.broadcast %966 : vector<8x1xf32> to vector<8x128xf32>
    %1412 = arith.subf %1410, %1411 : vector<8x128xf32>
    %1413 = arith.subf %1412, %1403 : vector<8x128xf32>
    %1414 = math.absf %1413 : vector<8x128xf32>
    %cst_264 = arith.constant 9.99999997E-7 : f32
    %1415 = vector.broadcast %cst_264 : f32 to vector<8x128xf32>
    %1416 = arith.cmpf olt, %1414, %1415 : vector<8x128xf32>
    %cst_265 = arith.constant 1.000000e+00 : f32
    %1417 = vector.broadcast %cst_265 : f32 to vector<8x128xf32>
    %1418 = arith.select %1416, %1417, %1413 : vector<8x128xi1>, vector<8x128xf32>
    %cst_266 = arith.constant 0.000000e+00 : f32
    %1419 = vector.broadcast %cst_266 : f32 to vector<8x128xf32>
    %1420 = arith.subf %1419, %1403 : vector<8x128xf32>
    %1421 = tpu.reciprocal %1418 {approx = true} : vector<8x128xf32> -> vector<8x128xf32>
    %1422 = arith.mulf %1420, %1421 : vector<8x128xf32>
    %cst_267 = arith.constant 9.99999997E-7 : f32
    %1423 = vector.broadcast %cst_267 : f32 to vector<8x128xf32>
    %1424 = arith.cmpf ogt, %1413, %1423 : vector<8x128xf32>
    %cst_268 = arith.constant 0.000000e+00 : f32
    %1425 = vector.broadcast %cst_268 : f32 to vector<8x128xf32>
    %1426 = arith.maximumf %1425, %1422 : vector<8x128xf32>
    %cst_269 = arith.constant 0.000000e+00 : f32
    %1427 = vector.broadcast %cst_269 : f32 to vector<8x128xf32>
    %1428 = arith.select %1424, %1426, %1427 : vector<8x128xi1>, vector<8x128xf32>
    %cst_270 = arith.constant -9.99999997E-7 : f32
    %1429 = vector.broadcast %cst_270 : f32 to vector<8x128xf32>
    %1430 = arith.cmpf olt, %1413, %1429 : vector<8x128xf32>
    %cst_271 = arith.constant 1.000000e+00 : f32
    %1431 = vector.broadcast %cst_271 : f32 to vector<8x128xf32>
    %1432 = arith.minimumf %1431, %1422 : vector<8x128xf32>
    %cst_272 = arith.constant 1.000000e+00 : f32
    %1433 = vector.broadcast %cst_272 : f32 to vector<8x128xf32>
    %1434 = arith.select %1430, %1432, %1433 : vector<8x128xi1>, vector<8x128xf32>
    %1435 = math.absf %1413 : vector<8x128xf32>
    %cst_273 = arith.constant 9.99999997E-7 : f32
    %1436 = vector.broadcast %cst_273 : f32 to vector<8x128xf32>
    %1437 = arith.cmpf ole, %1435, %1436 : vector<8x128xf32>
    %cst_274 = arith.constant -9.99999997E-7 : f32
    %1438 = vector.broadcast %cst_274 : f32 to vector<8x128xf32>
    %1439 = arith.cmpf olt, %1403, %1438 : vector<8x128xf32>
    %1440 = arith.andi %1437, %1439 : vector<8x128xi1>
    %cst_275 = arith.constant -1.000000e+00 : f32
    %1441 = vector.broadcast %cst_275 : f32 to vector<8x128xf32>
    %1442 = arith.select %1440, %1441, %1434 : vector<8x128xi1>, vector<8x128xf32>
    %1443 = vector.broadcast %967 : vector<8x1xf32> to vector<8x128xf32>
    %1444 = vector.broadcast %108 : vector<1x128xf32> to vector<8x128xf32>
    %1445 = arith.mulf %1443, %1444 : vector<8x128xf32>
    %1446 = vector.broadcast %968 : vector<8x1xf32> to vector<8x128xf32>
    %1447 = vector.broadcast %104 : vector<1x128xf32> to vector<8x128xf32>
    %1448 = arith.mulf %1446, %1447 : vector<8x128xf32>
    %1449 = arith.subf %1445, %1448 : vector<8x128xf32>
    %1450 = vector.broadcast %971 : vector<8x1xf32> to vector<8x128xf32>
    %1451 = arith.subf %1449, %1450 : vector<8x128xf32>
    %1452 = vector.broadcast %967 : vector<8x1xf32> to vector<8x128xf32>
    %1453 = vector.broadcast %120 : vector<1x128xf32> to vector<8x128xf32>
    %1454 = arith.mulf %1452, %1453 : vector<8x128xf32>
    %1455 = vector.broadcast %968 : vector<8x1xf32> to vector<8x128xf32>
    %1456 = vector.broadcast %116 : vector<1x128xf32> to vector<8x128xf32>
    %1457 = arith.mulf %1455, %1456 : vector<8x128xf32>
    %1458 = arith.subf %1454, %1457 : vector<8x128xf32>
    %1459 = vector.broadcast %971 : vector<8x1xf32> to vector<8x128xf32>
    %1460 = arith.subf %1458, %1459 : vector<8x128xf32>
    %1461 = arith.subf %1460, %1451 : vector<8x128xf32>
    %1462 = math.absf %1461 : vector<8x128xf32>
    %cst_276 = arith.constant 9.99999997E-7 : f32
    %1463 = vector.broadcast %cst_276 : f32 to vector<8x128xf32>
    %1464 = arith.cmpf olt, %1462, %1463 : vector<8x128xf32>
    %cst_277 = arith.constant 1.000000e+00 : f32
    %1465 = vector.broadcast %cst_277 : f32 to vector<8x128xf32>
    %1466 = arith.select %1464, %1465, %1461 : vector<8x128xi1>, vector<8x128xf32>
    %cst_278 = arith.constant 0.000000e+00 : f32
    %1467 = vector.broadcast %cst_278 : f32 to vector<8x128xf32>
    %1468 = arith.subf %1467, %1451 : vector<8x128xf32>
    %1469 = tpu.reciprocal %1466 {approx = true} : vector<8x128xf32> -> vector<8x128xf32>
    %1470 = arith.mulf %1468, %1469 : vector<8x128xf32>
    %cst_279 = arith.constant 9.99999997E-7 : f32
    %1471 = vector.broadcast %cst_279 : f32 to vector<8x128xf32>
    %1472 = arith.cmpf ogt, %1461, %1471 : vector<8x128xf32>
    %1473 = arith.maximumf %1428, %1470 : vector<8x128xf32>
    %1474 = arith.select %1472, %1473, %1428 : vector<8x128xi1>, vector<8x128xf32>
    %cst_280 = arith.constant -9.99999997E-7 : f32
    %1475 = vector.broadcast %cst_280 : f32 to vector<8x128xf32>
    %1476 = arith.cmpf olt, %1461, %1475 : vector<8x128xf32>
    %1477 = arith.minimumf %1442, %1470 : vector<8x128xf32>
    %1478 = arith.select %1476, %1477, %1442 : vector<8x128xi1>, vector<8x128xf32>
    %1479 = math.absf %1461 : vector<8x128xf32>
    %cst_281 = arith.constant 9.99999997E-7 : f32
    %1480 = vector.broadcast %cst_281 : f32 to vector<8x128xf32>
    %1481 = arith.cmpf ole, %1479, %1480 : vector<8x128xf32>
    %cst_282 = arith.constant -9.99999997E-7 : f32
    %1482 = vector.broadcast %cst_282 : f32 to vector<8x128xf32>
    %1483 = arith.cmpf olt, %1451, %1482 : vector<8x128xf32>
    %1484 = arith.andi %1481, %1483 : vector<8x128xi1>
    %cst_283 = arith.constant -1.000000e+00 : f32
    %1485 = vector.broadcast %cst_283 : f32 to vector<8x128xf32>
    %1486 = arith.select %1484, %1485, %1478 : vector<8x128xi1>, vector<8x128xf32>
    %1487 = vector.broadcast %972 : vector<8x1xf32> to vector<8x128xf32>
    %1488 = vector.broadcast %108 : vector<1x128xf32> to vector<8x128xf32>
    %1489 = arith.mulf %1487, %1488 : vector<8x128xf32>
    %1490 = vector.broadcast %973 : vector<8x1xf32> to vector<8x128xf32>
    %1491 = vector.broadcast %104 : vector<1x128xf32> to vector<8x128xf32>
    %1492 = arith.mulf %1490, %1491 : vector<8x128xf32>
    %1493 = arith.subf %1489, %1492 : vector<8x128xf32>
    %1494 = vector.broadcast %976 : vector<8x1xf32> to vector<8x128xf32>
    %1495 = arith.subf %1493, %1494 : vector<8x128xf32>
    %1496 = vector.broadcast %972 : vector<8x1xf32> to vector<8x128xf32>
    %1497 = vector.broadcast %120 : vector<1x128xf32> to vector<8x128xf32>
    %1498 = arith.mulf %1496, %1497 : vector<8x128xf32>
    %1499 = vector.broadcast %973 : vector<8x1xf32> to vector<8x128xf32>
    %1500 = vector.broadcast %116 : vector<1x128xf32> to vector<8x128xf32>
    %1501 = arith.mulf %1499, %1500 : vector<8x128xf32>
    %1502 = arith.subf %1498, %1501 : vector<8x128xf32>
    %1503 = vector.broadcast %976 : vector<8x1xf32> to vector<8x128xf32>
    %1504 = arith.subf %1502, %1503 : vector<8x128xf32>
    %1505 = arith.subf %1504, %1495 : vector<8x128xf32>
    %1506 = math.absf %1505 : vector<8x128xf32>
    %cst_284 = arith.constant 9.99999997E-7 : f32
    %1507 = vector.broadcast %cst_284 : f32 to vector<8x128xf32>
    %1508 = arith.cmpf olt, %1506, %1507 : vector<8x128xf32>
    %cst_285 = arith.constant 1.000000e+00 : f32
    %1509 = vector.broadcast %cst_285 : f32 to vector<8x128xf32>
    %1510 = arith.select %1508, %1509, %1505 : vector<8x128xi1>, vector<8x128xf32>
    %cst_286 = arith.constant 0.000000e+00 : f32
    %1511 = vector.broadcast %cst_286 : f32 to vector<8x128xf32>
    %1512 = arith.subf %1511, %1495 : vector<8x128xf32>
    %1513 = tpu.reciprocal %1510 {approx = true} : vector<8x128xf32> -> vector<8x128xf32>
    %1514 = arith.mulf %1512, %1513 : vector<8x128xf32>
    %cst_287 = arith.constant 9.99999997E-7 : f32
    %1515 = vector.broadcast %cst_287 : f32 to vector<8x128xf32>
    %1516 = arith.cmpf ogt, %1505, %1515 : vector<8x128xf32>
    %1517 = arith.maximumf %1474, %1514 : vector<8x128xf32>
    %1518 = arith.select %1516, %1517, %1474 : vector<8x128xi1>, vector<8x128xf32>
    %cst_288 = arith.constant -9.99999997E-7 : f32
    %1519 = vector.broadcast %cst_288 : f32 to vector<8x128xf32>
    %1520 = arith.cmpf olt, %1505, %1519 : vector<8x128xf32>
    %1521 = arith.minimumf %1486, %1514 : vector<8x128xf32>
    %1522 = arith.select %1520, %1521, %1486 : vector<8x128xi1>, vector<8x128xf32>
    %1523 = math.absf %1505 : vector<8x128xf32>
    %cst_289 = arith.constant 9.99999997E-7 : f32
    %1524 = vector.broadcast %cst_289 : f32 to vector<8x128xf32>
    %1525 = arith.cmpf ole, %1523, %1524 : vector<8x128xf32>
    %cst_290 = arith.constant -9.99999997E-7 : f32
    %1526 = vector.broadcast %cst_290 : f32 to vector<8x128xf32>
    %1527 = arith.cmpf olt, %1495, %1526 : vector<8x128xf32>
    %1528 = arith.andi %1525, %1527 : vector<8x128xi1>
    %cst_291 = arith.constant -1.000000e+00 : f32
    %1529 = vector.broadcast %cst_291 : f32 to vector<8x128xf32>
    %1530 = arith.select %1528, %1529, %1522 : vector<8x128xi1>, vector<8x128xf32>
    %1531 = vector.broadcast %977 : vector<8x1xf32> to vector<8x128xf32>
    %1532 = vector.broadcast %108 : vector<1x128xf32> to vector<8x128xf32>
    %1533 = arith.mulf %1531, %1532 : vector<8x128xf32>
    %1534 = vector.broadcast %978 : vector<8x1xf32> to vector<8x128xf32>
    %1535 = vector.broadcast %104 : vector<1x128xf32> to vector<8x128xf32>
    %1536 = arith.mulf %1534, %1535 : vector<8x128xf32>
    %1537 = arith.subf %1533, %1536 : vector<8x128xf32>
    %1538 = vector.broadcast %981 : vector<8x1xf32> to vector<8x128xf32>
    %1539 = arith.subf %1537, %1538 : vector<8x128xf32>
    %1540 = vector.broadcast %977 : vector<8x1xf32> to vector<8x128xf32>
    %1541 = vector.broadcast %120 : vector<1x128xf32> to vector<8x128xf32>
    %1542 = arith.mulf %1540, %1541 : vector<8x128xf32>
    %1543 = vector.broadcast %978 : vector<8x1xf32> to vector<8x128xf32>
    %1544 = vector.broadcast %116 : vector<1x128xf32> to vector<8x128xf32>
    %1545 = arith.mulf %1543, %1544 : vector<8x128xf32>
    %1546 = arith.subf %1542, %1545 : vector<8x128xf32>
    %1547 = vector.broadcast %981 : vector<8x1xf32> to vector<8x128xf32>
    %1548 = arith.subf %1546, %1547 : vector<8x128xf32>
    %1549 = arith.subf %1548, %1539 : vector<8x128xf32>
    %1550 = math.absf %1549 : vector<8x128xf32>
    %cst_292 = arith.constant 9.99999997E-7 : f32
    %1551 = vector.broadcast %cst_292 : f32 to vector<8x128xf32>
    %1552 = arith.cmpf olt, %1550, %1551 : vector<8x128xf32>
    %cst_293 = arith.constant 1.000000e+00 : f32
    %1553 = vector.broadcast %cst_293 : f32 to vector<8x128xf32>
    %1554 = arith.select %1552, %1553, %1549 : vector<8x128xi1>, vector<8x128xf32>
    %cst_294 = arith.constant 0.000000e+00 : f32
    %1555 = vector.broadcast %cst_294 : f32 to vector<8x128xf32>
    %1556 = arith.subf %1555, %1539 : vector<8x128xf32>
    %1557 = tpu.reciprocal %1554 {approx = true} : vector<8x128xf32> -> vector<8x128xf32>
    %1558 = arith.mulf %1556, %1557 : vector<8x128xf32>
    %cst_295 = arith.constant 9.99999997E-7 : f32
    %1559 = vector.broadcast %cst_295 : f32 to vector<8x128xf32>
    %1560 = arith.cmpf ogt, %1549, %1559 : vector<8x128xf32>
    %1561 = arith.maximumf %1518, %1558 : vector<8x128xf32>
    %1562 = arith.select %1560, %1561, %1518 : vector<8x128xi1>, vector<8x128xf32>
    %cst_296 = arith.constant -9.99999997E-7 : f32
    %1563 = vector.broadcast %cst_296 : f32 to vector<8x128xf32>
    %1564 = arith.cmpf olt, %1549, %1563 : vector<8x128xf32>
    %1565 = arith.minimumf %1530, %1558 : vector<8x128xf32>
    %1566 = arith.select %1564, %1565, %1530 : vector<8x128xi1>, vector<8x128xf32>
    %1567 = math.absf %1549 : vector<8x128xf32>
    %cst_297 = arith.constant 9.99999997E-7 : f32
    %1568 = vector.broadcast %cst_297 : f32 to vector<8x128xf32>
    %1569 = arith.cmpf ole, %1567, %1568 : vector<8x128xf32>
    %cst_298 = arith.constant -9.99999997E-7 : f32
    %1570 = vector.broadcast %cst_298 : f32 to vector<8x128xf32>
    %1571 = arith.cmpf olt, %1539, %1570 : vector<8x128xf32>
    %1572 = arith.andi %1569, %1571 : vector<8x128xi1>
    %cst_299 = arith.constant -1.000000e+00 : f32
    %1573 = vector.broadcast %cst_299 : f32 to vector<8x128xf32>
    %1574 = arith.select %1572, %1573, %1566 : vector<8x128xi1>, vector<8x128xf32>
    %1575 = arith.cmpf olt, %1562, %1574 : vector<8x128xf32>
    %1576 = vector.broadcast %1393 : vector<1x128xf32> to vector<8x128xf32>
    %1577 = arith.mulf %1562, %1576 : vector<8x128xf32>
    %1578 = vector.broadcast %104 : vector<1x128xf32> to vector<8x128xf32>
    %1579 = arith.addf %1578, %1577 : vector<8x128xf32>
    %1580 = vector.broadcast %1394 : vector<1x128xf32> to vector<8x128xf32>
    %1581 = arith.mulf %1562, %1580 : vector<8x128xf32>
    %1582 = vector.broadcast %108 : vector<1x128xf32> to vector<8x128xf32>
    %1583 = arith.addf %1582, %1581 : vector<8x128xf32>
    %1584 = vector.broadcast %1393 : vector<1x128xf32> to vector<8x128xf32>
    %1585 = arith.mulf %1574, %1584 : vector<8x128xf32>
    %1586 = vector.broadcast %104 : vector<1x128xf32> to vector<8x128xf32>
    %1587 = arith.addf %1586, %1585 : vector<8x128xf32>
    %1588 = vector.broadcast %1394 : vector<1x128xf32> to vector<8x128xf32>
    %1589 = arith.mulf %1574, %1588 : vector<8x128xf32>
    %1590 = vector.broadcast %108 : vector<1x128xf32> to vector<8x128xf32>
    %1591 = arith.addf %1590, %1589 : vector<8x128xf32>
    %1592 = arith.mulf %1579, %1591 : vector<8x128xf32>
    %1593 = arith.mulf %1583, %1587 : vector<8x128xf32>
    %1594 = arith.subf %1592, %1593 : vector<8x128xf32>
    %cst_300 = arith.constant 0.000000e+00 : f32
    %1595 = vector.broadcast %cst_300 : f32 to vector<8x128xf32>
    %1596 = arith.select %1575, %1594, %1595 : vector<8x128xi1>, vector<8x128xf32>
    %1597 = arith.addf %1392, %1596 : vector<8x128xf32>
    %1598 = arith.subf %80, %116 : vector<1x128xf32>
    %1599 = arith.subf %84, %120 : vector<1x128xf32>
    %1600 = vector.broadcast %962 : vector<8x1xf32> to vector<8x128xf32>
    %1601 = vector.broadcast %120 : vector<1x128xf32> to vector<8x128xf32>
    %1602 = arith.mulf %1600, %1601 : vector<8x128xf32>
    %1603 = vector.broadcast %963 : vector<8x1xf32> to vector<8x128xf32>
    %1604 = vector.broadcast %116 : vector<1x128xf32> to vector<8x128xf32>
    %1605 = arith.mulf %1603, %1604 : vector<8x128xf32>
    %1606 = arith.subf %1602, %1605 : vector<8x128xf32>
    %1607 = vector.broadcast %966 : vector<8x1xf32> to vector<8x128xf32>
    %1608 = arith.subf %1606, %1607 : vector<8x128xf32>
    %1609 = vector.broadcast %962 : vector<8x1xf32> to vector<8x128xf32>
    %1610 = vector.broadcast %84 : vector<1x128xf32> to vector<8x128xf32>
    %1611 = arith.mulf %1609, %1610 : vector<8x128xf32>
    %1612 = vector.broadcast %963 : vector<8x1xf32> to vector<8x128xf32>
    %1613 = vector.broadcast %80 : vector<1x128xf32> to vector<8x128xf32>
    %1614 = arith.mulf %1612, %1613 : vector<8x128xf32>
    %1615 = arith.subf %1611, %1614 : vector<8x128xf32>
    %1616 = vector.broadcast %966 : vector<8x1xf32> to vector<8x128xf32>
    %1617 = arith.subf %1615, %1616 : vector<8x128xf32>
    %1618 = arith.subf %1617, %1608 : vector<8x128xf32>
    %1619 = math.absf %1618 : vector<8x128xf32>
    %cst_301 = arith.constant 9.99999997E-7 : f32
    %1620 = vector.broadcast %cst_301 : f32 to vector<8x128xf32>
    %1621 = arith.cmpf olt, %1619, %1620 : vector<8x128xf32>
    %cst_302 = arith.constant 1.000000e+00 : f32
    %1622 = vector.broadcast %cst_302 : f32 to vector<8x128xf32>
    %1623 = arith.select %1621, %1622, %1618 : vector<8x128xi1>, vector<8x128xf32>
    %cst_303 = arith.constant 0.000000e+00 : f32
    %1624 = vector.broadcast %cst_303 : f32 to vector<8x128xf32>
    %1625 = arith.subf %1624, %1608 : vector<8x128xf32>
    %1626 = tpu.reciprocal %1623 {approx = true} : vector<8x128xf32> -> vector<8x128xf32>
    %1627 = arith.mulf %1625, %1626 : vector<8x128xf32>
    %cst_304 = arith.constant 9.99999997E-7 : f32
    %1628 = vector.broadcast %cst_304 : f32 to vector<8x128xf32>
    %1629 = arith.cmpf ogt, %1618, %1628 : vector<8x128xf32>
    %cst_305 = arith.constant 0.000000e+00 : f32
    %1630 = vector.broadcast %cst_305 : f32 to vector<8x128xf32>
    %1631 = arith.maximumf %1630, %1627 : vector<8x128xf32>
    %cst_306 = arith.constant 0.000000e+00 : f32
    %1632 = vector.broadcast %cst_306 : f32 to vector<8x128xf32>
    %1633 = arith.select %1629, %1631, %1632 : vector<8x128xi1>, vector<8x128xf32>
    %cst_307 = arith.constant -9.99999997E-7 : f32
    %1634 = vector.broadcast %cst_307 : f32 to vector<8x128xf32>
    %1635 = arith.cmpf olt, %1618, %1634 : vector<8x128xf32>
    %cst_308 = arith.constant 1.000000e+00 : f32
    %1636 = vector.broadcast %cst_308 : f32 to vector<8x128xf32>
    %1637 = arith.minimumf %1636, %1627 : vector<8x128xf32>
    %cst_309 = arith.constant 1.000000e+00 : f32
    %1638 = vector.broadcast %cst_309 : f32 to vector<8x128xf32>
    %1639 = arith.select %1635, %1637, %1638 : vector<8x128xi1>, vector<8x128xf32>
    %1640 = math.absf %1618 : vector<8x128xf32>
    %cst_310 = arith.constant 9.99999997E-7 : f32
    %1641 = vector.broadcast %cst_310 : f32 to vector<8x128xf32>
    %1642 = arith.cmpf ole, %1640, %1641 : vector<8x128xf32>
    %cst_311 = arith.constant -9.99999997E-7 : f32
    %1643 = vector.broadcast %cst_311 : f32 to vector<8x128xf32>
    %1644 = arith.cmpf olt, %1608, %1643 : vector<8x128xf32>
    %1645 = arith.andi %1642, %1644 : vector<8x128xi1>
    %cst_312 = arith.constant -1.000000e+00 : f32
    %1646 = vector.broadcast %cst_312 : f32 to vector<8x128xf32>
    %1647 = arith.select %1645, %1646, %1639 : vector<8x128xi1>, vector<8x128xf32>
    %1648 = vector.broadcast %967 : vector<8x1xf32> to vector<8x128xf32>
    %1649 = vector.broadcast %120 : vector<1x128xf32> to vector<8x128xf32>
    %1650 = arith.mulf %1648, %1649 : vector<8x128xf32>
    %1651 = vector.broadcast %968 : vector<8x1xf32> to vector<8x128xf32>
    %1652 = vector.broadcast %116 : vector<1x128xf32> to vector<8x128xf32>
    %1653 = arith.mulf %1651, %1652 : vector<8x128xf32>
    %1654 = arith.subf %1650, %1653 : vector<8x128xf32>
    %1655 = vector.broadcast %971 : vector<8x1xf32> to vector<8x128xf32>
    %1656 = arith.subf %1654, %1655 : vector<8x128xf32>
    %1657 = vector.broadcast %967 : vector<8x1xf32> to vector<8x128xf32>
    %1658 = vector.broadcast %84 : vector<1x128xf32> to vector<8x128xf32>
    %1659 = arith.mulf %1657, %1658 : vector<8x128xf32>
    %1660 = vector.broadcast %968 : vector<8x1xf32> to vector<8x128xf32>
    %1661 = vector.broadcast %80 : vector<1x128xf32> to vector<8x128xf32>
    %1662 = arith.mulf %1660, %1661 : vector<8x128xf32>
    %1663 = arith.subf %1659, %1662 : vector<8x128xf32>
    %1664 = vector.broadcast %971 : vector<8x1xf32> to vector<8x128xf32>
    %1665 = arith.subf %1663, %1664 : vector<8x128xf32>
    %1666 = arith.subf %1665, %1656 : vector<8x128xf32>
    %1667 = math.absf %1666 : vector<8x128xf32>
    %cst_313 = arith.constant 9.99999997E-7 : f32
    %1668 = vector.broadcast %cst_313 : f32 to vector<8x128xf32>
    %1669 = arith.cmpf olt, %1667, %1668 : vector<8x128xf32>
    %cst_314 = arith.constant 1.000000e+00 : f32
    %1670 = vector.broadcast %cst_314 : f32 to vector<8x128xf32>
    %1671 = arith.select %1669, %1670, %1666 : vector<8x128xi1>, vector<8x128xf32>
    %cst_315 = arith.constant 0.000000e+00 : f32
    %1672 = vector.broadcast %cst_315 : f32 to vector<8x128xf32>
    %1673 = arith.subf %1672, %1656 : vector<8x128xf32>
    %1674 = tpu.reciprocal %1671 {approx = true} : vector<8x128xf32> -> vector<8x128xf32>
    %1675 = arith.mulf %1673, %1674 : vector<8x128xf32>
    %cst_316 = arith.constant 9.99999997E-7 : f32
    %1676 = vector.broadcast %cst_316 : f32 to vector<8x128xf32>
    %1677 = arith.cmpf ogt, %1666, %1676 : vector<8x128xf32>
    %1678 = arith.maximumf %1633, %1675 : vector<8x128xf32>
    %1679 = arith.select %1677, %1678, %1633 : vector<8x128xi1>, vector<8x128xf32>
    %cst_317 = arith.constant -9.99999997E-7 : f32
    %1680 = vector.broadcast %cst_317 : f32 to vector<8x128xf32>
    %1681 = arith.cmpf olt, %1666, %1680 : vector<8x128xf32>
    %1682 = arith.minimumf %1647, %1675 : vector<8x128xf32>
    %1683 = arith.select %1681, %1682, %1647 : vector<8x128xi1>, vector<8x128xf32>
    %1684 = math.absf %1666 : vector<8x128xf32>
    %cst_318 = arith.constant 9.99999997E-7 : f32
    %1685 = vector.broadcast %cst_318 : f32 to vector<8x128xf32>
    %1686 = arith.cmpf ole, %1684, %1685 : vector<8x128xf32>
    %cst_319 = arith.constant -9.99999997E-7 : f32
    %1687 = vector.broadcast %cst_319 : f32 to vector<8x128xf32>
    %1688 = arith.cmpf olt, %1656, %1687 : vector<8x128xf32>
    %1689 = arith.andi %1686, %1688 : vector<8x128xi1>
    %cst_320 = arith.constant -1.000000e+00 : f32
    %1690 = vector.broadcast %cst_320 : f32 to vector<8x128xf32>
    %1691 = arith.select %1689, %1690, %1683 : vector<8x128xi1>, vector<8x128xf32>
    %1692 = vector.broadcast %972 : vector<8x1xf32> to vector<8x128xf32>
    %1693 = vector.broadcast %120 : vector<1x128xf32> to vector<8x128xf32>
    %1694 = arith.mulf %1692, %1693 : vector<8x128xf32>
    %1695 = vector.broadcast %973 : vector<8x1xf32> to vector<8x128xf32>
    %1696 = vector.broadcast %116 : vector<1x128xf32> to vector<8x128xf32>
    %1697 = arith.mulf %1695, %1696 : vector<8x128xf32>
    %1698 = arith.subf %1694, %1697 : vector<8x128xf32>
    %1699 = vector.broadcast %976 : vector<8x1xf32> to vector<8x128xf32>
    %1700 = arith.subf %1698, %1699 : vector<8x128xf32>
    %1701 = vector.broadcast %972 : vector<8x1xf32> to vector<8x128xf32>
    %1702 = vector.broadcast %84 : vector<1x128xf32> to vector<8x128xf32>
    %1703 = arith.mulf %1701, %1702 : vector<8x128xf32>
    %1704 = vector.broadcast %973 : vector<8x1xf32> to vector<8x128xf32>
    %1705 = vector.broadcast %80 : vector<1x128xf32> to vector<8x128xf32>
    %1706 = arith.mulf %1704, %1705 : vector<8x128xf32>
    %1707 = arith.subf %1703, %1706 : vector<8x128xf32>
    %1708 = vector.broadcast %976 : vector<8x1xf32> to vector<8x128xf32>
    %1709 = arith.subf %1707, %1708 : vector<8x128xf32>
    %1710 = arith.subf %1709, %1700 : vector<8x128xf32>
    %1711 = math.absf %1710 : vector<8x128xf32>
    %cst_321 = arith.constant 9.99999997E-7 : f32
    %1712 = vector.broadcast %cst_321 : f32 to vector<8x128xf32>
    %1713 = arith.cmpf olt, %1711, %1712 : vector<8x128xf32>
    %cst_322 = arith.constant 1.000000e+00 : f32
    %1714 = vector.broadcast %cst_322 : f32 to vector<8x128xf32>
    %1715 = arith.select %1713, %1714, %1710 : vector<8x128xi1>, vector<8x128xf32>
    %cst_323 = arith.constant 0.000000e+00 : f32
    %1716 = vector.broadcast %cst_323 : f32 to vector<8x128xf32>
    %1717 = arith.subf %1716, %1700 : vector<8x128xf32>
    %1718 = tpu.reciprocal %1715 {approx = true} : vector<8x128xf32> -> vector<8x128xf32>
    %1719 = arith.mulf %1717, %1718 : vector<8x128xf32>
    %cst_324 = arith.constant 9.99999997E-7 : f32
    %1720 = vector.broadcast %cst_324 : f32 to vector<8x128xf32>
    %1721 = arith.cmpf ogt, %1710, %1720 : vector<8x128xf32>
    %1722 = arith.maximumf %1679, %1719 : vector<8x128xf32>
    %1723 = arith.select %1721, %1722, %1679 : vector<8x128xi1>, vector<8x128xf32>
    %cst_325 = arith.constant -9.99999997E-7 : f32
    %1724 = vector.broadcast %cst_325 : f32 to vector<8x128xf32>
    %1725 = arith.cmpf olt, %1710, %1724 : vector<8x128xf32>
    %1726 = arith.minimumf %1691, %1719 : vector<8x128xf32>
    %1727 = arith.select %1725, %1726, %1691 : vector<8x128xi1>, vector<8x128xf32>
    %1728 = math.absf %1710 : vector<8x128xf32>
    %cst_326 = arith.constant 9.99999997E-7 : f32
    %1729 = vector.broadcast %cst_326 : f32 to vector<8x128xf32>
    %1730 = arith.cmpf ole, %1728, %1729 : vector<8x128xf32>
    %cst_327 = arith.constant -9.99999997E-7 : f32
    %1731 = vector.broadcast %cst_327 : f32 to vector<8x128xf32>
    %1732 = arith.cmpf olt, %1700, %1731 : vector<8x128xf32>
    %1733 = arith.andi %1730, %1732 : vector<8x128xi1>
    %cst_328 = arith.constant -1.000000e+00 : f32
    %1734 = vector.broadcast %cst_328 : f32 to vector<8x128xf32>
    %1735 = arith.select %1733, %1734, %1727 : vector<8x128xi1>, vector<8x128xf32>
    %1736 = vector.broadcast %977 : vector<8x1xf32> to vector<8x128xf32>
    %1737 = vector.broadcast %120 : vector<1x128xf32> to vector<8x128xf32>
    %1738 = arith.mulf %1736, %1737 : vector<8x128xf32>
    %1739 = vector.broadcast %978 : vector<8x1xf32> to vector<8x128xf32>
    %1740 = vector.broadcast %116 : vector<1x128xf32> to vector<8x128xf32>
    %1741 = arith.mulf %1739, %1740 : vector<8x128xf32>
    %1742 = arith.subf %1738, %1741 : vector<8x128xf32>
    %1743 = vector.broadcast %981 : vector<8x1xf32> to vector<8x128xf32>
    %1744 = arith.subf %1742, %1743 : vector<8x128xf32>
    %1745 = vector.broadcast %977 : vector<8x1xf32> to vector<8x128xf32>
    %1746 = vector.broadcast %84 : vector<1x128xf32> to vector<8x128xf32>
    %1747 = arith.mulf %1745, %1746 : vector<8x128xf32>
    %1748 = vector.broadcast %978 : vector<8x1xf32> to vector<8x128xf32>
    %1749 = vector.broadcast %80 : vector<1x128xf32> to vector<8x128xf32>
    %1750 = arith.mulf %1748, %1749 : vector<8x128xf32>
    %1751 = arith.subf %1747, %1750 : vector<8x128xf32>
    %1752 = vector.broadcast %981 : vector<8x1xf32> to vector<8x128xf32>
    %1753 = arith.subf %1751, %1752 : vector<8x128xf32>
    %1754 = arith.subf %1753, %1744 : vector<8x128xf32>
    %1755 = math.absf %1754 : vector<8x128xf32>
    %cst_329 = arith.constant 9.99999997E-7 : f32
    %1756 = vector.broadcast %cst_329 : f32 to vector<8x128xf32>
    %1757 = arith.cmpf olt, %1755, %1756 : vector<8x128xf32>
    %cst_330 = arith.constant 1.000000e+00 : f32
    %1758 = vector.broadcast %cst_330 : f32 to vector<8x128xf32>
    %1759 = arith.select %1757, %1758, %1754 : vector<8x128xi1>, vector<8x128xf32>
    %cst_331 = arith.constant 0.000000e+00 : f32
    %1760 = vector.broadcast %cst_331 : f32 to vector<8x128xf32>
    %1761 = arith.subf %1760, %1744 : vector<8x128xf32>
    %1762 = tpu.reciprocal %1759 {approx = true} : vector<8x128xf32> -> vector<8x128xf32>
    %1763 = arith.mulf %1761, %1762 : vector<8x128xf32>
    %cst_332 = arith.constant 9.99999997E-7 : f32
    %1764 = vector.broadcast %cst_332 : f32 to vector<8x128xf32>
    %1765 = arith.cmpf ogt, %1754, %1764 : vector<8x128xf32>
    %1766 = arith.maximumf %1723, %1763 : vector<8x128xf32>
    %1767 = arith.select %1765, %1766, %1723 : vector<8x128xi1>, vector<8x128xf32>
    %cst_333 = arith.constant -9.99999997E-7 : f32
    %1768 = vector.broadcast %cst_333 : f32 to vector<8x128xf32>
    %1769 = arith.cmpf olt, %1754, %1768 : vector<8x128xf32>
    %1770 = arith.minimumf %1735, %1763 : vector<8x128xf32>
    %1771 = arith.select %1769, %1770, %1735 : vector<8x128xi1>, vector<8x128xf32>
    %1772 = math.absf %1754 : vector<8x128xf32>
    %cst_334 = arith.constant 9.99999997E-7 : f32
    %1773 = vector.broadcast %cst_334 : f32 to vector<8x128xf32>
    %1774 = arith.cmpf ole, %1772, %1773 : vector<8x128xf32>
    %cst_335 = arith.constant -9.99999997E-7 : f32
    %1775 = vector.broadcast %cst_335 : f32 to vector<8x128xf32>
    %1776 = arith.cmpf olt, %1744, %1775 : vector<8x128xf32>
    %1777 = arith.andi %1774, %1776 : vector<8x128xi1>
    %cst_336 = arith.constant -1.000000e+00 : f32
    %1778 = vector.broadcast %cst_336 : f32 to vector<8x128xf32>
    %1779 = arith.select %1777, %1778, %1771 : vector<8x128xi1>, vector<8x128xf32>
    %1780 = arith.cmpf olt, %1767, %1779 : vector<8x128xf32>
    %1781 = vector.broadcast %1598 : vector<1x128xf32> to vector<8x128xf32>
    %1782 = arith.mulf %1767, %1781 : vector<8x128xf32>
    %1783 = vector.broadcast %116 : vector<1x128xf32> to vector<8x128xf32>
    %1784 = arith.addf %1783, %1782 : vector<8x128xf32>
    %1785 = vector.broadcast %1599 : vector<1x128xf32> to vector<8x128xf32>
    %1786 = arith.mulf %1767, %1785 : vector<8x128xf32>
    %1787 = vector.broadcast %120 : vector<1x128xf32> to vector<8x128xf32>
    %1788 = arith.addf %1787, %1786 : vector<8x128xf32>
    %1789 = vector.broadcast %1598 : vector<1x128xf32> to vector<8x128xf32>
    %1790 = arith.mulf %1779, %1789 : vector<8x128xf32>
    %1791 = vector.broadcast %116 : vector<1x128xf32> to vector<8x128xf32>
    %1792 = arith.addf %1791, %1790 : vector<8x128xf32>
    %1793 = vector.broadcast %1599 : vector<1x128xf32> to vector<8x128xf32>
    %1794 = arith.mulf %1779, %1793 : vector<8x128xf32>
    %1795 = vector.broadcast %120 : vector<1x128xf32> to vector<8x128xf32>
    %1796 = arith.addf %1795, %1794 : vector<8x128xf32>
    %1797 = arith.mulf %1784, %1796 : vector<8x128xf32>
    %1798 = arith.mulf %1788, %1792 : vector<8x128xf32>
    %1799 = arith.subf %1797, %1798 : vector<8x128xf32>
    %cst_337 = arith.constant 0.000000e+00 : f32
    %1800 = vector.broadcast %cst_337 : f32 to vector<8x128xf32>
    %1801 = arith.select %1780, %1799, %1800 : vector<8x128xi1>, vector<8x128xf32>
    %1802 = arith.addf %1597, %1801 : vector<8x128xf32>
    %1803 = arith.addf %961, %1802 : vector<8x128xf32>
    %1804 = arith.mulf %3, %4 : vector<8x1xf32>
    %1805 = arith.mulf %11, %12 : vector<1x128xf32>
    %cst_338 = arith.constant 5.000000e-01 : f32
    %1806 = vector.broadcast %cst_338 : f32 to vector<8x128xf32>
    %1807 = arith.mulf %1806, %1803 : vector<8x128xf32>
    %1808 = vector.broadcast %1804 : vector<8x1xf32> to vector<8x128xf32>
    %1809 = vector.broadcast %1805 : vector<1x128xf32> to vector<8x128xf32>
    %1810 = arith.minimumf %1808, %1809 : vector<8x128xf32>
    %cst_339 = arith.constant 0.000000e+00 : f32
    %1811 = vector.broadcast %cst_339 : f32 to vector<8x128xf32>
    %1812 = arith.maximumf %1811, %1807 : vector<8x128xf32>
    %1813 = arith.minimumf %1810, %1812 : vector<8x128xf32>
    %cst_340 = arith.constant 5.000000e-01 : f32
    %1814 = vector.broadcast %cst_340 : f32 to vector<8x1xf32>
    %1815 = arith.mulf %1814, %5 : vector<8x1xf32>
    %1816 = arith.addf %2, %1815 : vector<8x1xf32>
    %cst_341 = arith.constant 5.000000e-01 : f32
    %1817 = vector.broadcast %cst_341 : f32 to vector<8x1xf32>
    %1818 = arith.mulf %1817, %5 : vector<8x1xf32>
    %1819 = arith.subf %2, %1818 : vector<8x1xf32>
    %cst_342 = arith.constant 5.000000e-01 : f32
    %1820 = vector.broadcast %cst_342 : f32 to vector<1x128xf32>
    %1821 = arith.mulf %1820, %13 : vector<1x128xf32>
    %1822 = arith.addf %10, %1821 : vector<1x128xf32>
    %cst_343 = arith.constant 5.000000e-01 : f32
    %1823 = vector.broadcast %cst_343 : f32 to vector<1x128xf32>
    %1824 = arith.mulf %1823, %13 : vector<1x128xf32>
    %1825 = arith.subf %10, %1824 : vector<1x128xf32>
    %1826 = vector.broadcast %1816 : vector<8x1xf32> to vector<8x128xf32>
    %1827 = vector.broadcast %1822 : vector<1x128xf32> to vector<8x128xf32>
    %1828 = arith.minimumf %1826, %1827 : vector<8x128xf32>
    %1829 = vector.broadcast %1819 : vector<8x1xf32> to vector<8x128xf32>
    %1830 = vector.broadcast %1825 : vector<1x128xf32> to vector<8x128xf32>
    %1831 = arith.maximumf %1829, %1830 : vector<8x128xf32>
    %1832 = arith.subf %1828, %1831 : vector<8x128xf32>
    %cst_344 = arith.constant 0.000000e+00 : f32
    %1833 = vector.broadcast %cst_344 : f32 to vector<8x128xf32>
    %1834 = arith.maximumf %1832, %1833 : vector<8x128xf32>
    %1835 = arith.mulf %1813, %1834 : vector<8x128xf32>
    %1836 = arith.mulf %1804, %5 : vector<8x1xf32>
    %1837 = arith.mulf %1805, %13 : vector<1x128xf32>
    %1838 = vector.broadcast %1836 : vector<8x1xf32> to vector<8x128xf32>
    %1839 = vector.broadcast %1837 : vector<1x128xf32> to vector<8x128xf32>
    %1840 = arith.addf %1838, %1839 : vector<8x128xf32>
    %1841 = arith.subf %1840, %1835 : vector<8x128xf32>
    %cst_345 = arith.constant 9.99999997E-7 : f32
    %1842 = vector.broadcast %cst_345 : f32 to vector<8x128xf32>
    %1843 = arith.maximumf %1841, %1842 : vector<8x128xf32>
    %1844 = arith.divf %1835, %1843 : vector<8x128xf32>
    %1845 = arith.minimumf %30, %42 : vector<8x1xf32>
    %1846 = arith.minimumf %1845, %54 : vector<8x1xf32>
    %1847 = arith.minimumf %1846, %66 : vector<8x1xf32>
    %1848 = arith.maximumf %30, %42 : vector<8x1xf32>
    %1849 = arith.maximumf %1848, %54 : vector<8x1xf32>
    %1850 = arith.maximumf %1849, %66 : vector<8x1xf32>
    %1851 = arith.minimumf %34, %46 : vector<8x1xf32>
    %1852 = arith.minimumf %1851, %58 : vector<8x1xf32>
    %1853 = arith.minimumf %1852, %70 : vector<8x1xf32>
    %1854 = arith.maximumf %34, %46 : vector<8x1xf32>
    %1855 = arith.maximumf %1854, %58 : vector<8x1xf32>
    %1856 = arith.maximumf %1855, %70 : vector<8x1xf32>
    %1857 = arith.minimumf %80, %92 : vector<1x128xf32>
    %1858 = arith.minimumf %1857, %104 : vector<1x128xf32>
    %1859 = arith.minimumf %1858, %116 : vector<1x128xf32>
    %1860 = arith.maximumf %80, %92 : vector<1x128xf32>
    %1861 = arith.maximumf %1860, %104 : vector<1x128xf32>
    %1862 = arith.maximumf %1861, %116 : vector<1x128xf32>
    %1863 = arith.minimumf %84, %96 : vector<1x128xf32>
    %1864 = arith.minimumf %1863, %108 : vector<1x128xf32>
    %1865 = arith.minimumf %1864, %120 : vector<1x128xf32>
    %1866 = arith.maximumf %84, %96 : vector<1x128xf32>
    %1867 = arith.maximumf %1866, %108 : vector<1x128xf32>
    %1868 = arith.maximumf %1867, %120 : vector<1x128xf32>
    %1869 = vector.broadcast %1850 : vector<8x1xf32> to vector<8x128xf32>
    %1870 = vector.broadcast %1862 : vector<1x128xf32> to vector<8x128xf32>
    %1871 = arith.maximumf %1869, %1870 : vector<8x128xf32>
    %1872 = vector.broadcast %1847 : vector<8x1xf32> to vector<8x128xf32>
    %1873 = vector.broadcast %1859 : vector<1x128xf32> to vector<8x128xf32>
    %1874 = arith.minimumf %1872, %1873 : vector<8x128xf32>
    %1875 = arith.subf %1871, %1874 : vector<8x128xf32>
    %1876 = vector.broadcast %1856 : vector<8x1xf32> to vector<8x128xf32>
    %1877 = vector.broadcast %1868 : vector<1x128xf32> to vector<8x128xf32>
    %1878 = arith.maximumf %1876, %1877 : vector<8x128xf32>
    %1879 = vector.broadcast %1853 : vector<8x1xf32> to vector<8x128xf32>
    %1880 = vector.broadcast %1865 : vector<1x128xf32> to vector<8x128xf32>
    %1881 = arith.minimumf %1879, %1880 : vector<8x128xf32>
    %1882 = arith.subf %1878, %1881 : vector<8x128xf32>
    %1883 = vector.broadcast %1816 : vector<8x1xf32> to vector<8x128xf32>
    %1884 = vector.broadcast %1822 : vector<1x128xf32> to vector<8x128xf32>
    %1885 = arith.maximumf %1883, %1884 : vector<8x128xf32>
    %1886 = vector.broadcast %1819 : vector<8x1xf32> to vector<8x128xf32>
    %1887 = vector.broadcast %1825 : vector<1x128xf32> to vector<8x128xf32>
    %1888 = arith.minimumf %1886, %1887 : vector<8x128xf32>
    %1889 = arith.subf %1885, %1888 : vector<8x128xf32>
    %1890 = arith.mulf %1875, %1882 : vector<8x128xf32>
    %1891 = arith.mulf %1890, %1889 : vector<8x128xf32>
    %cst_346 = arith.constant 9.99999997E-7 : f32
    %1892 = vector.broadcast %cst_346 : f32 to vector<8x128xf32>
    %1893 = arith.maximumf %1891, %1892 : vector<8x128xf32>
    %cst_347 = arith.constant 1.000000e+00 : f32
    %1894 = vector.broadcast %cst_347 : f32 to vector<8x128xf32>
    %1895 = arith.subf %1894, %1844 : vector<8x128xf32>
    %1896 = arith.subf %1893, %1841 : vector<8x128xf32>
    %1897 = arith.divf %1896, %1893 : vector<8x128xf32>
    %1898 = arith.addf %1895, %1897 : vector<8x128xf32>
    %c0_348 = arith.constant 0 : index
    %c0_349 = arith.constant 0 : index
    %c0_350 = arith.constant 0 : index
    %1899 = vector.load %arg3[%c0_348, %c0_349, %c0_350] : memref<2x8x128xf32, #tpu.memory_space<vmem>>, vector<1x8x128xf32>
    %1900 = vector.shape_cast %1899 : vector<1x8x128xf32> to vector<8x128xf32>
    %1901 = vector.shape_cast %20 : vector<8x128xf32> to vector<1x8x128xf32>
    tpu.vector_store %arg3[%c0_348, %c0_349, %c0_350], %1901 {strides = array<i32>} : memref<2x8x128xf32, #tpu.memory_space<vmem>>, vector<1x8x128xf32>,
    %c1_351 = arith.constant 1 : index
    %c0_352 = arith.constant 0 : index
    %c0_353 = arith.constant 0 : index
    %1902 = vector.load %arg3[%c1_351, %c0_352, %c0_353] : memref<2x8x128xf32, #tpu.memory_space<vmem>>, vector<1x8x128xf32>
    %1903 = vector.shape_cast %1902 : vector<1x8x128xf32> to vector<8x128xf32>
    %1904 = vector.shape_cast %1898 : vector<8x128xf32> to vector<1x8x128xf32>
    tpu.vector_store %arg3[%c1_351, %c0_352, %c0_353], %1904 {strides = array<i32>} : memref<2x8x128xf32, #tpu.memory_space<vmem>>, vector<1x8x128xf32>,
    return
  }
  func.func @transform_0(%arg0: i32) -> (i32, i32) {
    %c0_i32 = arith.constant 0 : i32
    %c0_i32_0 = arith.constant 0 : i32
    %c0_i32_1 = arith.constant 0 : i32
    return %c0_i32, %c0_i32_0 : i32, i32
  }
  func.func @transform_1(%arg0: i32) -> (i32, i32) {
    %c0_i32 = arith.constant 0 : i32
    %c0_i32_0 = arith.constant 0 : i32
    %c0_i32_1 = arith.constant 0 : i32
    return %c0_i32, %c0_i32_0 : i32, i32
  }
  func.func @transform_2(%arg0: i32) -> (i32, i32, i32) {
    %c0_i32 = arith.constant 0 : i32
    %c0_i32_0 = arith.constant 0 : i32
    %c0_i32_1 = arith.constant 0 : i32
    %c0_i32_2 = arith.constant 0 : i32
    return %c0_i32, %c0_i32_0, %c0_i32_1 : i32, i32, i32
  }
}

</mosaic_0001>

<llo_original>
// kernel: _pairwise_costs_device.1
$region0: #{_pairwise_costs_device.1}
  #allocation0 [shape = 'u32[]', space=smem, size = 0x4, offset = 0x4, fixed_abs, tag = 'smem constant byte address 0x4 - core index']
  #allocation1 [shape = 'u32[144,128]{1,0:T(1,128)}', space=vmem, size = 0x12000, scoped, tag = 'internal scratch']
  %s0 = inlined_call_operand.hbm [shape: f32[8,8], index: 0, kind: input, shape index: {}]
  %s1 = inlined_call_operand.hbm [shape: f32[8,128], index: 1, kind: input, shape index: {}]
  %s2 = inlined_call_operand.hbm [shape: f32[2,8,128], index: 2, kind: output, shape index: {}]
  %s3 = sld [smem:[#allocation0]]
  $region26: #{_pairwise_costs_device.1} parent=0
    _
  %s5 = ssub.s32 1, %s3
  %s6 = scalar_select 0, %s5, %s3
  $region1: #{_pairwise_costs_device.1} parent=0
    #allocation2 [shape = 'u8[4096]{0}', space=vmem, size = 0x1000, scoped, tag = 'input window, operand 0, single buffered']
    #allocation3 [shape = 's32[1]{0}', space=sflag, size = 0x4, scoped, tag = 'scoped memory for _pairwise_costs_device.1']
    #allocation4 [shape = 's32[1]{0}', space=sflag, size = 0x4, scoped, tag = 'scoped memory for _pairwise_costs_device.1']
    #allocation5 [shape = 'u8[4096]{0}', space=vmem, size = 0x1000, scoped, tag = 'input window, operand 1, single buffered']
    #allocation6 [shape = 's32[1]{0}', space=sflag, size = 0x4, scoped, tag = 'scoped memory for _pairwise_costs_device.1']
    #allocation7 [shape = 'u8[8192]{0}', space=vmem, size = 0x2000, scoped, tag = 'output window, operand 0, single buffered']
    %7 = vsyncpa [#allocation3], 0
    %8 = vsyncpa [#allocation6], 0
    %9 = vsyncpa [#allocation4], 0
    // Predicated region
    $region2: #{_pairwise_costs_device.1} parent=1 // pred_check
      _
    $region3: #{_pairwise_costs_device.1} parent=1 // pred_check_branch
      %11 = sbr.rel (0) target = $region5
    $region4: #{_pairwise_costs_device.1} parent=1 // pred_region
      %s13 = ssub.s32 128, 128
      %14 = vsyncadd [#allocation3], %s13
      %s16 = sshll.u32 [#allocation2], 4
      %s17 = int_to_ptr.vmem [resolvable:$true] %s16
      %19 = dma.hbm_to_vmem [thread:$0]  %s0, 128, %s17, [#allocation3]
    $region5: #{_pairwise_costs_device.1} parent=1 // pred_fallthru
      _
    // Predicated region
    $region6: #{_pairwise_costs_device.1} parent=1 // pred_check
      _
    $region7: #{_pairwise_costs_device.1} parent=1 // pred_check_branch
      %21 = sbr.rel (0) target = $region9
    $region8: #{_pairwise_costs_device.1} parent=1 // pred_region
      %s23 = ssub.s32 128, 128
      %24 = vsyncadd [#allocation6], %s23
      %s26 = sshll.u32 [#allocation5], 4
      %s27 = int_to_ptr.vmem [resolvable:$true] %s26
      %29 = dma.hbm_to_vmem [thread:$0]  %s1, 128, %s27, [#allocation6]
    $region9: #{_pairwise_costs_device.1} parent=1 // pred_fallthru
      _
    // Predicated region
    $region10: #{_pairwise_costs_device.1} parent=1 // pred_check
      _
    $region11: #{_pairwise_costs_device.1} parent=1 // pred_check_branch
      %31 = sbr.rel (0) target = $region13
    $region12: #{_pairwise_costs_device.1} parent=1 // pred_region
      %32 = dma.done [#allocation3], 128
    $region13: #{_pairwise_costs_device.1} parent=1 // pred_fallthru
      _
    // Predicated region
    $region14: #{_pairwise_costs_device.1} parent=1 // pred_check
      _
    $region15: #{_pairwise_costs_device.1} parent=1 // pred_check_branch
      %34 = sbr.rel (0) target = $region17
    $region16: #{_pairwise_costs_device.1} parent=1 // pred_region
      %35 = dma.done [#allocation6], 128
    $region17: #{_pairwise_costs_device.1} parent=1 // pred_fallthru
      _
    %v36 = vld [vmem:[#allocation2] sm:$0xff]
    %v37 = vld [vmem:[#allocation5] sm:$0x1]
    %v38 = vld [vmem:[#allocation5 + $0x1] sm:$0x1]
    %v39 = vld [vmem:[#allocation5 + $0x2] sm:$0x1]
    %v40 = vld [vmem:[#allocation5 + $0x3] sm:$0x1]
    %v41 = vld [vmem:[#allocation5 + $0x4] sm:$0x1]
    %v42 = vld [vmem:[#allocation5 + $0x5] sm:$0x1]
    %v43 = vld [vmem:[#allocation5 + $0x6] sm:$0x1]
    %v44 = vld [vmem:[#allocation5 + $0x7] sm:$0x1]
    %v45 = vlaneseq
    %v46 = vshrl.u32 %v45, 7
    %v47 = vsub.s32 0, %v46
    %v48 = vrot.slane %v44, %v47
    %50 = vset.pattern.permute.xlu0 7
    %51 = vperm.xlu0 %50, %v36
    %v52 = vpop.permute.xlu0 %51
    %v54 = vsub.f32 %v48, %v52
    %v55 = vmax.f32 %v54, 0.0
    %v56 = vand.u32 2147483647, %v36
    %vm57 = vcmp.le.f32.partialorder %v56, 0.7853982
    %vm58 = vcmp.lt.s32.totalorder %v36, 0
    %v59 = vand.u32 %v36, 2139095040
    %v60 = vshrl.u32 %v59, 23
    %v61 = vsub.s32 %v60, 127
    %v62 = vand.u32 2147483647, %v36
    %v63 = vand.u32 %v62, 8388607
    %v64 = vor.u32 %v63, 8388608
    %v65 = vsub.s32 0, %v64
    %v66 = vadd.s32 %v61, 1
    %vm67 = vcmp.gt.s32.totalorder %v66, 0
    %v68 = vsel %vm67, %v66, 0
    %v69 = vshrl.u32 %v68, 5
    %v70 = vand.u32 %v68, 31
    %v71 = vsub.s32 32, %v70
    %v72 = vshrl.u32 683565275, %v71
    %v73 = vshll.u32 683565275, %v70
    %v74 = vshrl.u32 2475754826, %v71
    %v75 = vor.u32 %v73, %v74
    %v76 = vshll.u32 2475754826, %v70
    %v77 = vshrl.u32 2131351028, %v71
    %v78 = vor.u32 %v76, %v77
    %v79 = vshll.u32 2131351028, %v70
    %v80 = vshrl.u32 2102212464, %v71
    %v81 = vor.u32 %v79, %v80
    %v82 = vshll.u32 2102212464, %v70
    %v83 = vshrl.u32 920167782, %v71
    %v84 = vor.u32 %v82, %v83
    %v85 = vshll.u32 920167782, %v70
    %v86 = vshrl.u32 1326507024, %v71
    %v87 = vor.u32 %v85, %v86
    %vm88 = vcmp.lt.s32.totalorder %v69, 1
    %vm89 = vcmp.lt.s32.totalorder %v69, 2
    %vm90 = vcmp.lt.s32.totalorder %v69, 3
    %vm91 = vcmp.lt.s32.totalorder %v69, 4
    %v92 = vsel %vm88, %v72, %v75
    %v93 = vsel %vm91, %v81, 2102212464
    %v94 = vsel %vm90, %v78, %v93
    %v95 = vsel %vm89, %v92, %v94
    %v96 = vsel %vm88, %v75, %v78
    %v97 = vsel %vm91, %v84, 920167782
    %v98 = vsel %vm90, %v81, %v97
    %v99 = vsel %vm89, %v96, %v98
    %v100 = vsel %vm88, %v78, %v81
    %v101 = vsel %vm91, %v87, 1326507024
    %v102 = vsel %vm90, %v84, %v101
    %v103 = vsel %vm89, %v100, %v102
    %v104 = vshll.u32 %v64, 8
    %v105 = vmul.u32.u64.compose %v104, %v103
    %v106 = vextract.low.u32 %v105
    %v107 = vextract.high.u32 %v105
    %v108 = vmul.u32.u64.compose %v104, %v99
    %v109 = vextract.low.u32 %v108
    %v110 = vextract.high.u32 %v108
    %v111 = vmul.u32 %v104, %v95
    %v112 = vadd.s32 %v107, %v109
    %vm113 = vc.u32 %v107, %v109
    %v114 = vadd.s32 %v110, 1
    %v115 = vsel %vm113, %v114, %v110
    %v116 = vadd.s32 %v111, %v115
    %v117 = vadd.s32 %v116, 536870912
    %v118 = vshrl.u32 %v117, 30
    %v119 = vshll.u32 %v118, 30
    %v120 = vsub.s32 %v116, %v119
    %vm121 = vcmp.lt.s32.totalorder %v120, 0
    %v122 = vsub.s32 0, %v120
    %v123 = vsel %vm121, %v122, %v120
    %v124 = vclz %v123
    %v125 = vsub.s32 %v124, 2
    %vm126 = vcmp.gt.s32.totalorder 0, %v125
    %v127 = vsel %vm126, 0, %v125
    %v128 = vsub.s32 32, %v127
    %v129 = vshll.u32 %v120, %v127
    %v130 = vshrl.u32 %v112, %v128
    %v131 = vor.u32 %v129, %v130
    %v132 = vsub.s32 4294967266, %v127
    %v133 = vadd.s32 %v132, 127
    %v134 = vshll.u32 %v133, 23
    %v135 = vor.u32 4788187, %v134
    %v136 = vand.u32 2147483647, %v135
    %v138 = vcvt.s32.f32 %v131
    %v139 = vmul.f32 %v138, %v136
    %v140 = vxor.u32 %v139, 2147483648
    %v141 = vsel %vm58, %v140, %v139
    %v142 = vsub.s32 4, %v118
    %v143 = vsel %vm58, %v142, %v118
    %v144 = vsel %vm57, %v36, %v141
    %v145 = vsel %vm57, 0, %v143
    %v146 = vcosq.f32.pop %v144
    %v147 = vsinq.f32.pop %v144
    %vm148 = vweird.f32 %v36
    %v149 = vand.u32 %v145, 3
    %vm150 = vcmp.lt.s32.totalorder %v149, 2
    %vm151 = vcmp.eq.s32.totalorder %v149, 0
    %v152 = vxor.u32 %v147, 2147483648
    %v153 = vsel %vm151, %v146, %v152
    %vm154 = vcmp.eq.s32.totalorder %v149, 2
    %v155 = vxor.u32 %v146, 2147483648
    %v156 = vsel %vm154, %v155, %v147
    %v157 = vsel %vm150, %v153, %v156
    %v158 = vsel %vm148, nan, %v157
    %v159 = vand.u32 2147483647, %v36
    %vm160 = vcmp.le.f32.partialorder %v159, 0.7853982
    %vm161 = vcmp.lt.s32.totalorder %v36, 0
    %v162 = vand.u32 %v36, 2139095040
    %v163 = vshrl.u32 %v162, 23
    %v164 = vsub.s32 %v163, 127
    %v165 = vand.u32 2147483647, %v36
    %v166 = vand.u32 %v165, 8388607
    %v167 = vor.u32 %v166, 8388608
    %v168 = vsub.s32 0, %v167
    %v169 = vadd.s32 %v164, 1
    %vm170 = vcmp.gt.s32.totalorder %v169, 0
    %v171 = vsel %vm170, %v169, 0
    %v172 = vshrl.u32 %v171, 5
    %v173 = vand.u32 %v171, 31
    %v174 = vsub.s32 32, %v173
    %v175 = vshrl.u32 683565275, %v174
    %v176 = vshll.u32 683565275, %v173
    %v177 = vshrl.u32 2475754826, %v174
    %v178 = vor.u32 %v176, %v177
    %v179 = vshll.u32 2475754826, %v173
    %v180 = vshrl.u32 2131351028, %v174
    %v181 = vor.u32 %v179, %v180
    %v182 = vshll.u32 2131351028, %v173
    %v183 = vshrl.u32 2102212464, %v174
    %v184 = vor.u32 %v182, %v183
    %v185 = vshll.u32 2102212464, %v173
    %v186 = vshrl.u32 920167782, %v174
    %v187 = vor.u32 %v185, %v186
    %v188 = vshll.u32 920167782, %v173
    %v189 = vshrl.u32 1326507024, %v174
    %v190 = vor.u32 %v188, %v189
    %vm191 = vcmp.lt.s32.totalorder %v172, 1
    %vm192 = vcmp.lt.s32.totalorder %v172, 2
    %vm193 = vcmp.lt.s32.totalorder %v172, 3
    %vm194 = vcmp.lt.s32.totalorder %v172, 4
    %v195 = vsel %vm191, %v175, %v178
    %v196 = vsel %vm194, %v184, 2102212464
    %v197 = vsel %vm193, %v181, %v196
    %v198 = vsel %vm192, %v195, %v197
    %v199 = vsel %vm191, %v178, %v181
    %v200 = vsel %vm194, %v187, 920167782
    %v201 = vsel %vm193, %v184, %v200
    %v202 = vsel %vm192, %v199, %v201
    %v203 = vsel %vm191, %v181, %v184
    %v204 = vsel %vm194, %v190, 1326507024
    %v205 = vsel %vm193, %v187, %v204
    %v206 = vsel %vm192, %v203, %v205
    %v207 = vshll.u32 %v167, 8
    %v208 = vmul.u32.u64.compose %v207, %v206
    %v209 = vextract.low.u32 %v208
    %v210 = vextract.high.u32 %v208
    %v211 = vmul.u32.u64.compose %v207, %v202
    %v212 = vextract.low.u32 %v211
    %v213 = vextract.high.u32 %v211
    %v214 = vmul.u32 %v207, %v198
    %v215 = vadd.s32 %v210, %v212
    %vm216 = vc.u32 %v210, %v212
    %v217 = vadd.s32 %v213, 1
    %v218 = vsel %vm216, %v217, %v213
    %v219 = vadd.s32 %v214, %v218
    %v220 = vadd.s32 %v219, 536870912
    %v221 = vshrl.u32 %v220, 30
    %v222 = vshll.u32 %v221, 30
    %v223 = vsub.s32 %v219, %v222
    %vm224 = vcmp.lt.s32.totalorder %v223, 0
    %v225 = vsub.s32 0, %v223
    %v226 = vsel %vm224, %v225, %v223
    %v227 = vclz %v226
    %v228 = vsub.s32 %v227, 2
    %vm229 = vcmp.gt.s32.totalorder 0, %v228
    %v230 = vsel %vm229, 0, %v228
    %v231 = vsub.s32 32, %v230
    %v232 = vshll.u32 %v223, %v230
    %v233 = vshrl.u32 %v215, %v231
    %v234 = vor.u32 %v232, %v233
    %v235 = vsub.s32 4294967266, %v230
    %v236 = vadd.s32 %v235, 127
    %v237 = vshll.u32 %v236, 23
    %v238 = vor.u32 4788187, %v237
    %v239 = vand.u32 2147483647, %v238
    %v241 = vcvt.s32.f32 %v234
    %v242 = vmul.f32 %v241, %v239
    %v243 = vxor.u32 %v242, 2147483648
    %v244 = vsel %vm161, %v243, %v242
    %v245 = vsub.s32 4, %v221
    %v246 = vsel %vm161, %v245, %v221
    %v247 = vsel %vm160, %v36, %v244
    %v248 = vsel %vm160, 0, %v246
    %v249 = vcosq.f32.pop %v247
    %v250 = vsinq.f32.pop %v247
    %vm251 = vweird.f32 %v36
    %v252 = vadd.s32 %v248, 3
    %v253 = vand.u32 %v252, 3
    %vm254 = vcmp.lt.s32.totalorder %v253, 2
    %vm255 = vcmp.eq.s32.totalorder %v253, 0
    %v256 = vxor.u32 %v250, 2147483648
    %v257 = vsel %vm255, %v249, %v256
    %vm258 = vcmp.eq.s32.totalorder %v253, 2
    %v259 = vxor.u32 %v249, 2147483648
    %v260 = vsel %vm258, %v259, %v250
    %v261 = vsel %vm254, %v257, %v260
    %v262 = vsel %vm251, nan, %v261
    %v263 = vmul.f32 %v36, 0.5
    %265 = vrot.lane.b32.xlu0 %v158, 125
    %v266 = vpop.permute.xlu0 %265
    %v268 = vmul.f32 %v263, %v266
    %270 = vrot.lane.b32.xlu0 %v268, 125
    %v271 = vpop.permute.xlu0 %270
    %v273 = vadd.f32 %v36, %v271
    %275 = vrot.lane.b32.xlu0 %v262, 126
    %v276 = vpop.permute.xlu0 %275
    %v278 = vmul.f32 %v263, %v276
    %280 = vrot.lane.b32.xlu0 %v278, 124
    %v281 = vpop.permute.xlu0 %280
    %v283 = vsub.f32 %v273, %v281
    %284 = vrot.lane.b32.xlu0 %v262, 125
    %v285 = vpop.permute.xlu0 %284
    %v287 = vmul.f32 %v263, %v285
    %289 = vrot.lane.b32.xlu0 %v287, 126
    %v290 = vpop.permute.xlu0 %289
    %v292 = vadd.f32 %v36, %v290
    %293 = vrot.lane.b32.xlu0 %v158, 126
    %v294 = vpop.permute.xlu0 %293
    %v296 = vmul.f32 %v263, %v294
    %298 = vrot.lane.b32.xlu0 %v296, 125
    %v299 = vpop.permute.xlu0 %298
    %v301 = vadd.f32 %v292, %v299
    %v302 = vmul.f32 %v36, -0.5
    %v303 = vmul.f32 %v302, %v266
    %305 = vrot.lane.b32.xlu0 %v303, 125
    %v306 = vpop.permute.xlu0 %305
    %v308 = vadd.f32 %v36, %v306
    %v309 = vsub.f32 %v308, %v281
    %v310 = vmul.f32 %v302, %v285
    %312 = vrot.lane.b32.xlu0 %v310, 126
    %v313 = vpop.permute.xlu0 %312
    %v315 = vadd.f32 %v36, %v313
    %v316 = vadd.f32 %v315, %v299
    %v317 = vmul.f32 %v302, %v276
    %319 = vrot.lane.b32.xlu0 %v317, 124
    %v320 = vpop.permute.xlu0 %319
    %v322 = vsub.f32 %v308, %v320
    %v323 = vmul.f32 %v302, %v294
    %325 = vrot.lane.b32.xlu0 %v323, 125
    %v326 = vpop.permute.xlu0 %325
    %v328 = vadd.f32 %v315, %v326
    %v329 = vsub.f32 %v273, %v320
    %v330 = vadd.f32 %v292, %v326
    %v331 = vand.u32 2147483647, %v43
    %vm332 = vcmp.le.f32.partialorder %v331, 0.7853982
    %vm333 = vcmp.lt.s32.totalorder %v43, 0
    %v334 = vand.u32 %v43, 2139095040
    %v335 = vshrl.u32 %v334, 23
    %v336 = vsub.s32 %v335, 127
    %v337 = vand.u32 2147483647, %v43
    %v338 = vand.u32 %v337, 8388607
    %v339 = vor.u32 %v338, 8388608
    %v340 = vsub.s32 0, %v339
    %v341 = vadd.s32 %v336, 1
    %vm342 = vcmp.gt.s32.totalorder %v341, 0
    %v343 = vsel %vm342, %v341, 0
    %v344 = vshrl.u32 %v343, 5
    %v345 = vand.u32 %v343, 31
    %v346 = vsub.s32 32, %v345
    %v347 = vshrl.u32 683565275, %v346
    %v348 = vshll.u32 683565275, %v345
    %v349 = vshrl.u32 2475754826, %v346
    %v350 = vor.u32 %v348, %v349
    %v351 = vshll.u32 2475754826, %v345
    %v352 = vshrl.u32 2131351028, %v346
    %v353 = vor.u32 %v351, %v352
    %v354 = vshll.u32 2131351028, %v345
    %v355 = vshrl.u32 2102212464, %v346
    %v356 = vor.u32 %v354, %v355
    %v357 = vshll.u32 2102212464, %v345
    %v358 = vshrl.u32 920167782, %v346
    %v359 = vor.u32 %v357, %v358
    %v360 = vshll.u32 920167782, %v345
    %v361 = vshrl.u32 1326507024, %v346
    %v362 = vor.u32 %v360, %v361
    %vm363 = vcmp.lt.s32.totalorder %v344, 1
    %vm364 = vcmp.lt.s32.totalorder %v344, 2
    %vm365 = vcmp.lt.s32.totalorder %v344, 3
    %vm366 = vcmp.lt.s32.totalorder %v344, 4
    %v367 = vsel %vm363, %v347, %v350
    %v368 = vsel %vm366, %v356, 2102212464
    %v369 = vsel %vm365, %v353, %v368
    %v370 = vsel %vm364, %v367, %v369
    %v371 = vsel %vm363, %v350, %v353
    %v372 = vsel %vm366, %v359, 920167782
    %v373 = vsel %vm365, %v356, %v372
    %v374 = vsel %vm364, %v371, %v373
    %v375 = vsel %vm363, %v353, %v356
    %v376 = vsel %vm366, %v362, 1326507024
    %v377 = vsel %vm365, %v359, %v376
    %v378 = vsel %vm364, %v375, %v377
    %v379 = vshll.u32 %v339, 8
    %v380 = vmul.u32.u64.compose %v379, %v378
    %v381 = vextract.low.u32 %v380
    %v382 = vextract.high.u32 %v380
    %v383 = vmul.u32.u64.compose %v379, %v374
    %v384 = vextract.low.u32 %v383
    %v385 = vextract.high.u32 %v383
    %v386 = vmul.u32 %v379, %v370
    %v387 = vadd.s32 %v382, %v384
    %vm388 = vc.u32 %v382, %v384
    %v389 = vadd.s32 %v385, 1
    %v390 = vsel %vm388, %v389, %v385
    %v391 = vadd.s32 %v386, %v390
    %v392 = vadd.s32 %v391, 536870912
    %v393 = vshrl.u32 %v392, 30
    %v394 = vshll.u32 %v393, 30
    %v395 = vsub.s32 %v391, %v394
    %vm396 = vcmp.lt.s32.totalorder %v395, 0
    %v397 = vsub.s32 0, %v395
    %v398 = vsel %vm396, %v397, %v395
    %v399 = vclz %v398
    %v400 = vsub.s32 %v399, 2
    %vm401 = vcmp.gt.s32.totalorder 0, %v400
    %v402 = vsel %vm401, 0, %v400
    %v403 = vsub.s32 32, %v402
    %v404 = vshll.u32 %v395, %v402
    %v405 = vshrl.u32 %v387, %v403
    %v406 = vor.u32 %v404, %v405
    %v407 = vsub.s32 4294967266, %v402
    %v408 = vadd.s32 %v407, 127
    %v409 = vshll.u32 %v408, 23
    %v410 = vor.u32 4788187, %v409
    %v411 = vand.u32 2147483647, %v410
    %v413 = vcvt.s32.f32 %v406
    %v414 = vmul.f32 %v413, %v411
    %v415 = vxor.u32 %v414, 2147483648
    %v416 = vsel %vm333, %v415, %v414
    %v417 = vsub.s32 4, %v393
    %v418 = vsel %vm333, %v417, %v393
    %v419 = vsel %vm332, %v43, %v416
    %v420 = vsel %vm332, 0, %v418
    %v421 = vcosq.f32.pop %v419
    %v422 = vsinq.f32.pop %v419
    %vm423 = vweird.f32 %v43
    %v424 = vand.u32 %v420, 3
    %vm425 = vcmp.lt.s32.totalorder %v424, 2
    %vm426 = vcmp.eq.s32.totalorder %v424, 0
    %v427 = vxor.u32 %v422, 2147483648
    %v428 = vsel %vm426, %v421, %v427
    %vm429 = vcmp.eq.s32.totalorder %v424, 2
    %v430 = vxor.u32 %v421, 2147483648
    %v431 = vsel %vm429, %v430, %v422
    %v432 = vsel %vm425, %v428, %v431
    %v433 = vsel %vm423, nan, %v432
    %v434 = vand.u32 2147483647, %v43
    %vm435 = vcmp.le.f32.partialorder %v434, 0.7853982
    %vm436 = vcmp.lt.s32.totalorder %v43, 0
    %v437 = vand.u32 %v43, 2139095040
    %v438 = vshrl.u32 %v437, 23
    %v439 = vsub.s32 %v438, 127
    %v440 = vand.u32 2147483647, %v43
    %v441 = vand.u32 %v440, 8388607
    %v442 = vor.u32 %v441, 8388608
    %v443 = vsub.s32 0, %v442
    %v444 = vadd.s32 %v439, 1
    %vm445 = vcmp.gt.s32.totalorder %v444, 0
    %v446 = vsel %vm445, %v444, 0
    %v447 = vshrl.u32 %v446, 5
    %v448 = vand.u32 %v446, 31
    %v449 = vsub.s32 32, %v448
    %v450 = vshrl.u32 683565275, %v449
    %v451 = vshll.u32 683565275, %v448
    %v452 = vshrl.u32 2475754826, %v449
    %v453 = vor.u32 %v451, %v452
    %v454 = vshll.u32 2475754826, %v448
    %v455 = vshrl.u32 2131351028, %v449
    %v456 = vor.u32 %v454, %v455
    %v457 = vshll.u32 2131351028, %v448
    %v458 = vshrl.u32 2102212464, %v449
    %v459 = vor.u32 %v457, %v458
    %v460 = vshll.u32 2102212464, %v448
    %v461 = vshrl.u32 920167782, %v449
    %v462 = vor.u32 %v460, %v461
    %v463 = vshll.u32 920167782, %v448
    %v464 = vshrl.u32 1326507024, %v449
    %v465 = vor.u32 %v463, %v464
    %vm466 = vcmp.lt.s32.totalorder %v447, 1
    %vm467 = vcmp.lt.s32.totalorder %v447, 2
    %vm468 = vcmp.lt.s32.totalorder %v447, 3
    %vm469 = vcmp.lt.s32.totalorder %v447, 4
    %v470 = vsel %vm466, %v450, %v453
    %v471 = vsel %vm469, %v459, 2102212464
    %v472 = vsel %vm468, %v456, %v471
    %v473 = vsel %vm467, %v470, %v472
    %v474 = vsel %vm466, %v453, %v456
    %v475 = vsel %vm469, %v462, 920167782
    %v476 = vsel %vm468, %v459, %v475
    %v477 = vsel %vm467, %v474, %v476
    %v478 = vsel %vm466, %v456, %v459
    %v479 = vsel %vm469, %v465, 1326507024
    %v480 = vsel %vm468, %v462, %v479
    %v481 = vsel %vm467, %v478, %v480
    %v482 = vshll.u32 %v442, 8
    %v483 = vmul.u32.u64.compose %v482, %v481
    %v484 = vextract.low.u32 %v483
    %v485 = vextract.high.u32 %v483
    %v486 = vmul.u32.u64.compose %v482, %v477
    %v487 = vextract.low.u32 %v486
    %v488 = vextract.high.u32 %v486
    %v489 = vmul.u32 %v482, %v473
    %v490 = vadd.s32 %v485, %v487
    %vm491 = vc.u32 %v485, %v487
    %v492 = vadd.s32 %v488, 1
    %v493 = vsel %vm491, %v492, %v488
    %v494 = vadd.s32 %v489, %v493
    %v495 = vadd.s32 %v494, 536870912
    %v496 = vshrl.u32 %v495, 30
    %v497 = vshll.u32 %v496, 30
    %v498 = vsub.s32 %v494, %v497
    %vm499 = vcmp.lt.s32.totalorder %v498, 0
    %v500 = vsub.s32 0, %v498
    %v501 = vsel %vm499, %v500, %v498
    %v502 = vclz %v501
    %v503 = vsub.s32 %v502, 2
    %vm504 = vcmp.gt.s32.totalorder 0, %v503
    %v505 = vsel %vm504, 0, %v503
    %v506 = vsub.s32 32, %v505
    %v507 = vshll.u32 %v498, %v505
    %v508 = vshrl.u32 %v490, %v506
    %v509 = vor.u32 %v507, %v508
    %v510 = vsub.s32 4294967266, %v505
    %v511 = vadd.s32 %v510, 127
    %v512 = vshll.u32 %v511, 23
    %v513 = vor.u32 4788187, %v512
    %v514 = vand.u32 2147483647, %v513
    %v516 = vcvt.s32.f32 %v509
    %v517 = vmul.f32 %v516, %v514
    %v518 = vxor.u32 %v517, 2147483648
    %v519 = vsel %vm436, %v518, %v517
    %v520 = vsub.s32 4, %v496
    %v521 = vsel %vm436, %v520, %v496
    %v522 = vsel %vm435, %v43, %v519
    %v523 = vsel %vm435, 0, %v521
    %v524 = vcosq.f32.pop %v522
    %v525 = vsinq.f32.pop %v522
    %vm526 = vweird.f32 %v43
    %v527 = vadd.s32 %v523, 3
    %v528 = vand.u32 %v527, 3
    %vm529 = vcmp.lt.s32.totalorder %v528, 2
    %vm530 = vcmp.eq.s32.totalorder %v528, 0
    %v531 = vxor.u32 %v525, 2147483648
    %v532 = vsel %vm530, %v524, %v531
    %vm533 = vcmp.eq.s32.totalorder %v528, 2
    %v534 = vxor.u32 %v524, 2147483648
    %v535 = vsel %vm533, %v534, %v525
    %v536 = vsel %vm529, %v532, %v535
    %v537 = vsel %vm526, nan, %v536
    %v538 = vmul.f32 %v40, 0.5
    %v539 = vmul.f32 %v41, 0.5
    %v540 = vmul.f32 %v538, %v433
    %v541 = vadd.f32 %v37, %v540
    %v542 = vmul.f32 %v539, %v537
    %v543 = vsub.f32 %v541, %v542
    %v544 = vmul.f32 %v538, %v537
    %v545 = vadd.f32 %v38, %v544
    %v546 = vmul.f32 %v539, %v433
    %v547 = vadd.f32 %v545, %v546
    %v548 = vmul.f32 %v40, -0.5
    %v549 = vmul.f32 %v548, %v433
    %v550 = vadd.f32 %v37, %v549
    %v551 = vsub.f32 %v550, %v542
    %v552 = vmul.f32 %v548, %v537
    %v553 = vadd.f32 %v38, %v552
    %v554 = vadd.f32 %v553, %v546
    %v555 = vmul.f32 %v41, -0.5
    %v556 = vmul.f32 %v555, %v537
    %v557 = vsub.f32 %v550, %v556
    %v558 = vmul.f32 %v555, %v433
    %v559 = vadd.f32 %v553, %v558
    %v560 = vsub.f32 %v541, %v556
    %v561 = vadd.f32 %v545, %v558
    %v562 = vsub.f32 %v551, %v543
    %v563 = vsub.f32 %v554, %v547
    %v564 = vmul.f32 %v562, %v547
    %v565 = vmul.f32 %v563, %v543
    %v566 = vsub.f32 %v564, %v565
    %v567 = vsub.f32 %v557, %v551
    %v568 = vsub.f32 %v559, %v554
    %v569 = vmul.f32 %v567, %v554
    %v570 = vmul.f32 %v568, %v551
    %v571 = vsub.f32 %v569, %v570
    %v572 = vsub.f32 %v560, %v557
    %v573 = vsub.f32 %v561, %v559
    %v574 = vmul.f32 %v572, %v559
    %v575 = vmul.f32 %v573, %v557
    %v576 = vsub.f32 %v574, %v575
    %v577 = vsub.f32 %v543, %v560
    %v578 = vsub.f32 %v547, %v561
    %v579 = vmul.f32 %v577, %v561
    %v580 = vmul.f32 %v578, %v560
    %v581 = vsub.f32 %v579, %v580
    %v582 = vsub.f32 %v309, %v283
    %v583 = vsub.f32 %v316, %v301
    %v584 = vlaneseq
    %v585 = vshrl.u32 %v584, 7
    %v586 = vsub.s32 0, %v585
    %v587 = vrot.slane %v562, %v586
    %589 = vset.pattern.permute.xlu0 1
    %590 = vperm.xlu0 %589, %v301
    %v591 = vpop.permute.xlu0 %590
    %v593 = vmul.f32 %v587, %v591
    %v594 = vlaneseq
    %v595 = vshrl.u32 %v594, 7
    %v596 = vsub.s32 0, %v595
    %v597 = vrot.slane %v563, %v596
    %599 = vset.pattern.permute.xlu0 0
    %600 = vperm.xlu0 %599, %v283
    %v601 = vpop.permute.xlu0 %600
    %v603 = vmul.f32 %v597, %v601
    %v604 = vsub.f32 %v593, %v603
    %v605 = vlaneseq
    %v606 = vshrl.u32 %v605, 7
    %v607 = vsub.s32 0, %v606
    %v608 = vrot.slane %v566, %v607
    %v609 = vsub.f32 %v604, %v608
    %611 = vset.pattern.permute.xlu0 1
    %612 = vperm.xlu0 %611, %v316
    %v613 = vpop.permute.xlu0 %612
    %v615 = vmul.f32 %v587, %v613
    %617 = vset.pattern.permute.xlu0 0
    %618 = vperm.xlu0 %617, %v309
    %v619 = vpop.permute.xlu0 %618
    %v621 = vmul.f32 %v597, %v619
    %v622 = vsub.f32 %v615, %v621
    %v623 = vsub.f32 %v622, %v608
    %v624 = vsub.f32 %v623, %v609
    %v625 = vand.u32 2147483647, %v624
    %vm626 = vcmp.lt.f32.partialorder %v625, 1e-06
    %v627 = vsel %vm626, 1.0, %v624
    %v628 = vsub.f32 0.0, %v609
    %v629 = vrcp.pop %v627
    %v630 = vmul.f32 %v628, %v629
    %vm631 = vcmp.gt.f32.partialorder %v624, 1e-06
    %v632 = vmax.f32 %v630, 0.0
    %v633 = vsel %vm631, %v632, 0.0
    %vm634 = vcmp.lt.f32.partialorder %v624, -1e-06
    %v635 = vmin.f32 %v630, 1.0
    %v636 = vsel %vm634, %v635, 1.0
    %vm637 = vcmp.le.f32.partialorder %v625, 1e-06
    %vm638 = vcmp.lt.f32.partialorder %v609, -1e-06
    %vm639 = vmand %vm637, %vm638
    %v640 = vsel %vm639, -1.0, %v636
    %v641 = vlaneseq
    %v642 = vshrl.u32 %v641, 7
    %v643 = vsub.s32 0, %v642
    %v644 = vrot.slane %v567, %v643
    %v645 = vmul.f32 %v644, %v591
    %v646 = vlaneseq
    %v647 = vshrl.u32 %v646, 7
    %v648 = vsub.s32 0, %v647
    %v649 = vrot.slane %v568, %v648
    %v650 = vmul.f32 %v649, %v601
    %v651 = vsub.f32 %v645, %v650
    %v652 = vlaneseq
    %v653 = vshrl.u32 %v652, 7
    %v654 = vsub.s32 0, %v653
    %v655 = vrot.slane %v571, %v654
    %v656 = vsub.f32 %v651, %v655
    %v657 = vmul.f32 %v644, %v613
    %v658 = vmul.f32 %v649, %v619
    %v659 = vsub.f32 %v657, %v658
    %v660 = vsub.f32 %v659, %v655
    %v661 = vsub.f32 %v660, %v656
    %v662 = vand.u32 2147483647, %v661
    %vm663 = vcmp.lt.f32.partialorder %v662, 1e-06
    %v664 = vsel %vm663, 1.0, %v661
    %v665 = vsub.f32 0.0, %v656
    %v666 = vrcp.pop %v664
    %v667 = vmul.f32 %v665, %v666
    %vm668 = vcmp.gt.f32.partialorder %v661, 1e-06
    %v669 = vmax.f32 %v633, %v667
    %v670 = vsel %vm668, %v669, %v633
    %vm671 = vcmp.lt.f32.partialorder %v661, -1e-06
    %v672 = vmin.f32 %v640, %v667
    %v673 = vsel %vm671, %v672, %v640
    %vm674 = vcmp.le.f32.partialorder %v662, 1e-06
    %vm675 = vcmp.lt.f32.partialorder %v656, -1e-06
    %vm676 = vmand %vm674, %vm675
    %v677 = vsel %vm676, -1.0, %v673
    %v678 = vlaneseq
    %v679 = vshrl.u32 %v678, 7
    %v680 = vsub.s32 0, %v679
    %v681 = vrot.slane %v572, %v680
    %v682 = vmul.f32 %v681, %v591
    %v683 = vlaneseq
    %v684 = vshrl.u32 %v683, 7
    %v685 = vsub.s32 0, %v684
    %v686 = vrot.slane %v573, %v685
    %v687 = vmul.f32 %v686, %v601
    %v688 = vsub.f32 %v682, %v687
    %v689 = vlaneseq
    %v690 = vshrl.u32 %v689, 7
    %v691 = vsub.s32 0, %v690
    %v692 = vrot.slane %v576, %v691
    %v693 = vsub.f32 %v688, %v692
    %v694 = vmul.f32 %v681, %v613
    %v695 = vmul.f32 %v686, %v619
    %v696 = vsub.f32 %v694, %v695
    %v697 = vsub.f32 %v696, %v692
    %v698 = vsub.f32 %v697, %v693
    %v699 = vand.u32 2147483647, %v698
    %vm700 = vcmp.lt.f32.partialorder %v699, 1e-06
    %v701 = vsel %vm700, 1.0, %v698
    %v702 = vsub.f32 0.0, %v693
    %v703 = vrcp.pop %v701
    %v704 = vmul.f32 %v702, %v703
    %vm705 = vcmp.gt.f32.partialorder %v698, 1e-06
    %v706 = vmax.f32 %v670, %v704
    %v707 = vsel %vm705, %v706, %v670
    %vm708 = vcmp.lt.f32.partialorder %v698, -1e-06
    %v709 = vmin.f32 %v677, %v704
    %v710 = vsel %vm708, %v709, %v677
    %vm711 = vcmp.le.f32.partialorder %v699, 1e-06
    %vm712 = vcmp.lt.f32.partialorder %v693, -1e-06
    %vm713 = vmand %vm711, %vm712
    %v714 = vsel %vm713, -1.0, %v710
    %v715 = vlaneseq
    %v716 = vshrl.u32 %v715, 7
    %v717 = vsub.s32 0, %v716
    %v718 = vrot.slane %v577, %v717
    %v719 = vmul.f32 %v718, %v591
    %v720 = vlaneseq
    %v721 = vshrl.u32 %v720, 7
    %v722 = vsub.s32 0, %v721
    %v723 = vrot.slane %v578, %v722
    %v724 = vmul.f32 %v723, %v601
    %v725 = vsub.f32 %v719, %v724
    %v726 = vlaneseq
    %v727 = vshrl.u32 %v726, 7
    %v728 = vsub.s32 0, %v727
    %v729 = vrot.slane %v581, %v728
    %v730 = vsub.f32 %v725, %v729
    %v731 = vmul.f32 %v718, %v613
    %v732 = vmul.f32 %v723, %v619
    %v733 = vsub.f32 %v731, %v732
    %v734 = vsub.f32 %v733, %v729
    %v735 = vsub.f32 %v734, %v730
    %v736 = vand.u32 2147483647, %v735
    %vm737 = vcmp.lt.f32.partialorder %v736, 1e-06
    %v738 = vsel %vm737, 1.0, %v735
    %v739 = vsub.f32 0.0, %v730
    %v740 = vrcp.pop %v738
    %v741 = vmul.f32 %v739, %v740
    %vm742 = vcmp.gt.f32.partialorder %v735, 1e-06
    %v743 = vmax.f32 %v707, %v741
    %v744 = vsel %vm742, %v743, %v707
    %vm745 = vcmp.lt.f32.partialorder %v735, -1e-06
    %v746 = vmin.f32 %v714, %v741
    %v747 = vsel %vm745, %v746, %v714
    %vm748 = vcmp.le.f32.partialorder %v736, 1e-06
    %vm749 = vcmp.lt.f32.partialorder %v730, -1e-06
    %vm750 = vmand %vm748, %vm749
    %v751 = vsel %vm750, -1.0, %v747
    %vm752 = vcmp.lt.f32.partialorder %v744, %v751
    %754 = vset.pattern.permute.xlu0 0
    %755 = vperm.xlu0 %754, %v582
    %v756 = vpop.permute.xlu0 %755
    %v758 = vmul.f32 %v744, %v756
    %v759 = vadd.f32 %v601, %v758
    %761 = vset.pattern.permute.xlu0 1
    %762 = vperm.xlu0 %761, %v583
    %v763 = vpop.permute.xlu0 %762
    %v765 = vmul.f32 %v744, %v763
    %v766 = vadd.f32 %v591, %v765
    %v767 = vmul.f32 %v751, %v756
    %v768 = vadd.f32 %v601, %v767
    %v769 = vmul.f32 %v751, %v763
    %v770 = vadd.f32 %v591, %v769
    %v771 = vmul.f32 %v759, %v770
    %v772 = vmul.f32 %v766, %v768
    %v773 = vsub.f32 %v771, %v772
    %v774 = vsel %vm752, %v773, 0.0
    %v775 = vadd.f32 %v774, 0.0
    %v776 = vsub.f32 %v322, %v309
    %v777 = vsub.f32 %v328, %v316
    %779 = vset.pattern.permute.xlu0 1
    %780 = vperm.xlu0 %779, %v328
    %v781 = vpop.permute.xlu0 %780
    %v783 = vmul.f32 %v587, %v781
    %785 = vset.pattern.permute.xlu0 0
    %786 = vperm.xlu0 %785, %v322
    %v787 = vpop.permute.xlu0 %786
    %v789 = vmul.f32 %v597, %v787
    %v790 = vsub.f32 %v783, %v789
    %v791 = vsub.f32 %v790, %v608
    %v792 = vsub.f32 %v791, %v623
    %v793 = vand.u32 2147483647, %v792
    %vm794 = vcmp.lt.f32.partialorder %v793, 1e-06
    %v795 = vsel %vm794, 1.0, %v792
    %v796 = vsub.f32 0.0, %v623
    %v797 = vrcp.pop %v795
    %v798 = vmul.f32 %v796, %v797
    %vm799 = vcmp.gt.f32.partialorder %v792, 1e-06
    %v800 = vmax.f32 %v798, 0.0
    %v801 = vsel %vm799, %v800, 0.0
    %vm802 = vcmp.lt.f32.partialorder %v792, -1e-06
    %v803 = vmin.f32 %v798, 1.0
    %v804 = vsel %vm802, %v803, 1.0
    %vm805 = vcmp.le.f32.partialorder %v793, 1e-06
    %vm806 = vcmp.lt.f32.partialorder %v623, -1e-06
    %vm807 = vmand %vm805, %vm806
    %v808 = vsel %vm807, -1.0, %v804
    %v809 = vmul.f32 %v644, %v781
    %v810 = vmul.f32 %v649, %v787
    %v811 = vsub.f32 %v809, %v810
    %v812 = vsub.f32 %v811, %v655
    %v813 = vsub.f32 %v812, %v660
    %v814 = vand.u32 2147483647, %v813
    %vm815 = vcmp.lt.f32.partialorder %v814, 1e-06
    %v816 = vsel %vm815, 1.0, %v813
    %v817 = vsub.f32 0.0, %v660
    %v818 = vrcp.pop %v816
    %v819 = vmul.f32 %v817, %v818
    %vm820 = vcmp.gt.f32.partialorder %v813, 1e-06
    %v821 = vmax.f32 %v801, %v819
    %v822 = vsel %vm820, %v821, %v801
    %vm823 = vcmp.lt.f32.partialorder %v813, -1e-06
    %v824 = vmin.f32 %v808, %v819
    %v825 = vsel %vm823, %v824, %v808
    %vm826 = vcmp.le.f32.partialorder %v814, 1e-06
    %vm827 = vcmp.lt.f32.partialorder %v660, -1e-06
    %vm828 = vmand %vm826, %vm827
    %v829 = vsel %vm828, -1.0, %v825
    %v830 = vmul.f32 %v681, %v781
    %v831 = vmul.f32 %v686, %v787
    %v832 = vsub.f32 %v830, %v831
    %v833 = vsub.f32 %v832, %v692
    %v834 = vsub.f32 %v833, %v697
    %v835 = vand.u32 2147483647, %v834
    %vm836 = vcmp.lt.f32.partialorder %v835, 1e-06
    %v837 = vsel %vm836, 1.0, %v834
    %v838 = vsub.f32 0.0, %v697
    %v839 = vrcp.pop %v837
    %v840 = vmul.f32 %v838, %v839
    %vm841 = vcmp.gt.f32.partialorder %v834, 1e-06
    %v842 = vmax.f32 %v822, %v840
    %v843 = vsel %vm841, %v842, %v822
    %vm844 = vcmp.lt.f32.partialorder %v834, -1e-06
    %v845 = vmin.f32 %v829, %v840
    %v846 = vsel %vm844, %v845, %v829
    %vm847 = vcmp.le.f32.partialorder %v835, 1e-06
    %vm848 = vcmp.lt.f32.partialorder %v697, -1e-06
    %vm849 = vmand %vm847, %vm848
    %v850 = vsel %vm849, -1.0, %v846
    %v851 = vmul.f32 %v718, %v781
    %v852 = vmul.f32 %v723, %v787
    %v853 = vsub.f32 %v851, %v852
    %v854 = vsub.f32 %v853, %v729
    %v855 = vsub.f32 %v854, %v734
    %v856 = vand.u32 2147483647, %v855
    %vm857 = vcmp.lt.f32.partialorder %v856, 1e-06
    %v858 = vsel %vm857, 1.0, %v855
    %v859 = vsub.f32 0.0, %v734
    %v860 = vrcp.pop %v858
    %v861 = vmul.f32 %v859, %v860
    %vm862 = vcmp.gt.f32.partialorder %v855, 1e-06
    %v863 = vmax.f32 %v843, %v861
    %v864 = vsel %vm862, %v863, %v843
    %vm865 = vcmp.lt.f32.partialorder %v855, -1e-06
    %v866 = vmin.f32 %v850, %v861
    %v867 = vsel %vm865, %v866, %v850
    %vm868 = vcmp.le.f32.partialorder %v856, 1e-06
    %vm869 = vcmp.lt.f32.partialorder %v734, -1e-06
    %vm870 = vmand %vm868, %vm869
    %v871 = vsel %vm870, -1.0, %v867
    %vm872 = vcmp.lt.f32.partialorder %v864, %v871
    %874 = vset.pattern.permute.xlu0 0
    %875 = vperm.xlu0 %874, %v776
    %v876 = vpop.permute.xlu0 %875
    %v878 = vmul.f32 %v864, %v876
    %v879 = vadd.f32 %v619, %v878
    %881 = vset.pattern.permute.xlu0 1
    %882 = vperm.xlu0 %881, %v777
    %v883 = vpop.permute.xlu0 %882
    %v885 = vmul.f32 %v864, %v883
    %v886 = vadd.f32 %v613, %v885
    %v887 = vmul.f32 %v871, %v876
    %v888 = vadd.f32 %v619, %v887
    %v889 = vmul.f32 %v871, %v883
    %v890 = vadd.f32 %v613, %v889
    %v891 = vmul.f32 %v879, %v890
    %v892 = vmul.f32 %v886, %v888
    %v893 = vsub.f32 %v891, %v892
    %v894 = vsel %vm872, %v893, 0.0
    %v895 = vadd.f32 %v775, %v894
    %v896 = vsub.f32 %v329, %v322
    %v897 = vsub.f32 %v330, %v328
    %899 = vset.pattern.permute.xlu0 1
    %900 = vperm.xlu0 %899, %v330
    %v901 = vpop.permute.xlu0 %900
    %v903 = vmul.f32 %v587, %v901
    %905 = vset.pattern.permute.xlu0 0
    %906 = vperm.xlu0 %905, %v329
    %v907 = vpop.permute.xlu0 %906
    %v909 = vmul.f32 %v597, %v907
    %v910 = vsub.f32 %v903, %v909
    %v911 = vsub.f32 %v910, %v608
    %v912 = vsub.f32 %v911, %v791
    %v913 = vand.u32 2147483647, %v912
    %vm914 = vcmp.lt.f32.partialorder %v913, 1e-06
    %v915 = vsel %vm914, 1.0, %v912
    %v916 = vsub.f32 0.0, %v791
    %v917 = vrcp.pop %v915
    %v918 = vmul.f32 %v916, %v917
    %vm919 = vcmp.gt.f32.partialorder %v912, 1e-06
    %v920 = vmax.f32 %v918, 0.0
    %v921 = vsel %vm919, %v920, 0.0
    %vm922 = vcmp.lt.f32.partialorder %v912, -1e-06
    %v923 = vmin.f32 %v918, 1.0
    %v924 = vsel %vm922, %v923, 1.0
    %vm925 = vcmp.le.f32.partialorder %v913, 1e-06
    %vm926 = vcmp.lt.f32.partialorder %v791, -1e-06
    %vm927 = vmand %vm925, %vm926
    %v928 = vsel %vm927, -1.0, %v924
    %v929 = vmul.f32 %v644, %v901
    %v930 = vmul.f32 %v649, %v907
    %v931 = vsub.f32 %v929, %v930
    %v932 = vsub.f32 %v931, %v655
    %v933 = vsub.f32 %v932, %v812
    %v934 = vand.u32 2147483647, %v933
    %vm935 = vcmp.lt.f32.partialorder %v934, 1e-06
    %v936 = vsel %vm935, 1.0, %v933
    %v937 = vsub.f32 0.0, %v812
    %v938 = vrcp.pop %v936
    %v939 = vmul.f32 %v937, %v938
    %vm940 = vcmp.gt.f32.partialorder %v933, 1e-06
    %v941 = vmax.f32 %v921, %v939
    %v942 = vsel %vm940, %v941, %v921
    %vm943 = vcmp.lt.f32.partialorder %v933, -1e-06
    %v944 = vmin.f32 %v928, %v939
    %v945 = vsel %vm943, %v944, %v928
    %vm946 = vcmp.le.f32.partialorder %v934, 1e-06
    %vm947 = vcmp.lt.f32.partialorder %v812, -1e-06
    %vm948 = vmand %vm946, %vm947
    %v949 = vsel %vm948, -1.0, %v945
    %v950 = vmul.f32 %v681, %v901
    %v951 = vmul.f32 %v686, %v907
    %v952 = vsub.f32 %v950, %v951
    %v953 = vsub.f32 %v952, %v692
    %v954 = vsub.f32 %v953, %v833
    %v955 = vand.u32 2147483647, %v954
    %vm956 = vcmp.lt.f32.partialorder %v955, 1e-06
    %v957 = vsel %vm956, 1.0, %v954
    %v958 = vsub.f32 0.0, %v833
    %v959 = vrcp.pop %v957
    %v960 = vmul.f32 %v958, %v959
    %vm961 = vcmp.gt.f32.partialorder %v954, 1e-06
    %v962 = vmax.f32 %v942, %v960
    %v963 = vsel %vm961, %v962, %v942
    %vm964 = vcmp.lt.f32.partialorder %v954, -1e-06
    %v965 = vmin.f32 %v949, %v960
    %v966 = vsel %vm964, %v965, %v949
    %vm967 = vcmp.le.f32.partialorder %v955, 1e-06
    %vm968 = vcmp.lt.f32.partialorder %v833, -1e-06
    %vm969 = vmand %vm967, %vm968
    %v970 = vsel %vm969, -1.0, %v966
    %v971 = vmul.f32 %v718, %v901
    %v972 = vmul.f32 %v723, %v907
    %v973 = vsub.f32 %v971, %v972
    %v974 = vsub.f32 %v973, %v729
    %v975 = vsub.f32 %v974, %v854
    %v976 = vand.u32 2147483647, %v975
    %vm977 = vcmp.lt.f32.partialorder %v976, 1e-06
    %v978 = vsel %vm977, 1.0, %v975
    %v979 = vsub.f32 0.0, %v854
    %v980 = vrcp.pop %v978
    %v981 = vmul.f32 %v979, %v980
    %vm982 = vcmp.gt.f32.partialorder %v975, 1e-06
    %v983 = vmax.f32 %v963, %v981
    %v984 = vsel %vm982, %v983, %v963
    %vm985 = vcmp.lt.f32.partialorder %v975, -1e-06
    %v986 = vmin.f32 %v970, %v981
    %v987 = vsel %vm985, %v986, %v970
    %vm988 = vcmp.le.f32.partialorder %v976, 1e-06
    %vm989 = vcmp.lt.f32.partialorder %v854, -1e-06
    %vm990 = vmand %vm988, %vm989
    %v991 = vsel %vm990, -1.0, %v987
    %vm992 = vcmp.lt.f32.partialorder %v984, %v991
    %994 = vset.pattern.permute.xlu0 0
    %995 = vperm.xlu0 %994, %v896
    %v996 = vpop.permute.xlu0 %995
    %v998 = vmul.f32 %v984, %v996
    %v999 = vadd.f32 %v787, %v998
    %1001 = vset.pattern.permute.xlu0 1
    %1002 = vperm.xlu0 %1001, %v897
    %v1003 = vpop.permute.xlu0 %1002
    %v1005 = vmul.f32 %v984, %v1003
    %v1006 = vadd.f32 %v781, %v1005
    %v1007 = vmul.f32 %v991, %v996
    %v1008 = vadd.f32 %v787, %v1007
    %v1009 = vmul.f32 %v991, %v1003
    %v1010 = vadd.f32 %v781, %v1009
    %v1011 = vmul.f32 %v999, %v1010
    %v1012 = vmul.f32 %v1006, %v1008
    %v1013 = vsub.f32 %v1011, %v1012
    %v1014 = vsel %vm992, %v1013, 0.0
    %v1015 = vadd.f32 %v895, %v1014
    %v1016 = vsub.f32 %v283, %v329
    %v1017 = vsub.f32 %v301, %v330
    %v1018 = vsub.f32 %v609, %v911
    %v1019 = vand.u32 2147483647, %v1018
    %vm1020 = vcmp.lt.f32.partialorder %v1019, 1e-06
    %v1021 = vsel %vm1020, 1.0, %v1018
    %v1022 = vsub.f32 0.0, %v911
    %v1023 = vrcp.pop %v1021
    %v1024 = vmul.f32 %v1022, %v1023
    %vm1025 = vcmp.gt.f32.partialorder %v1018, 1e-06
    %v1026 = vmax.f32 %v1024, 0.0
    %v1027 = vsel %vm1025, %v1026, 0.0
    %vm1028 = vcmp.lt.f32.partialorder %v1018, -1e-06
    %v1029 = vmin.f32 %v1024, 1.0
    %v1030 = vsel %vm1028, %v1029, 1.0
    %vm1031 = vcmp.le.f32.partialorder %v1019, 1e-06
    %vm1032 = vcmp.lt.f32.partialorder %v911, -1e-06
    %vm1033 = vmand %vm1031, %vm1032
    %v1034 = vsel %vm1033, -1.0, %v1030
    %v1035 = vsub.f32 %v656, %v932
    %v1036 = vand.u32 2147483647, %v1035
    %vm1037 = vcmp.lt.f32.partialorder %v1036, 1e-06
    %v1038 = vsel %vm1037, 1.0, %v1035
    %v1039 = vsub.f32 0.0, %v932
    %v1040 = vrcp.pop %v1038
    %v1041 = vmul.f32 %v1039, %v1040
    %vm1042 = vcmp.gt.f32.partialorder %v1035, 1e-06
    %v1043 = vmax.f32 %v1027, %v1041
    %v1044 = vsel %vm1042, %v1043, %v1027
    %vm1045 = vcmp.lt.f32.partialorder %v1035, -1e-06
    %v1046 = vmin.f32 %v1034, %v1041
    %v1047 = vsel %vm1045, %v1046, %v1034
    %vm1048 = vcmp.le.f32.partialorder %v1036, 1e-06
    %vm1049 = vcmp.lt.f32.partialorder %v932, -1e-06
    %vm1050 = vmand %vm1048, %vm1049
    %v1051 = vsel %vm1050, -1.0, %v1047
    %v1052 = vsub.f32 %v693, %v953
    %v1053 = vand.u32 2147483647, %v1052
    %vm1054 = vcmp.lt.f32.partialorder %v1053, 1e-06
    %v1055 = vsel %vm1054, 1.0, %v1052
    %v1056 = vsub.f32 0.0, %v953
    %v1057 = vrcp.pop %v1055
    %v1058 = vmul.f32 %v1056, %v1057
    %vm1059 = vcmp.gt.f32.partialorder %v1052, 1e-06
    %v1060 = vmax.f32 %v1044, %v1058
    %v1061 = vsel %vm1059, %v1060, %v1044
    %vm1062 = vcmp.lt.f32.partialorder %v1052, -1e-06
    %v1063 = vmin.f32 %v1051, %v1058
    %v1064 = vsel %vm1062, %v1063, %v1051
    %vm1065 = vcmp.le.f32.partialorder %v1053, 1e-06
    %vm1066 = vcmp.lt.f32.partialorder %v953, -1e-06
    %vm1067 = vmand %vm1065, %vm1066
    %v1068 = vsel %vm1067, -1.0, %v1064
    %v1069 = vsub.f32 %v730, %v974
    %v1070 = vand.u32 2147483647, %v1069
    %vm1071 = vcmp.lt.f32.partialorder %v1070, 1e-06
    %v1072 = vsel %vm1071, 1.0, %v1069
    %v1073 = vsub.f32 0.0, %v974
    %v1074 = vrcp.pop %v1072
    %v1075 = vmul.f32 %v1073, %v1074
    %vm1076 = vcmp.gt.f32.partialorder %v1069, 1e-06
    %v1077 = vmax.f32 %v1061, %v1075
    %v1078 = vsel %vm1076, %v1077, %v1061
    %vm1079 = vcmp.lt.f32.partialorder %v1069, -1e-06
    %v1080 = vmin.f32 %v1068, %v1075
    %v1081 = vsel %vm1079, %v1080, %v1068
    %vm1082 = vcmp.le.f32.partialorder %v1070, 1e-06
    %vm1083 = vcmp.lt.f32.partialorder %v974, -1e-06
    %vm1084 = vmand %vm1082, %vm1083
    %v1085 = vsel %vm1084, -1.0, %v1081
    %vm1086 = vcmp.lt.f32.partialorder %v1078, %v1085
    %1088 = vset.pattern.permute.xlu0 0
    %1089 = vperm.xlu0 %1088, %v1016
    %v1090 = vpop.permute.xlu0 %1089
    %v1092 = vmul.f32 %v1078, %v1090
    %v1093 = vadd.f32 %v907, %v1092
    %1095 = vset.pattern.permute.xlu0 1
    %1096 = vperm.xlu0 %1095, %v1017
    %v1097 = vpop.permute.xlu0 %1096
    %v1099 = vmul.f32 %v1078, %v1097
    %v1100 = vadd.f32 %v901, %v1099
    %v1101 = vmul.f32 %v1085, %v1090
    %v1102 = vadd.f32 %v907, %v1101
    %v1103 = vmul.f32 %v1085, %v1097
    %v1104 = vadd.f32 %v901, %v1103
    %v1105 = vmul.f32 %v1093, %v1104
    %v1106 = vmul.f32 %v1100, %v1102
    %v1107 = vsub.f32 %v1105, %v1106
    %v1108 = vsel %vm1086, %v1107, 0.0
    %v1109 = vadd.f32 %v1015, %v1108
    %1110 = vrot.lane.b32.xlu0 %v301, 127
    %v1111 = vpop.permute.xlu0 %1110
    %v1113 = vmul.f32 %v582, %v1111
    %1114 = vrot.lane.b32.xlu0 %v283, 1
    %v1115 = vpop.permute.xlu0 %1114
    %v1117 = vmul.f32 %v583, %v1115
    %1119 = vrot.lane.b32.xlu0 %v1117, 127
    %v1120 = vpop.permute.xlu0 %1119
    %v1122 = vsub.f32 %v1113, %v1120
    %1123 = vrot.lane.b32.xlu0 %v316, 127
    %v1124 = vpop.permute.xlu0 %1123
    %v1126 = vmul.f32 %v776, %v1124
    %1127 = vrot.lane.b32.xlu0 %v309, 1
    %v1128 = vpop.permute.xlu0 %1127
    %v1130 = vmul.f32 %v777, %v1128
    %1132 = vrot.lane.b32.xlu0 %v1130, 127
    %v1133 = vpop.permute.xlu0 %1132
    %v1135 = vsub.f32 %v1126, %v1133
    %1136 = vrot.lane.b32.xlu0 %v328, 127
    %v1137 = vpop.permute.xlu0 %1136
    %v1139 = vmul.f32 %v896, %v1137
    %1140 = vrot.lane.b32.xlu0 %v322, 1
    %v1141 = vpop.permute.xlu0 %1140
    %v1143 = vmul.f32 %v897, %v1141
    %1145 = vrot.lane.b32.xlu0 %v1143, 127
    %v1146 = vpop.permute.xlu0 %1145
    %v1148 = vsub.f32 %v1139, %v1146
    %1149 = vrot.lane.b32.xlu0 %v330, 127
    %v1150 = vpop.permute.xlu0 %1149
    %v1152 = vmul.f32 %v1016, %v1150
    %1153 = vrot.lane.b32.xlu0 %v329, 1
    %v1154 = vpop.permute.xlu0 %1153
    %v1156 = vmul.f32 %v1017, %v1154
    %1158 = vrot.lane.b32.xlu0 %v1156, 127
    %v1159 = vpop.permute.xlu0 %1158
    %v1161 = vsub.f32 %v1152, %v1159
    %v1162 = vlaneseq
    %v1163 = vshrl.u32 %v1162, 7
    %v1164 = vsub.s32 0, %v1163
    %v1165 = vrot.slane %v547, %v1164
    %v1166 = vmul.f32 %v756, %v1165
    %v1167 = vlaneseq
    %v1168 = vshrl.u32 %v1167, 7
    %v1169 = vsub.s32 0, %v1168
    %v1170 = vrot.slane %v543, %v1169
    %v1171 = vmul.f32 %v763, %v1170
    %v1172 = vsub.f32 %v1166, %v1171
    %1174 = vset.pattern.permute.xlu0 0
    %1175 = vperm.xlu0 %1174, %v1122
    %v1176 = vpop.permute.xlu0 %1175
    %v1178 = vsub.f32 %v1172, %v1176
    %v1179 = vlaneseq
    %v1180 = vshrl.u32 %v1179, 7
    %v1181 = vsub.s32 0, %v1180
    %v1182 = vrot.slane %v554, %v1181
    %v1183 = vmul.f32 %v756, %v1182
    %v1184 = vlaneseq
    %v1185 = vshrl.u32 %v1184, 7
    %v1186 = vsub.s32 0, %v1185
    %v1187 = vrot.slane %v551, %v1186
    %v1188 = vmul.f32 %v763, %v1187
    %v1189 = vsub.f32 %v1183, %v1188
    %v1190 = vsub.f32 %v1189, %v1176
    %v1191 = vsub.f32 %v1190, %v1178
    %v1192 = vand.u32 2147483647, %v1191
    %vm1193 = vcmp.lt.f32.partialorder %v1192, 1e-06
    %v1194 = vsel %vm1193, 1.0, %v1191
    %v1195 = vsub.f32 0.0, %v1178
    %v1196 = vrcp.pop %v1194
    %v1197 = vmul.f32 %v1195, %v1196
    %vm1198 = vcmp.gt.f32.partialorder %v1191, 1e-06
    %v1199 = vmax.f32 %v1197, 0.0
    %v1200 = vsel %vm1198, %v1199, 0.0
    %vm1201 = vcmp.lt.f32.partialorder %v1191, -1e-06
    %v1202 = vmin.f32 %v1197, 1.0
    %v1203 = vsel %vm1201, %v1202, 1.0
    %vm1204 = vcmp.le.f32.partialorder %v1192, 1e-06
    %vm1205 = vcmp.lt.f32.partialorder %v1178, -1e-06
    %vm1206 = vmand %vm1204, %vm1205
    %v1207 = vsel %vm1206, -1.0, %v1203
    %v1208 = vmul.f32 %v876, %v1165
    %v1209 = vmul.f32 %v883, %v1170
    %v1210 = vsub.f32 %v1208, %v1209
    %1212 = vset.pattern.permute.xlu0 0
    %1213 = vperm.xlu0 %1212, %v1135
    %v1214 = vpop.permute.xlu0 %1213
    %v1216 = vsub.f32 %v1210, %v1214
    %v1217 = vmul.f32 %v876, %v1182
    %v1218 = vmul.f32 %v883, %v1187
    %v1219 = vsub.f32 %v1217, %v1218
    %v1220 = vsub.f32 %v1219, %v1214
    %v1221 = vsub.f32 %v1220, %v1216
    %v1222 = vand.u32 2147483647, %v1221
    %vm1223 = vcmp.lt.f32.partialorder %v1222, 1e-06
    %v1224 = vsel %vm1223, 1.0, %v1221
    %v1225 = vsub.f32 0.0, %v1216
    %v1226 = vrcp.pop %v1224
    %v1227 = vmul.f32 %v1225, %v1226
    %vm1228 = vcmp.gt.f32.partialorder %v1221, 1e-06
    %v1229 = vmax.f32 %v1200, %v1227
    %v1230 = vsel %vm1228, %v1229, %v1200
    %vm1231 = vcmp.lt.f32.partialorder %v1221, -1e-06
    %v1232 = vmin.f32 %v1207, %v1227
    %v1233 = vsel %vm1231, %v1232, %v1207
    %vm1234 = vcmp.le.f32.partialorder %v1222, 1e-06
    %vm1235 = vcmp.lt.f32.partialorder %v1216, -1e-06
    %vm1236 = vmand %vm1234, %vm1235
    %v1237 = vsel %vm1236, -1.0, %v1233
    %v1238 = vmul.f32 %v996, %v1165
    %v1239 = vmul.f32 %v1003, %v1170
    %v1240 = vsub.f32 %v1238, %v1239
    %1242 = vset.pattern.permute.xlu0 0
    %1243 = vperm.xlu0 %1242, %v1148
    %v1244 = vpop.permute.xlu0 %1243
    %v1246 = vsub.f32 %v1240, %v1244
    %v1247 = vmul.f32 %v996, %v1182
    %v1248 = vmul.f32 %v1003, %v1187
    %v1249 = vsub.f32 %v1247, %v1248
    %v1250 = vsub.f32 %v1249, %v1244
    %v1251 = vsub.f32 %v1250, %v1246
    %v1252 = vand.u32 2147483647, %v1251
    %vm1253 = vcmp.lt.f32.partialorder %v1252, 1e-06
    %v1254 = vsel %vm1253, 1.0, %v1251
    %v1255 = vsub.f32 0.0, %v1246
    %v1256 = vrcp.pop %v1254
    %v1257 = vmul.f32 %v1255, %v1256
    %vm1258 = vcmp.gt.f32.partialorder %v1251, 1e-06
    %v1259 = vmax.f32 %v1230, %v1257
    %v1260 = vsel %vm1258, %v1259, %v1230
    %vm1261 = vcmp.lt.f32.partialorder %v1251, -1e-06
    %v1262 = vmin.f32 %v1237, %v1257
    %v1263 = vsel %vm1261, %v1262, %v1237
    %vm1264 = vcmp.le.f32.partialorder %v1252, 1e-06
    %vm1265 = vcmp.lt.f32.partialorder %v1246, -1e-06
    %vm1266 = vmand %vm1264, %vm1265
    %v1267 = vsel %vm1266, -1.0, %v1263
    %v1268 = vmul.f32 %v1090, %v1165
    %v1269 = vmul.f32 %v1097, %v1170
    %v1270 = vsub.f32 %v1268, %v1269
    %1272 = vset.pattern.permute.xlu0 0
    %1273 = vperm.xlu0 %1272, %v1161
    %v1274 = vpop.permute.xlu0 %1273
    %v1276 = vsub.f32 %v1270, %v1274
    %v1277 = vmul.f32 %v1090, %v1182
    %v1278 = vmul.f32 %v1097, %v1187
    %v1279 = vsub.f32 %v1277, %v1278
    %v1280 = vsub.f32 %v1279, %v1274
    %v1281 = vsub.f32 %v1280, %v1276
    %v1282 = vand.u32 2147483647, %v1281
    %vm1283 = vcmp.lt.f32.partialorder %v1282, 1e-06
    %v1284 = vsel %vm1283, 1.0, %v1281
    %v1285 = vsub.f32 0.0, %v1276
    %v1286 = vrcp.pop %v1284
    %v1287 = vmul.f32 %v1285, %v1286
    %vm1288 = vcmp.gt.f32.partialorder %v1281, 1e-06
    %v1289 = vmax.f32 %v1260, %v1287
    %v1290 = vsel %vm1288, %v1289, %v1260
    %vm1291 = vcmp.lt.f32.partialorder %v1281, -1e-06
    %v1292 = vmin.f32 %v1267, %v1287
    %v1293 = vsel %vm1291, %v1292, %v1267
    %vm1294 = vcmp.le.f32.partialorder %v1282, 1e-06
    %vm1295 = vcmp.lt.f32.partialorder %v1276, -1e-06
    %vm1296 = vmand %vm1294, %vm1295
    %v1297 = vsel %vm1296, -1.0, %v1293
    %vm1298 = vcmp.lt.f32.partialorder %v1290, %v1297
    %v1299 = vmul.f32 %v1290, %v587
    %v1300 = vadd.f32 %v1170, %v1299
    %v1301 = vmul.f32 %v1290, %v597
    %v1302 = vadd.f32 %v1165, %v1301
    %v1303 = vmul.f32 %v1297, %v587
    %v1304 = vadd.f32 %v1170, %v1303
    %v1305 = vmul.f32 %v1297, %v597
    %v1306 = vadd.f32 %v1165, %v1305
    %v1307 = vmul.f32 %v1300, %v1306
    %v1308 = vmul.f32 %v1302, %v1304
    %v1309 = vsub.f32 %v1307, %v1308
    %v1310 = vsel %vm1298, %v1309, 0.0
    %v1311 = vadd.f32 %v1310, 0.0
    %v1312 = vlaneseq
    %v1313 = vshrl.u32 %v1312, 7
    %v1314 = vsub.s32 0, %v1313
    %v1315 = vrot.slane %v559, %v1314
    %v1316 = vmul.f32 %v756, %v1315
    %v1317 = vlaneseq
    %v1318 = vshrl.u32 %v1317, 7
    %v1319 = vsub.s32 0, %v1318
    %v1320 = vrot.slane %v557, %v1319
    %v1321 = vmul.f32 %v763, %v1320
    %v1322 = vsub.f32 %v1316, %v1321
    %v1323 = vsub.f32 %v1322, %v1176
    %v1324 = vsub.f32 %v1323, %v1190
    %v1325 = vand.u32 2147483647, %v1324
    %vm1326 = vcmp.lt.f32.partialorder %v1325, 1e-06
    %v1327 = vsel %vm1326, 1.0, %v1324
    %v1328 = vsub.f32 0.0, %v1190
    %v1329 = vrcp.pop %v1327
    %v1330 = vmul.f32 %v1328, %v1329
    %vm1331 = vcmp.gt.f32.partialorder %v1324, 1e-06
    %v1332 = vmax.f32 %v1330, 0.0
    %v1333 = vsel %vm1331, %v1332, 0.0
    %vm1334 = vcmp.lt.f32.partialorder %v1324, -1e-06
    %v1335 = vmin.f32 %v1330, 1.0
    %v1336 = vsel %vm1334, %v1335, 1.0
    %vm1337 = vcmp.le.f32.partialorder %v1325, 1e-06
    %vm1338 = vcmp.lt.f32.partialorder %v1190, -1e-06
    %vm1339 = vmand %vm1337, %vm1338
    %v1340 = vsel %vm1339, -1.0, %v1336
    %v1341 = vmul.f32 %v876, %v1315
    %v1342 = vmul.f32 %v883, %v1320
    %v1343 = vsub.f32 %v1341, %v1342
    %v1344 = vsub.f32 %v1343, %v1214
    %v1345 = vsub.f32 %v1344, %v1220
    %v1346 = vand.u32 2147483647, %v1345
    %vm1347 = vcmp.lt.f32.partialorder %v1346, 1e-06
    %v1348 = vsel %vm1347, 1.0, %v1345
    %v1349 = vsub.f32 0.0, %v1220
    %v1350 = vrcp.pop %v1348
    %v1351 = vmul.f32 %v1349, %v1350
    %vm1352 = vcmp.gt.f32.partialorder %v1345, 1e-06
    %v1353 = vmax.f32 %v1333, %v1351
    %v1354 = vsel %vm1352, %v1353, %v1333
    %vm1355 = vcmp.lt.f32.partialorder %v1345, -1e-06
    %v1356 = vmin.f32 %v1340, %v1351
    %v1357 = vsel %vm1355, %v1356, %v1340
    %vm1358 = vcmp.le.f32.partialorder %v1346, 1e-06
    %vm1359 = vcmp.lt.f32.partialorder %v1220, -1e-06
    %vm1360 = vmand %vm1358, %vm1359
    %v1361 = vsel %vm1360, -1.0, %v1357
    %v1362 = vmul.f32 %v996, %v1315
    %v1363 = vmul.f32 %v1003, %v1320
    %v1364 = vsub.f32 %v1362, %v1363
    %v1365 = vsub.f32 %v1364, %v1244
    %v1366 = vsub.f32 %v1365, %v1250
    %v1367 = vand.u32 2147483647, %v1366
    %vm1368 = vcmp.lt.f32.partialorder %v1367, 1e-06
    %v1369 = vsel %vm1368, 1.0, %v1366
    %v1370 = vsub.f32 0.0, %v1250
    %v1371 = vrcp.pop %v1369
    %v1372 = vmul.f32 %v1370, %v1371
    %vm1373 = vcmp.gt.f32.partialorder %v1366, 1e-06
    %v1374 = vmax.f32 %v1354, %v1372
    %v1375 = vsel %vm1373, %v1374, %v1354
    %vm1376 = vcmp.lt.f32.partialorder %v1366, -1e-06
    %v1377 = vmin.f32 %v1361, %v1372
    %v1378 = vsel %vm1376, %v1377, %v1361
    %vm1379 = vcmp.le.f32.partialorder %v1367, 1e-06
    %vm1380 = vcmp.lt.f32.partialorder %v1250, -1e-06
    %vm1381 = vmand %vm1379, %vm1380
    %v1382 = vsel %vm1381, -1.0, %v1378
    %v1383 = vmul.f32 %v1090, %v1315
    %v1384 = vmul.f32 %v1097, %v1320
    %v1385 = vsub.f32 %v1383, %v1384
    %v1386 = vsub.f32 %v1385, %v1274
    %v1387 = vsub.f32 %v1386, %v1280
    %v1388 = vand.u32 2147483647, %v1387
    %vm1389 = vcmp.lt.f32.partialorder %v1388, 1e-06
    %v1390 = vsel %vm1389, 1.0, %v1387
    %v1391 = vsub.f32 0.0, %v1280
    %v1392 = vrcp.pop %v1390
    %v1393 = vmul.f32 %v1391, %v1392
    %vm1394 = vcmp.gt.f32.partialorder %v1387, 1e-06
    %v1395 = vmax.f32 %v1375, %v1393
    %v1396 = vsel %vm1394, %v1395, %v1375
    %vm1397 = vcmp.lt.f32.partialorder %v1387, -1e-06
    %v1398 = vmin.f32 %v1382, %v1393
    %v1399 = vsel %vm1397, %v1398, %v1382
    %vm1400 = vcmp.le.f32.partialorder %v1388, 1e-06
    %vm1401 = vcmp.lt.f32.partialorder %v1280, -1e-06
    %vm1402 = vmand %vm1400, %vm1401
    %v1403 = vsel %vm1402, -1.0, %v1399
    %vm1404 = vcmp.lt.f32.partialorder %v1396, %v1403
    %v1405 = vmul.f32 %v1396, %v644
    %v1406 = vadd.f32 %v1187, %v1405
    %v1407 = vmul.f32 %v1396, %v649
    %v1408 = vadd.f32 %v1182, %v1407
    %v1409 = vmul.f32 %v1403, %v644
    %v1410 = vadd.f32 %v1187, %v1409
    %v1411 = vmul.f32 %v1403, %v649
    %v1412 = vadd.f32 %v1182, %v1411
    %v1413 = vmul.f32 %v1406, %v1412
    %v1414 = vmul.f32 %v1408, %v1410
    %v1415 = vsub.f32 %v1413, %v1414
    %v1416 = vsel %vm1404, %v1415, 0.0
    %v1417 = vadd.f32 %v1311, %v1416
    %v1418 = vlaneseq
    %v1419 = vshrl.u32 %v1418, 7
    %v1420 = vsub.s32 0, %v1419
    %v1421 = vrot.slane %v561, %v1420
    %v1422 = vmul.f32 %v756, %v1421
    %v1423 = vlaneseq
    %v1424 = vshrl.u32 %v1423, 7
    %v1425 = vsub.s32 0, %v1424
    %v1426 = vrot.slane %v560, %v1425
    %v1427 = vmul.f32 %v763, %v1426
    %v1428 = vsub.f32 %v1422, %v1427
    %v1429 = vsub.f32 %v1428, %v1176
    %v1430 = vsub.f32 %v1429, %v1323
    %v1431 = vand.u32 2147483647, %v1430
    %vm1432 = vcmp.lt.f32.partialorder %v1431, 1e-06
    %v1433 = vsel %vm1432, 1.0, %v1430
    %v1434 = vsub.f32 0.0, %v1323
    %v1435 = vrcp.pop %v1433
    %v1436 = vmul.f32 %v1434, %v1435
    %vm1437 = vcmp.gt.f32.partialorder %v1430, 1e-06
    %v1438 = vmax.f32 %v1436, 0.0
    %v1439 = vsel %vm1437, %v1438, 0.0
    %vm1440 = vcmp.lt.f32.partialorder %v1430, -1e-06
    %v1441 = vmin.f32 %v1436, 1.0
    %v1442 = vsel %vm1440, %v1441, 1.0
    %vm1443 = vcmp.le.f32.partialorder %v1431, 1e-06
    %vm1444 = vcmp.lt.f32.partialorder %v1323, -1e-06
    %vm1445 = vmand %vm1443, %vm1444
    %v1446 = vsel %vm1445, -1.0, %v1442
    %v1447 = vmul.f32 %v876, %v1421
    %v1448 = vmul.f32 %v883, %v1426
    %v1449 = vsub.f32 %v1447, %v1448
    %v1450 = vsub.f32 %v1449, %v1214
    %v1451 = vsub.f32 %v1450, %v1344
    %v1452 = vand.u32 2147483647, %v1451
    %vm1453 = vcmp.lt.f32.partialorder %v1452, 1e-06
    %v1454 = vsel %vm1453, 1.0, %v1451
    %v1455 = vsub.f32 0.0, %v1344
    %v1456 = vrcp.pop %v1454
    %v1457 = vmul.f32 %v1455, %v1456
    %vm1458 = vcmp.gt.f32.partialorder %v1451, 1e-06
    %v1459 = vmax.f32 %v1439, %v1457
    %v1460 = vsel %vm1458, %v1459, %v1439
    %vm1461 = vcmp.lt.f32.partialorder %v1451, -1e-06
    %v1462 = vmin.f32 %v1446, %v1457
    %v1463 = vsel %vm1461, %v1462, %v1446
    %vm1464 = vcmp.le.f32.partialorder %v1452, 1e-06
    %vm1465 = vcmp.lt.f32.partialorder %v1344, -1e-06
    %vm1466 = vmand %vm1464, %vm1465
    %v1467 = vsel %vm1466, -1.0, %v1463
    %v1468 = vmul.f32 %v996, %v1421
    %v1469 = vmul.f32 %v1003, %v1426
    %v1470 = vsub.f32 %v1468, %v1469
    %v1471 = vsub.f32 %v1470, %v1244
    %v1472 = vsub.f32 %v1471, %v1365
    %v1473 = vand.u32 2147483647, %v1472
    %vm1474 = vcmp.lt.f32.partialorder %v1473, 1e-06
    %v1475 = vsel %vm1474, 1.0, %v1472
    %v1476 = vsub.f32 0.0, %v1365
    %v1477 = vrcp.pop %v1475
    %v1478 = vmul.f32 %v1476, %v1477
    %vm1479 = vcmp.gt.f32.partialorder %v1472, 1e-06
    %v1480 = vmax.f32 %v1460, %v1478
    %v1481 = vsel %vm1479, %v1480, %v1460
    %vm1482 = vcmp.lt.f32.partialorder %v1472, -1e-06
    %v1483 = vmin.f32 %v1467, %v1478
    %v1484 = vsel %vm1482, %v1483, %v1467
    %vm1485 = vcmp.le.f32.partialorder %v1473, 1e-06
    %vm1486 = vcmp.lt.f32.partialorder %v1365, -1e-06
    %vm1487 = vmand %vm1485, %vm1486
    %v1488 = vsel %vm1487, -1.0, %v1484
    %v1489 = vmul.f32 %v1090, %v1421
    %v1490 = vmul.f32 %v1097, %v1426
    %v1491 = vsub.f32 %v1489, %v1490
    %v1492 = vsub.f32 %v1491, %v1274
    %v1493 = vsub.f32 %v1492, %v1386
    %v1494 = vand.u32 2147483647, %v1493
    %vm1495 = vcmp.lt.f32.partialorder %v1494, 1e-06
    %v1496 = vsel %vm1495, 1.0, %v1493
    %v1497 = vsub.f32 0.0, %v1386
    %v1498 = vrcp.pop %v1496
    %v1499 = vmul.f32 %v1497, %v1498
    %vm1500 = vcmp.gt.f32.partialorder %v1493, 1e-06
    %v1501 = vmax.f32 %v1481, %v1499
    %v1502 = vsel %vm1500, %v1501, %v1481
    %vm1503 = vcmp.lt.f32.partialorder %v1493, -1e-06
    %v1504 = vmin.f32 %v1488, %v1499
    %v1505 = vsel %vm1503, %v1504, %v1488
    %vm1506 = vcmp.le.f32.partialorder %v1494, 1e-06
    %vm1507 = vcmp.lt.f32.partialorder %v1386, -1e-06
    %vm1508 = vmand %vm1506, %vm1507
    %v1509 = vsel %vm1508, -1.0, %v1505
    %vm1510 = vcmp.lt.f32.partialorder %v1502, %v1509
    %v1511 = vmul.f32 %v1502, %v681
    %v1512 = vadd.f32 %v1320, %v1511
    %v1513 = vmul.f32 %v1502, %v686
    %v1514 = vadd.f32 %v1315, %v1513
    %v1515 = vmul.f32 %v1509, %v681
    %v1516 = vadd.f32 %v1320, %v1515
    %v1517 = vmul.f32 %v1509, %v686
    %v1518 = vadd.f32 %v1315, %v1517
    %v1519 = vmul.f32 %v1512, %v1518
    %v1520 = vmul.f32 %v1514, %v1516
    %v1521 = vsub.f32 %v1519, %v1520
    %v1522 = vsel %vm1510, %v1521, 0.0
    %v1523 = vadd.f32 %v1417, %v1522
    %v1524 = vsub.f32 %v1178, %v1429
    %v1525 = vand.u32 2147483647, %v1524
    %vm1526 = vcmp.lt.f32.partialorder %v1525, 1e-06
    %v1527 = vsel %vm1526, 1.0, %v1524
    %v1528 = vsub.f32 0.0, %v1429
    %v1529 = vrcp.pop %v1527
    %v1530 = vmul.f32 %v1528, %v1529
    %vm1531 = vcmp.gt.f32.partialorder %v1524, 1e-06
    %v1532 = vmax.f32 %v1530, 0.0
    %v1533 = vsel %vm1531, %v1532, 0.0
    %vm1534 = vcmp.lt.f32.partialorder %v1524, -1e-06
    %v1535 = vmin.f32 %v1530, 1.0
    %v1536 = vsel %vm1534, %v1535, 1.0
    %vm1537 = vcmp.le.f32.partialorder %v1525, 1e-06
    %vm1538 = vcmp.lt.f32.partialorder %v1429, -1e-06
    %vm1539 = vmand %vm1537, %vm1538
    %v1540 = vsel %vm1539, -1.0, %v1536
    %v1541 = vsub.f32 %v1216, %v1450
    %v1542 = vand.u32 2147483647, %v1541
    %vm1543 = vcmp.lt.f32.partialorder %v1542, 1e-06
    %v1544 = vsel %vm1543, 1.0, %v1541
    %v1545 = vsub.f32 0.0, %v1450
    %v1546 = vrcp.pop %v1544
    %v1547 = vmul.f32 %v1545, %v1546
    %vm1548 = vcmp.gt.f32.partialorder %v1541, 1e-06
    %v1549 = vmax.f32 %v1533, %v1547
    %v1550 = vsel %vm1548, %v1549, %v1533
    %vm1551 = vcmp.lt.f32.partialorder %v1541, -1e-06
    %v1552 = vmin.f32 %v1540, %v1547
    %v1553 = vsel %vm1551, %v1552, %v1540
    %vm1554 = vcmp.le.f32.partialorder %v1542, 1e-06
    %vm1555 = vcmp.lt.f32.partialorder %v1450, -1e-06
    %vm1556 = vmand %vm1554, %vm1555
    %v1557 = vsel %vm1556, -1.0, %v1553
    %v1558 = vsub.f32 %v1246, %v1471
    %v1559 = vand.u32 2147483647, %v1558
    %vm1560 = vcmp.lt.f32.partialorder %v1559, 1e-06
    %v1561 = vsel %vm1560, 1.0, %v1558
    %v1562 = vsub.f32 0.0, %v1471
    %v1563 = vrcp.pop %v1561
    %v1564 = vmul.f32 %v1562, %v1563
    %vm1565 = vcmp.gt.f32.partialorder %v1558, 1e-06
    %v1566 = vmax.f32 %v1550, %v1564
    %v1567 = vsel %vm1565, %v1566, %v1550
    %vm1568 = vcmp.lt.f32.partialorder %v1558, -1e-06
    %v1569 = vmin.f32 %v1557, %v1564
    %v1570 = vsel %vm1568, %v1569, %v1557
    %vm1571 = vcmp.le.f32.partialorder %v1559, 1e-06
    %vm1572 = vcmp.lt.f32.partialorder %v1471, -1e-06
    %vm1573 = vmand %vm1571, %vm1572
    %v1574 = vsel %vm1573, -1.0, %v1570
    %v1575 = vsub.f32 %v1276, %v1492
    %v1576 = vand.u32 2147483647, %v1575
    %vm1577 = vcmp.lt.f32.partialorder %v1576, 1e-06
    %v1578 = vsel %vm1577, 1.0, %v1575
    %v1579 = vsub.f32 0.0, %v1492
    %v1580 = vrcp.pop %v1578
    %v1581 = vmul.f32 %v1579, %v1580
    %vm1582 = vcmp.gt.f32.partialorder %v1575, 1e-06
    %v1583 = vmax.f32 %v1567, %v1581
    %v1584 = vsel %vm1582, %v1583, %v1567
    %vm1585 = vcmp.lt.f32.partialorder %v1575, -1e-06
    %v1586 = vmin.f32 %v1574, %v1581
    %v1587 = vsel %vm1585, %v1586, %v1574
    %vm1588 = vcmp.le.f32.partialorder %v1576, 1e-06
    %vm1589 = vcmp.lt.f32.partialorder %v1492, -1e-06
    %vm1590 = vmand %vm1588, %vm1589
    %v1591 = vsel %vm1590, -1.0, %v1587
    %vm1592 = vcmp.lt.f32.partialorder %v1584, %v1591
    %v1593 = vmul.f32 %v1584, %v718
    %v1594 = vadd.f32 %v1426, %v1593
    %v1595 = vmul.f32 %v1584, %v723
    %v1596 = vadd.f32 %v1421, %v1595
    %v1597 = vmul.f32 %v1591, %v718
    %v1598 = vadd.f32 %v1426, %v1597
    %v1599 = vmul.f32 %v1591, %v723
    %v1600 = vadd.f32 %v1421, %v1599
    %v1601 = vmul.f32 %v1594, %v1600
    %v1602 = vmul.f32 %v1596, %v1598
    %v1603 = vsub.f32 %v1601, %v1602
    %v1604 = vsel %vm1592, %v1603, 0.0
    %v1605 = vadd.f32 %v1523, %v1604
    %v1606 = vadd.f32 %v1109, %v1605
    %1607 = vrot.lane.b32.xlu0 %v36, 127
    %v1608 = vpop.permute.xlu0 %1607
    %v1610 = vmul.f32 %v36, %v1608
    %v1611 = vmul.f32 %v40, %v41
    %v1612 = vmul.f32 %v1606, 0.5
    %1614 = vset.pattern.permute.xlu0 3
    %1615 = vperm.xlu0 %1614, %v1610
    %v1616 = vpop.permute.xlu0 %1615
    %v1618 = vlaneseq
    %v1619 = vshrl.u32 %v1618, 7
    %v1620 = vsub.s32 0, %v1619
    %v1621 = vrot.slane %v1611, %v1620
    %v1622 = vmin.f32 %v1616, %v1621
    %v1623 = vmax.f32 %v1612, 0.0
    %v1624 = vmin.f32 %v1622, %v1623
    %1626 = vrot.lane.b32.xlu0 %v263, 125
    %v1627 = vpop.permute.xlu0 %1626
    %v1629 = vadd.f32 %v36, %v1627
    %v1630 = vsub.f32 %v36, %v1627
    %v1631 = vmul.f32 %v42, 0.5
    %v1632 = vadd.f32 %v39, %v1631
    %v1633 = vsub.f32 %v39, %v1631
    %1635 = vset.pattern.permute.xlu0 2
    %1636 = vperm.xlu0 %1635, %v1629
    %v1637 = vpop.permute.xlu0 %1636
    %v1639 = vlaneseq
    %v1640 = vshrl.u32 %v1639, 7
    %v1641 = vsub.s32 0, %v1640
    %v1642 = vrot.slane %v1632, %v1641
    %v1643 = vmin.f32 %v1637, %v1642
    %1645 = vset.pattern.permute.xlu0 2
    %1646 = vperm.xlu0 %1645, %v1630
    %v1647 = vpop.permute.xlu0 %1646
    %v1649 = vlaneseq
    %v1650 = vshrl.u32 %v1649, 7
    %v1651 = vsub.s32 0, %v1650
    %v1652 = vrot.slane %v1633, %v1651
    %v1653 = vmax.f32 %v1647, %v1652
    %v1654 = vsub.f32 %v1643, %v1653
    %v1655 = vmax.f32 %v1654, 0.0
    %v1656 = vmul.f32 %v1624, %v1655
    %1657 = vrot.lane.b32.xlu0 %v36, 126
    %v1658 = vpop.permute.xlu0 %1657
    %v1660 = vmul.f32 %v1610, %v1658
    %v1661 = vmul.f32 %v1611, %v42
    %1663 = vset.pattern.permute.xlu0 3
    %1664 = vperm.xlu0 %1663, %v1660
    %v1665 = vpop.permute.xlu0 %1664
    %v1667 = vlaneseq
    %v1668 = vshrl.u32 %v1667, 7
    %v1669 = vsub.s32 0, %v1668
    %v1670 = vrot.slane %v1661, %v1669
    %v1671 = vadd.f32 %v1665, %v1670
    %v1672 = vsub.f32 %v1671, %v1656
    %v1673 = vmax.f32 %v1672, 1e-06
    %v1674 = vrcp.pop %v1673
    %v1675 = vmul.f32 %v1656, %v1674
    %v1676 = vmin.f32 %v283, %v309
    %v1677 = vmin.f32 %v1676, %v322
    %v1678 = vmin.f32 %v1677, %v329
    %v1679 = vmax.f32 %v283, %v309
    %v1680 = vmax.f32 %v1679, %v322
    %v1681 = vmax.f32 %v1680, %v329
    %v1682 = vmin.f32 %v301, %v316
    %v1683 = vmin.f32 %v1682, %v328
    %v1684 = vmin.f32 %v1683, %v330
    %v1685 = vmax.f32 %v301, %v316
    %v1686 = vmax.f32 %v1685, %v328
    %v1687 = vmax.f32 %v1686, %v330
    %v1688 = vmin.f32 %v543, %v551
    %v1689 = vmin.f32 %v1688, %v557
    %v1690 = vmin.f32 %v1689, %v560
    %v1691 = vmax.f32 %v543, %v551
    %v1692 = vmax.f32 %v1691, %v557
    %v1693 = vmax.f32 %v1692, %v560
    %v1694 = vmin.f32 %v547, %v554
    %v1695 = vmin.f32 %v1694, %v559
    %v1696 = vmin.f32 %v1695, %v561
    %v1697 = vmax.f32 %v547, %v554
    %v1698 = vmax.f32 %v1697, %v559
    %v1699 = vmax.f32 %v1698, %v561
    %1701 = vset.pattern.permute.xlu0 0
    %1702 = vperm.xlu0 %1701, %v1681
    %v1703 = vpop.permute.xlu0 %1702
    %v1705 = vlaneseq
    %v1706 = vshrl.u32 %v1705, 7
    %v1707 = vsub.s32 0, %v1706
    %v1708 = vrot.slane %v1693, %v1707
    %v1709 = vmax.f32 %v1703, %v1708
    %1711 = vset.pattern.permute.xlu0 0
    %1712 = vperm.xlu0 %1711, %v1678
    %v1713 = vpop.permute.xlu0 %1712
    %v1715 = vlaneseq
    %v1716 = vshrl.u32 %v1715, 7
    %v1717 = vsub.s32 0, %v1716
    %v1718 = vrot.slane %v1690, %v1717
    %v1719 = vmin.f32 %v1713, %v1718
    %v1720 = vsub.f32 %v1709, %v1719
    %1722 = vset.pattern.permute.xlu0 1
    %1723 = vperm.xlu0 %1722, %v1687
    %v1724 = vpop.permute.xlu0 %1723
    %v1726 = vlaneseq
    %v1727 = vshrl.u32 %v1726, 7
    %v1728 = vsub.s32 0, %v1727
    %v1729 = vrot.slane %v1699, %v1728
    %v1730 = vmax.f32 %v1724, %v1729
    %1732 = vset.pattern.permute.xlu0 1
    %1733 = vperm.xlu0 %1732, %v1684
    %v1734 = vpop.permute.xlu0 %1733
    %v1736 = vlaneseq
    %v1737 = vshrl.u32 %v1736, 7
    %v1738 = vsub.s32 0, %v1737
    %v1739 = vrot.slane %v1696, %v1738
    %v1740 = vmin.f32 %v1734, %v1739
    %v1741 = vsub.f32 %v1730, %v1740
    %v1742 = vmax.f32 %v1637, %v1642
    %v1743 = vmin.f32 %v1647, %v1652
    %v1744 = vsub.f32 %v1742, %v1743
    %v1745 = vmul.f32 %v1720, %v1741
    %v1746 = vmul.f32 %v1745, %v1744
    %v1747 = vmax.f32 %v1746, 1e-06
    %v1748 = vsub.f32 1.0, %v1675
    %v1749 = vsub.f32 %v1747, %v1672
    %v1750 = vrcp.pop %v1747
    %v1751 = vmul.f32 %v1749, %v1750
    %v1752 = vadd.f32 %v1748, %v1751
    %1753 = vst [vmem:[#allocation7] sm:$0xff] %v55
    %s1754 = scalar_lea.vmem [#allocation7], 8
    %1755 = vst [vmem:[%s1754] sm:$0xff] %v1752
    // Predicated region
    $region18: #{_pairwise_costs_device.1} parent=1 // pred_check
      _
    $region19: #{_pairwise_costs_device.1} parent=1 // pred_check_branch
      %1757 = sbr.rel (0) target = $region21
    $region20: #{_pairwise_costs_device.1} parent=1 // pred_region
      %s1759 = ssub.s32 256, 256
      %1760 = vsyncadd [#allocation4], %s1759
      %s1761 = sshll.u32 [#allocation7], 4
      %s1762 = int_to_ptr.vmem [resolvable:$true] %s1761
      %1767 = dma.vmem_to_hbm [thread:$0]  %s1762, 256, %s2, [#allocation4], 128, 128, 8
    $region21: #{_pairwise_costs_device.1} parent=1 // pred_fallthru
      _
    // Predicated region
    $region22: #{_pairwise_costs_device.1} parent=1 // pred_check
      _
    $region23: #{_pairwise_costs_device.1} parent=1 // pred_check_branch
      %1769 = sbr.rel (0) target = $region25
    $region24: #{_pairwise_costs_device.1} parent=1 // pred_region
      %1770 = dma.done [#allocation4], 256
    $region25: #{_pairwise_costs_device.1} parent=1 // pred_fallthru
      _
    %1771 = vsyncpa [#allocation3], 1
    %1772 = vsyncpa [#allocation6], 1
    %1773 = vsyncpa [#allocation4], 1

</llo_original>
